<compile_context>
chip_gen: v6e
topology: v6e:2x2x1
jax: 0.10.0
libtpu: 0.0.40
codegen_flags: <defaults>
</compile_context>

<pallas_src>
import functools
import math

import jax
import jax.numpy as jnp
from jax import lax
from jax.experimental import pallas as pl
from jax.experimental.pallas import tpu as pltpu

IN_P = 16   # input-channel rows per tap in the im2col scratch (bf16 sublane granule)
OUT_P = 8   # output-channel padding of every conv (sublane multiple)


def _round_up(x, m):
    return ((x + m - 1) // m) * m


# ----------------------------- Pallas kernel --------------------------------
# One fused kernel per conv stage.  Grid = (n_groups,), each step handles one
# group of images packed along lanes:
#   kh*kw granule-aligned tap copies into a VMEM im2col scratch
#   -> one bf16 MXU matmul (K = kh*kw*IN_P) with f32 accumulation
#   -> bias + ReLU (f32)
#   -> optional fused 1x1 conv4 OR fused stride-1 sxs max pool
#   -> single lane-dense bf16 store (last dim a multiple of 128).

def _make_stage_kernel(tap_offs, in_p, m_pad, pool_offs, m_out_pad, has_w4):
    def _compute(x_ref, w_ref, b_ref, w4_ref, b4_ref, o_ref, col_ref):
        # Build the im2col slab in VMEM: one full-width copy per (ky,kx) tap.
        # Each store is (IN_P=16, m_pad) bf16 at a 16-row-aligned offset.
        for p, off in enumerate(tap_offs):
            col_ref[p * in_p:(p + 1) * in_p, :] = x_ref[0, :, off:off + m_pad]
        # Single MXU matmul, K = kh*kw*IN_P, f32 accumulation (replaces the old
        # kh*kw tiny K=8 matmuls and their f32 VPU accumulate adds).
        acc = jnp.dot(w_ref[...], col_ref[...], preferred_element_type=jnp.float32)
        acc = jnp.maximum(acc + b_ref[...], 0.0)          # bias + ReLU (f32, v5e-safe)
        if has_w4:                                        # fused 1x1 conv4 (no ReLU after)
            acc = jnp.dot(w4_ref[...], acc.astype(jnp.bfloat16),
                          preferred_element_type=jnp.float32) + b4_ref[...]
        if pool_offs is not None:                         # fused stride-1 sxs max pool
            res = acc[:, pool_offs[0]:pool_offs[0] + m_out_pad]
            for off in pool_offs[1:]:
                res = jnp.maximum(res, acc[:, off:off + m_out_pad])
        else:
            res = acc[:, :m_out_pad]
        o_ref[0] = res.astype(o_ref.dtype)                # lane-dense bf16 store

    if has_w4:
        def kernel(x_ref, w_ref, b_ref, w4_ref, b4_ref, o_ref, col_ref):
            _compute(x_ref, w_ref, b_ref, w4_ref, b4_ref, o_ref, col_ref)
    else:
        def kernel(x_ref, w_ref, b_ref, o_ref, col_ref):
            _compute(x_ref, w_ref, b_ref, None, None, o_ref, col_ref)
    return kernel


def conv_stage(x_sp, w2, bp, *, kh, kw, conv_pad, pool_s=None, w4=None, b4=None):
    """Fused conv(+ReLU)(+1x1 conv4)(+stride-1 sxs max) for one layer.

    x_sp: (B, C<=IN_P, H, W) activations (any float dtype).
    Returns bf16 spatial output:
      pool_s=None -> (B, OUT_P, Ho, Wo)
      pool_s=s    -> (B, OUT_P, Ho-s+1, Wo-s+1)   (the stride-1 pooled map)
    """
    b_sz, c, h, w = x_sp.shape
    assert c <= IN_P
    hp, wp = h + 2 * conv_pad, w + 2 * conv_pad
    ho, wo = hp - kh + 1, wp - kw + 1
    lin = (hp + 1) * wp                      # +1 zero bottom row: all taps stay in-image
    max_conv_off = (kh - 1) * wp + (kw - 1)

    if pool_s is None:
        out_h, out_w = ho, wo
        m_out = ho * wp
        pool_offs = None
        max_pool_off = 0
    else:
        s = pool_s
        out_h, out_w = ho - s + 1, wo - s + 1
        m_out = out_h * wp
        pool_offs = tuple(dy * wp + dx for dy in range(s) for dx in range(s))
        max_pool_off = (s - 1) * (wp + 1)

    n_grid = 2 if b_sz % 2 == 0 else 1       # 2 parallel steps -> both v7x TCs busy
    g = b_sz // n_grid                       # images per grid step, packed on lanes

    m_out_pad = _round_up((g - 1) * lin + m_out, 128)    # lane-dense output columns
    m_pad = _round_up(m_out_pad + max_pool_off, 128)     # conv-accumulator columns
    x_cols = _round_up(max(g * lin, m_pad + max_conv_off), 128)

    # Build the per-group slab (XLA glue, tiny tensors): channels (zero-padded to
    # IN_P) on sublanes, images side-by-side on lanes with stride `lin`.
    xp = jnp.pad(x_sp, ((0, 0), (0, IN_P - c),
                        (conv_pad, conv_pad + 1), (conv_pad, conv_pad)))
    x_flat = xp.reshape(b_sz, IN_P, lin)
    x_flat = x_flat.reshape(n_grid, g, IN_P, lin).transpose(0, 2, 1, 3)
    x_flat = x_flat.reshape(n_grid, IN_P, g * lin)
    x_flat = jnp.pad(x_flat, ((0, 0), (0, 0), (0, x_cols - g * lin)))
    x_flat = x_flat.astype(jnp.bfloat16)

    cout_p, k_dim = w2.shape
    assert cout_p == OUT_P and k_dim == kh * kw * IN_P
    has_w4 = w4 is not None
    tap_offs = tuple(ky * wp + kx for ky in range(kh) for kx in range(kw))
    kernel = _make_stage_kernel(tap_offs, IN_P, m_pad, pool_offs, m_out_pad, has_w4)

    # VMEM footprint (double-buffered in/out blocks + im2col scratch + f32 acc)
    # must fit with ample headroom on every generation (v7x has 64 MiB total).
    vmem_bytes = (2 * IN_P * x_cols * 2 + 2 * cout_p * m_out_pad * 2
                  + k_dim * m_pad * 2 + 2 * cout_p * m_pad * 4)
    assert vmem_bytes < 8 * 1024 * 1024, vmem_bytes

    in_specs = [
        pl.BlockSpec((1, IN_P, x_cols), lambda n: (n, 0, 0)),   # one image group / step
        pl.BlockSpec((cout_p, k_dim), lambda n: (0, 0)),        # weights stay resident
        pl.BlockSpec((cout_p, 1), lambda n: (0, 0)),
    ]
    operands = [x_flat, w2, bp]
    if has_w4:
        in_specs += [pl.BlockSpec(w4.shape, lambda n: (0, 0)),
                     pl.BlockSpec(b4.shape, lambda n: (0, 0))]
        operands += [w4, b4]

    out = pl.pallas_call(
        kernel,
        out_shape=jax.ShapeDtypeStruct((n_grid, cout_p, m_out_pad), jnp.bfloat16),
        grid=(n_grid,),
        in_specs=in_specs,
        out_specs=pl.BlockSpec((1, cout_p, m_out_pad), lambda n: (n, 0, 0)),
        scratch_shapes=[pltpu.VMEM((k_dim, m_pad), jnp.bfloat16)],   # im2col slab
        compiler_params=pltpu.CompilerParams(
            dimension_semantics=("parallel",),      # groups are independent
            vmem_limit_bytes=32 * 1024 * 1024),
    )(*operands)

    # Unpack the flat group slab back to spatial (B, OUT_P, out_h, out_w); the
    # padded / wrap-around "garbage" columns are finite and cropped here.
    if m_out_pad >= g * lin:
        slab = out[:, :, :g * lin]
    else:
        slab = jnp.pad(out, ((0, 0), (0, 0), (0, g * lin - m_out_pad)))
    slab = slab.reshape(n_grid, cout_p, g, hp + 1, wp).transpose(0, 2, 1, 3, 4)
    slab = slab.reshape(b_sz, cout_p, hp + 1, wp)
    return slab[:, :, :out_h, :out_w]


# ------------------------- JAX-side bookkeeping (glue) ----------------------

def multi_pool_prepare(x_nchw, ph, pw):
    pady, padx = ph - 1, pw - 1
    pt, pb = int(math.ceil(pady / 2)), int(math.floor(pady / 2))
    pleft, pright = int(math.ceil(padx / 2)), int(math.floor(padx / 2))
    return jnp.pad(x_nchw, ((0, 0), (0, 0), (pt, pb), (pleft, pright)))


def prep_conv_weight(w_oihw, bias, cin_p=IN_P, cout_p=OUT_P):
    """Zero-pad channels and reshape to (Cout_p, kh*kw*Cin_p) bf16 (tap-major, cin inner)."""
    cout, cin, kh, kw = w_oihw.shape
    wpad = jnp.zeros((cout_p, cin_p, kh, kw), jnp.float32)
    wpad = wpad.at[:cout, :cin].set(w_oihw.astype(jnp.float32))
    w2 = jnp.transpose(wpad, (0, 2, 3, 1)).reshape(cout_p, kh * kw * cin_p)
    bp = jnp.zeros((cout_p, 1), jnp.float32).at[:cout, 0].set(bias)
    return w2.astype(jnp.bfloat16), bp


def multi_max_shifts(p1, s):
    """Finish multiMaxPooling from the fused stride-1 sxs max map.

    p1: (B, C, H-s+1, W-s+1) where (H, W) are the pre-pool spatial dims.
    Returns the s*s shifted stride-s poolings concatenated on the batch dim
    (shift order: i outer, j inner) -- identical to the torch module's output.
    """
    b, c, h1, w1 = p1.shape
    h, w = h1 + s - 1, w1 + s - 1
    mh = min((h - i - s) // s + 1 for i in range(s))
    mw = min((w - j - s) // s + 1 for j in range(s))
    outs = []
    for i in range(s):
        for j in range(s):
            outs.append(p1[:, :, i:i + s * mh:s, j:j + s * mw:s])
    return jnp.concatenate(outs, axis=0)


def unwrap_prepare(x_nchw):
    x = x_nchw[:, :, :-1, :-1]
    y = x.reshape(x.shape[0], -1)
    return jnp.transpose(y, (1, 0))


def unwrap_pool(x, out_chans, cur_w, cur_h, dw, dh):
    y = x.reshape(out_chans, cur_w, cur_h, dw, dh, -1)
    return jnp.swapaxes(y, 2, 3)


# -------------------------------- SlimNet -----------------------------------

def slimnet_forward(x_nchw, params, *, ph, pw, sl1, sl2, im_h, im_w):
    assert im_h % (sl1 * sl2) == 0 and im_w % (sl1 * sl2) == 0
    out_ch = params['w4'].shape[0]

    w1, b1 = prep_conv_weight(params['w1'], params['b1'])
    w2, b2 = prep_conv_weight(params['w2'], params['b2'])
    w3, b3 = prep_conv_weight(params['w3'], params['b3'])
    w4, b4 = prep_conv_weight(params['w4'], params['b4'], cin_p=OUT_P)  # 1x1 on conv3 acc

    x = multi_pool_prepare(x_nchw, ph, pw)                          # multiPoolPrepare
    x = conv_stage(x, w1, b1, kh=3, kw=3, conv_pad=1, pool_s=sl1)   # conv1+ReLU+pool(stride1)
    x = multi_max_shifts(x, sl1)                                    # multiMaxPooling1
    x = conv_stage(x, w2, b2, kh=3, kw=3, conv_pad=1, pool_s=sl2)   # conv2+ReLU+pool(stride1)
    x = multi_max_shifts(x, sl2)                                    # multiMaxPooling2
    x = conv_stage(x, w3, b3, kh=3, kw=3, conv_pad=1,
                   pool_s=None, w4=w4, b4=b4)                       # conv3+ReLU+conv4 fused

    x = x[:, :out_ch].astype(jnp.float32)                           # drop channel padding
    x = unwrap_prepare(x)                                           # unwrapPrepare
    x = unwrap_pool(x, out_ch, im_h // (sl1 * sl2), im_w // (sl1 * sl2), sl2, sl2)
    x = unwrap_pool(x, out_ch, im_h // sl1, im_w // sl1, sl1, sl1)
    return x.reshape(-1, im_h, im_w)                                # view(-1, imH, imW)


# ------------------------- pure-JAX reference (for checking) ----------------

def _ref_conv(x, w, bias, pad, relu):
    xf = x.astype(jnp.float32)
    wf = w.astype(jnp.bfloat16).astype(jnp.float32)
    y = lax.conv_general_dilated(xf, wf, window_strides=(1, 1),
                                 padding=[(pad, pad), (pad, pad)],
                                 dimension_numbers=('NCHW', 'OIHW', 'NCHW'))
    y = y + bias.reshape(1, -1, 1, 1)
    if relu:
        y = jnp.maximum(y, 0.0)
    return y


def _ref_multi_max_pool(x, s):
    b, c, h, w = x.shape
    mh = min((h - i - s) // s + 1 for i in range(s))
    mw = min((w - j - s) // s + 1 for j in range(s))
    outs = []
    for i in range(s):
        for j in range(s):
            xc = x[:, :, i:, j:]
            m = None
            for ky in range(s):
                for kx in range(s):
                    t = xc[:, :, ky:ky + mh * s:s, kx:kx + mw * s:s]
                    m = t if m is None else jnp.maximum(m, t)
            outs.append(m)
    return jnp.concatenate(outs, axis=0)


def ref_forward(x_nchw, params, *, ph, pw, sl1, sl2, im_h, im_w):
    out_ch = params['w4'].shape[0]
    x = multi_pool_prepare(x_nchw, ph, pw).astype(jnp.bfloat16)
    x = _ref_conv(x, params['w1'], params['b1'], 1, True)
    x = _ref_multi_max_pool(x, sl1).astype(jnp.bfloat16)
    x = _ref_conv(x, params['w2'], params['b2'], 1, True)
    x = _ref_multi_max_pool(x, sl2).astype(jnp.bfloat16)
    x = _ref_conv(x, params['w3'], params['b3'], 1, True)
    x = _ref_conv(x.astype(jnp.bfloat16), params['w4'], params['b4'], 0, False)
    x = x.astype(jnp.bfloat16).astype(jnp.float32)
    x = unwrap_prepare(x)
    x = unwrap_pool(x, out_ch, im_h // (sl1 * sl2), im_w // (sl1 * sl2), sl2, sl2)
    x = unwrap_pool(x, out_ch, im_h // sl1, im_w // sl1, sl1, sl1)
    return x.reshape(-1, im_h, im_w)


def init_conv(key, cout, cin, kh, kw):
    bound = 1.0 / math.sqrt(cin * kh * kw)      # PyTorch default Conv2d init range
    k_w, k_b = jax.random.split(key)
    w = jax.random.uniform(k_w, (cout, cin, kh, kw), jnp.float32, -bound, bound)
    b = jax.random.uniform(k_b, (cout,), jnp.float32, -bound, bound)
    return w, b


if __name__ == "__main__":
    im_h = im_w = 16
    ph = pw = 8
    sl1 = sl2 = 2
    n, cin = 2, 2

    key = jax.random.PRNGKey(0)
    kx, k1, k2, k3, k4 = jax.random.split(key, 5)
    x = jax.random.normal(kx, (n, cin, im_h, im_w), jnp.float32)

    params = {}
    params['w1'], params['b1'] = init_conv(k1, 4, cin, 3, 3)   # conv1 + ReLU
    params['w2'], params['b2'] = init_conv(k2, 8, 4, 3, 3)     # conv2 + ReLU
    params['w3'], params['b3'] = init_conv(k3, 8, 8, 3, 3)     # conv3 + ReLU
    params['w4'], params['b4'] = init_conv(k4, 4, 8, 1, 1)     # conv4 (outChans=4)

    fwd = jax.jit(functools.partial(slimnet_forward, ph=ph, pw=pw,
                                    sl1=sl1, sl2=sl2, im_h=im_h, im_w=im_w))
    y = jax.block_until_ready(fwd(x, params))

    ref = jax.jit(functools.partial(ref_forward, ph=ph, pw=pw,
                                    sl1=sl1, sl2=sl2, im_h=im_h, im_w=im_w))
    y_ref = jax.block_until_ready(ref(x, params))

    assert y.shape == (n * 4, im_h, im_w), y.shape
    assert bool(jnp.all(jnp.isfinite(y)))
    # bf16 operands / f32 accumulation in both pipelines; tolerance covers bf16 ulps.
    assert bool(jnp.allclose(y, y_ref, atol=5e-2, rtol=5e-2)), \
        float(jnp.max(jnp.abs(y - y_ref)))
    print("KERNEL_OK")
</pallas_src>

<mosaic_0001>
module attributes {stable_mosaic.version = 11 : i64} {
  func.func @kernel(%arg0: i32, %arg1: memref<1x16x896xbf16, #tpu.memory_space<vmem>>, %arg2: memref<8x144xbf16, #tpu.memory_space<vmem>>, %arg3: memref<8x1xf32, #tpu.memory_space<vmem>>, %arg4: memref<1x8x640xbf16, #tpu.memory_space<vmem>>, %arg5: memref<144x768xbf16, #tpu.memory_space<vmem>>) attributes {dimension_semantics = [#tpu.dimension_semantics<parallel>], iteration_bounds = array<i64: 2>, scalar_prefetch = 0 : i64, scratch_operands = 1 : i64, tpu.core_type = #tpu.core_type<tc>, window_params = [{transform_indices = @transform_0, window_bounds = array<i64: 1, 16, 896>}, {pipeline_mode = #tpu.pipeline_mode<synchronous>, transform_indices = @transform_1, window_bounds = array<i64: 8, 144>}, {pipeline_mode = #tpu.pipeline_mode<synchronous>, transform_indices = @transform_2, window_bounds = array<i64: 8, 1>}, {transform_indices = @transform_3, window_bounds = array<i64: 1, 8, 640>}]} {
    %c0 = arith.constant 0 : index
    %c0_0 = arith.constant 0 : index
    %c0_1 = arith.constant 0 : index
    %0 = vector.load %arg1[%c0, %c0_0, %c0_1] : memref<1x16x896xbf16, #tpu.memory_space<vmem>>, vector<1x16x768xbf16>
    %1 = vector.shape_cast %0 : vector<1x16x768xbf16> to vector<16x768xbf16>
    %c0_2 = arith.constant 0 : index
    %c0_3 = arith.constant 0 : index
    %2 = vector.load %arg5[%c0_2, %c0_3] : memref<144x768xbf16, #tpu.memory_space<vmem>>, vector<16x768xbf16>
    tpu.vector_store %arg5[%c0_2, %c0_3], %1 {strides = array<i32>} : memref<144x768xbf16, #tpu.memory_space<vmem>>, vector<16x768xbf16>,
    %c0_4 = arith.constant 0 : index
    %c0_5 = arith.constant 0 : index
    %c1 = arith.constant 1 : index
    %3 = vector.load %arg1[%c0_4, %c0_5, %c1] : memref<1x16x896xbf16, #tpu.memory_space<vmem>>, vector<1x16x768xbf16>
    %4 = vector.shape_cast %3 : vector<1x16x768xbf16> to vector<16x768xbf16>
    %c16 = arith.constant 16 : index
    %c0_6 = arith.constant 0 : index
    %5 = vector.load %arg5[%c16, %c0_6] : memref<144x768xbf16, #tpu.memory_space<vmem>>, vector<16x768xbf16>
    tpu.vector_store %arg5[%c16, %c0_6], %4 {strides = array<i32>} : memref<144x768xbf16, #tpu.memory_space<vmem>>, vector<16x768xbf16>,
    %c0_7 = arith.constant 0 : index
    %c0_8 = arith.constant 0 : index
    %c2 = arith.constant 2 : index
    %6 = vector.load %arg1[%c0_7, %c0_8, %c2] : memref<1x16x896xbf16, #tpu.memory_space<vmem>>, vector<1x16x768xbf16>
    %7 = vector.shape_cast %6 : vector<1x16x768xbf16> to vector<16x768xbf16>
    %c32 = arith.constant 32 : index
    %c0_9 = arith.constant 0 : index
    %8 = vector.load %arg5[%c32, %c0_9] : memref<144x768xbf16, #tpu.memory_space<vmem>>, vector<16x768xbf16>
    tpu.vector_store %arg5[%c32, %c0_9], %7 {strides = array<i32>} : memref<144x768xbf16, #tpu.memory_space<vmem>>, vector<16x768xbf16>,
    %c0_10 = arith.constant 0 : index
    %c0_11 = arith.constant 0 : index
    %c25 = arith.constant 25 : index
    %9 = vector.load %arg1[%c0_10, %c0_11, %c25] : memref<1x16x896xbf16, #tpu.memory_space<vmem>>, vector<1x16x768xbf16>
    %10 = vector.shape_cast %9 : vector<1x16x768xbf16> to vector<16x768xbf16>
    %c48 = arith.constant 48 : index
    %c0_12 = arith.constant 0 : index
    %11 = vector.load %arg5[%c48, %c0_12] : memref<144x768xbf16, #tpu.memory_space<vmem>>, vector<16x768xbf16>
    tpu.vector_store %arg5[%c48, %c0_12], %10 {strides = array<i32>} : memref<144x768xbf16, #tpu.memory_space<vmem>>, vector<16x768xbf16>,
    %c0_13 = arith.constant 0 : index
    %c0_14 = arith.constant 0 : index
    %c26 = arith.constant 26 : index
    %12 = vector.load %arg1[%c0_13, %c0_14, %c26] : memref<1x16x896xbf16, #tpu.memory_space<vmem>>, vector<1x16x768xbf16>
    %13 = vector.shape_cast %12 : vector<1x16x768xbf16> to vector<16x768xbf16>
    %c64 = arith.constant 64 : index
    %c0_15 = arith.constant 0 : index
    %14 = vector.load %arg5[%c64, %c0_15] : memref<144x768xbf16, #tpu.memory_space<vmem>>, vector<16x768xbf16>
    tpu.vector_store %arg5[%c64, %c0_15], %13 {strides = array<i32>} : memref<144x768xbf16, #tpu.memory_space<vmem>>, vector<16x768xbf16>,
    %c0_16 = arith.constant 0 : index
    %c0_17 = arith.constant 0 : index
    %c27 = arith.constant 27 : index
    %15 = vector.load %arg1[%c0_16, %c0_17, %c27] : memref<1x16x896xbf16, #tpu.memory_space<vmem>>, vector<1x16x768xbf16>
    %16 = vector.shape_cast %15 : vector<1x16x768xbf16> to vector<16x768xbf16>
    %c80 = arith.constant 80 : index
    %c0_18 = arith.constant 0 : index
    %17 = vector.load %arg5[%c80, %c0_18] : memref<144x768xbf16, #tpu.memory_space<vmem>>, vector<16x768xbf16>
    tpu.vector_store %arg5[%c80, %c0_18], %16 {strides = array<i32>} : memref<144x768xbf16, #tpu.memory_space<vmem>>, vector<16x768xbf16>,
    %c0_19 = arith.constant 0 : index
    %c0_20 = arith.constant 0 : index
    %c50 = arith.constant 50 : index
    %18 = vector.load %arg1[%c0_19, %c0_20, %c50] : memref<1x16x896xbf16, #tpu.memory_space<vmem>>, vector<1x16x768xbf16>
    %19 = vector.shape_cast %18 : vector<1x16x768xbf16> to vector<16x768xbf16>
    %c96 = arith.constant 96 : index
    %c0_21 = arith.constant 0 : index
    %20 = vector.load %arg5[%c96, %c0_21] : memref<144x768xbf16, #tpu.memory_space<vmem>>, vector<16x768xbf16>
    tpu.vector_store %arg5[%c96, %c0_21], %19 {strides = array<i32>} : memref<144x768xbf16, #tpu.memory_space<vmem>>, vector<16x768xbf16>,
    %c0_22 = arith.constant 0 : index
    %c0_23 = arith.constant 0 : index
    %c51 = arith.constant 51 : index
    %21 = vector.load %arg1[%c0_22, %c0_23, %c51] : memref<1x16x896xbf16, #tpu.memory_space<vmem>>, vector<1x16x768xbf16>
    %22 = vector.shape_cast %21 : vector<1x16x768xbf16> to vector<16x768xbf16>
    %c112 = arith.constant 112 : index
    %c0_24 = arith.constant 0 : index
    %23 = vector.load %arg5[%c112, %c0_24] : memref<144x768xbf16, #tpu.memory_space<vmem>>, vector<16x768xbf16>
    tpu.vector_store %arg5[%c112, %c0_24], %22 {strides = array<i32>} : memref<144x768xbf16, #tpu.memory_space<vmem>>, vector<16x768xbf16>,
    %c0_25 = arith.constant 0 : index
    %c0_26 = arith.constant 0 : index
    %c52 = arith.constant 52 : index
    %24 = vector.load %arg1[%c0_25, %c0_26, %c52] : memref<1x16x896xbf16, #tpu.memory_space<vmem>>, vector<1x16x768xbf16>
    %25 = vector.shape_cast %24 : vector<1x16x768xbf16> to vector<16x768xbf16>
    %c128 = arith.constant 128 : index
    %c0_27 = arith.constant 0 : index
    %26 = vector.load %arg5[%c128, %c0_27] : memref<144x768xbf16, #tpu.memory_space<vmem>>, vector<16x768xbf16>
    tpu.vector_store %arg5[%c128, %c0_27], %25 {strides = array<i32>} : memref<144x768xbf16, #tpu.memory_space<vmem>>, vector<16x768xbf16>,
    %c0_28 = arith.constant 0 : index
    %c0_29 = arith.constant 0 : index
    %27 = vector.load %arg2[%c0_28, %c0_29] : memref<8x144xbf16, #tpu.memory_space<vmem>>, vector<8x144xbf16>
    %c0_30 = arith.constant 0 : index
    %c0_31 = arith.constant 0 : index
    %28 = vector.load %arg5[%c0_30, %c0_31] : memref<144x768xbf16, #tpu.memory_space<vmem>>, vector<144x768xbf16>
    %cst = arith.constant dense<0.000000e+00> : vector<8x768xf32>
    %29 = tpu.matmul %27, %28, %cst {dimension_numbers = #tpu.dot_dimension_numbers<[1], [0], [0], [1], [0, 0, 1, 1], [], []>} : vector<8x144xbf16>, vector<144x768xbf16>, vector<8x768xf32> -> vector<8x768xf32>
    %c0_32 = arith.constant 0 : index
    %c0_33 = arith.constant 0 : index
    %30 = vector.load %arg3[%c0_32, %c0_33] : memref<8x1xf32, #tpu.memory_space<vmem>>, vector<8x1xf32>
    %31 = vector.broadcast %30 : vector<8x1xf32> to vector<8x768xf32>
    %32 = arith.addf %29, %31 : vector<8x768xf32>
    %cst_34 = arith.constant 0.000000e+00 : f32
    %33 = vector.broadcast %cst_34 : f32 to vector<8x768xf32>
    %34 = arith.maximumf %32, %33 : vector<8x768xf32>
    %35 = vector.extract_strided_slice %34 {offsets = [0, 0], sizes = [8, 640], strides = [1, 1]} : vector<8x768xf32> to vector<8x640xf32>
    %36 = vector.extract_strided_slice %34 {offsets = [0, 1], sizes = [8, 640], strides = [1, 1]} : vector<8x768xf32> to vector<8x640xf32>
    %37 = arith.maximumf %35, %36 : vector<8x640xf32>
    %38 = vector.extract_strided_slice %34 {offsets = [0, 25], sizes = [8, 640], strides = [1, 1]} : vector<8x768xf32> to vector<8x640xf32>
    %39 = arith.maximumf %37, %38 : vector<8x640xf32>
    %40 = vector.extract_strided_slice %34 {offsets = [0, 26], sizes = [8, 640], strides = [1, 1]} : vector<8x768xf32> to vector<8x640xf32>
    %41 = arith.maximumf %39, %40 : vector<8x640xf32>
    %42 = arith.truncf %41 : vector<8x640xf32> to vector<8x640xbf16>
    %c0_35 = arith.constant 0 : index
    %c0_36 = arith.constant 0 : index
    %c0_37 = arith.constant 0 : index
    %43 = vector.load %arg4[%c0_35, %c0_36, %c0_37] : memref<1x8x640xbf16, #tpu.memory_space<vmem>>, vector<1x8x640xbf16>
    %44 = vector.shape_cast %43 : vector<1x8x640xbf16> to vector<8x640xbf16>
    %45 = vector.shape_cast %42 : vector<8x640xbf16> to vector<1x8x640xbf16>
    tpu.vector_store %arg4[%c0_35, %c0_36, %c0_37], %45 {strides = array<i32>} : memref<1x8x640xbf16, #tpu.memory_space<vmem>>, vector<1x8x640xbf16>,
    return
  }
  func.func @transform_0(%arg0: i32) -> (i32, i32, i32) {
    %c0_i32 = arith.constant 0 : i32
    %c0_i32_0 = arith.constant 0 : i32
    %c0_i32_1 = arith.constant 0 : i32
    return %arg0, %c0_i32, %c0_i32_0 : i32, i32, i32
  }
  func.func @transform_1(%arg0: i32) -> (i32, i32) {
    %c0_i32 = arith.constant 0 : i32
    %c0_i32_0 = arith.constant 0 : i32
    %c0_i32_1 = arith.constant 0 : i32
    return %c0_i32, %c0_i32_0 : i32, i32
  }
  func.func @transform_2(%arg0: i32) -> (i32, i32) {
    %c0_i32 = arith.constant 0 : i32
    %c0_i32_0 = arith.constant 0 : i32
    %c0_i32_1 = arith.constant 0 : i32
    return %c0_i32, %c0_i32_0 : i32, i32
  }
  func.func @transform_3(%arg0: i32) -> (i32, i32, i32) {
    %c0_i32 = arith.constant 0 : i32
    %c0_i32_0 = arith.constant 0 : i32
    %c0_i32_1 = arith.constant 0 : i32
    return %arg0, %c0_i32, %c0_i32_0 : i32, i32, i32
  }
}

module attributes {stable_mosaic.version = 11 : i64} {
  func.func @kernel(%arg0: i32, %arg1: memref<1x16x1024xbf16, #tpu.memory_space<vmem>>, %arg2: memref<8x144xbf16, #tpu.memory_space<vmem>>, %arg3: memref<8x1xf32, #tpu.memory_space<vmem>>, %arg4: memref<1x8x768xbf16, #tpu.memory_space<vmem>>, %arg5: memref<144x896xbf16, #tpu.memory_space<vmem>>) attributes {dimension_semantics = [#tpu.dimension_semantics<parallel>], iteration_bounds = array<i64: 2>, scalar_prefetch = 0 : i64, scratch_operands = 1 : i64, tpu.core_type = #tpu.core_type<tc>, window_params = [{transform_indices = @transform_0, window_bounds = array<i64: 1, 16, 1024>}, {pipeline_mode = #tpu.pipeline_mode<synchronous>, transform_indices = @transform_1, window_bounds = array<i64: 8, 144>}, {pipeline_mode = #tpu.pipeline_mode<synchronous>, transform_indices = @transform_2, window_bounds = array<i64: 8, 1>}, {transform_indices = @transform_3, window_bounds = array<i64: 1, 8, 768>}]} {
    %c0 = arith.constant 0 : index
    %c0_0 = arith.constant 0 : index
    %c0_1 = arith.constant 0 : index
    %0 = vector.load %arg1[%c0, %c0_0, %c0_1] : memref<1x16x1024xbf16, #tpu.memory_space<vmem>>, vector<1x16x896xbf16>
    %1 = vector.shape_cast %0 : vector<1x16x896xbf16> to vector<16x896xbf16>
    %c0_2 = arith.constant 0 : index
    %c0_3 = arith.constant 0 : index
    %2 = vector.load %arg5[%c0_2, %c0_3] : memref<144x896xbf16, #tpu.memory_space<vmem>>, vector<16x896xbf16>
    tpu.vector_store %arg5[%c0_2, %c0_3], %1 {strides = array<i32>} : memref<144x896xbf16, #tpu.memory_space<vmem>>, vector<16x896xbf16>,
    %c0_4 = arith.constant 0 : index
    %c0_5 = arith.constant 0 : index
    %c1 = arith.constant 1 : index
    %3 = vector.load %arg1[%c0_4, %c0_5, %c1] : memref<1x16x1024xbf16, #tpu.memory_space<vmem>>, vector<1x16x896xbf16>
    %4 = vector.shape_cast %3 : vector<1x16x896xbf16> to vector<16x896xbf16>
    %c16 = arith.constant 16 : index
    %c0_6 = arith.constant 0 : index
    %5 = vector.load %arg5[%c16, %c0_6] : memref<144x896xbf16, #tpu.memory_space<vmem>>, vector<16x896xbf16>
    tpu.vector_store %arg5[%c16, %c0_6], %4 {strides = array<i32>} : memref<144x896xbf16, #tpu.memory_space<vmem>>, vector<16x896xbf16>,
    %c0_7 = arith.constant 0 : index
    %c0_8 = arith.constant 0 : index
    %c2 = arith.constant 2 : index
    %6 = vector.load %arg1[%c0_7, %c0_8, %c2] : memref<1x16x1024xbf16, #tpu.memory_space<vmem>>, vector<1x16x896xbf16>
    %7 = vector.shape_cast %6 : vector<1x16x896xbf16> to vector<16x896xbf16>
    %c32 = arith.constant 32 : index
    %c0_9 = arith.constant 0 : index
    %8 = vector.load %arg5[%c32, %c0_9] : memref<144x896xbf16, #tpu.memory_space<vmem>>, vector<16x896xbf16>
    tpu.vector_store %arg5[%c32, %c0_9], %7 {strides = array<i32>} : memref<144x896xbf16, #tpu.memory_space<vmem>>, vector<16x896xbf16>,
    %c0_10 = arith.constant 0 : index
    %c0_11 = arith.constant 0 : index
    %c13 = arith.constant 13 : index
    %9 = vector.load %arg1[%c0_10, %c0_11, %c13] : memref<1x16x1024xbf16, #tpu.memory_space<vmem>>, vector<1x16x896xbf16>
    %10 = vector.shape_cast %9 : vector<1x16x896xbf16> to vector<16x896xbf16>
    %c48 = arith.constant 48 : index
    %c0_12 = arith.constant 0 : index
    %11 = vector.load %arg5[%c48, %c0_12] : memref<144x896xbf16, #tpu.memory_space<vmem>>, vector<16x896xbf16>
    tpu.vector_store %arg5[%c48, %c0_12], %10 {strides = array<i32>} : memref<144x896xbf16, #tpu.memory_space<vmem>>, vector<16x896xbf16>,
    %c0_13 = arith.constant 0 : index
    %c0_14 = arith.constant 0 : index
    %c14 = arith.constant 14 : index
    %12 = vector.load %arg1[%c0_13, %c0_14, %c14] : memref<1x16x1024xbf16, #tpu.memory_space<vmem>>, vector<1x16x896xbf16>
    %13 = vector.shape_cast %12 : vector<1x16x896xbf16> to vector<16x896xbf16>
    %c64 = arith.constant 64 : index
    %c0_15 = arith.constant 0 : index
    %14 = vector.load %arg5[%c64, %c0_15] : memref<144x896xbf16, #tpu.memory_space<vmem>>, vector<16x896xbf16>
    tpu.vector_store %arg5[%c64, %c0_15], %13 {strides = array<i32>} : memref<144x896xbf16, #tpu.memory_space<vmem>>, vector<16x896xbf16>,
    %c0_16 = arith.constant 0 : index
    %c0_17 = arith.constant 0 : index
    %c15 = arith.constant 15 : index
    %15 = vector.load %arg1[%c0_16, %c0_17, %c15] : memref<1x16x1024xbf16, #tpu.memory_space<vmem>>, vector<1x16x896xbf16>
    %16 = vector.shape_cast %15 : vector<1x16x896xbf16> to vector<16x896xbf16>
    %c80 = arith.constant 80 : index
    %c0_18 = arith.constant 0 : index
    %17 = vector.load %arg5[%c80, %c0_18] : memref<144x896xbf16, #tpu.memory_space<vmem>>, vector<16x896xbf16>
    tpu.vector_store %arg5[%c80, %c0_18], %16 {strides = array<i32>} : memref<144x896xbf16, #tpu.memory_space<vmem>>, vector<16x896xbf16>,
    %c0_19 = arith.constant 0 : index
    %c0_20 = arith.constant 0 : index
    %c26 = arith.constant 26 : index
    %18 = vector.load %arg1[%c0_19, %c0_20, %c26] : memref<1x16x1024xbf16, #tpu.memory_space<vmem>>, vector<1x16x896xbf16>
    %19 = vector.shape_cast %18 : vector<1x16x896xbf16> to vector<16x896xbf16>
    %c96 = arith.constant 96 : index
    %c0_21 = arith.constant 0 : index
    %20 = vector.load %arg5[%c96, %c0_21] : memref<144x896xbf16, #tpu.memory_space<vmem>>, vector<16x896xbf16>
    tpu.vector_store %arg5[%c96, %c0_21], %19 {strides = array<i32>} : memref<144x896xbf16, #tpu.memory_space<vmem>>, vector<16x896xbf16>,
    %c0_22 = arith.constant 0 : index
    %c0_23 = arith.constant 0 : index
    %c27 = arith.constant 27 : index
    %21 = vector.load %arg1[%c0_22, %c0_23, %c27] : memref<1x16x1024xbf16, #tpu.memory_space<vmem>>, vector<1x16x896xbf16>
    %22 = vector.shape_cast %21 : vector<1x16x896xbf16> to vector<16x896xbf16>
    %c112 = arith.constant 112 : index
    %c0_24 = arith.constant 0 : index
    %23 = vector.load %arg5[%c112, %c0_24] : memref<144x896xbf16, #tpu.memory_space<vmem>>, vector<16x896xbf16>
    tpu.vector_store %arg5[%c112, %c0_24], %22 {strides = array<i32>} : memref<144x896xbf16, #tpu.memory_space<vmem>>, vector<16x896xbf16>,
    %c0_25 = arith.constant 0 : index
    %c0_26 = arith.constant 0 : index
    %c28 = arith.constant 28 : index
    %24 = vector.load %arg1[%c0_25, %c0_26, %c28] : memref<1x16x1024xbf16, #tpu.memory_space<vmem>>, vector<1x16x896xbf16>
    %25 = vector.shape_cast %24 : vector<1x16x896xbf16> to vector<16x896xbf16>
    %c128 = arith.constant 128 : index
    %c0_27 = arith.constant 0 : index
    %26 = vector.load %arg5[%c128, %c0_27] : memref<144x896xbf16, #tpu.memory_space<vmem>>, vector<16x896xbf16>
    tpu.vector_store %arg5[%c128, %c0_27], %25 {strides = array<i32>} : memref<144x896xbf16, #tpu.memory_space<vmem>>, vector<16x896xbf16>,
    %c0_28 = arith.constant 0 : index
    %c0_29 = arith.constant 0 : index
    %27 = vector.load %arg2[%c0_28, %c0_29] : memref<8x144xbf16, #tpu.memory_space<vmem>>, vector<8x144xbf16>
    %c0_30 = arith.constant 0 : index
    %c0_31 = arith.constant 0 : index
    %28 = vector.load %arg5[%c0_30, %c0_31] : memref<144x896xbf16, #tpu.memory_space<vmem>>, vector<144x896xbf16>
    %cst = arith.constant dense<0.000000e+00> : vector<8x896xf32>
    %29 = tpu.matmul %27, %28, %cst {dimension_numbers = #tpu.dot_dimension_numbers<[1], [0], [0], [1], [0, 0, 1, 1], [], []>} : vector<8x144xbf16>, vector<144x896xbf16>, vector<8x896xf32> -> vector<8x896xf32>
    %c0_32 = arith.constant 0 : index
    %c0_33 = arith.constant 0 : index
    %30 = vector.load %arg3[%c0_32, %c0_33] : memref<8x1xf32, #tpu.memory_space<vmem>>, vector<8x1xf32>
    %31 = vector.broadcast %30 : vector<8x1xf32> to vector<8x896xf32>
    %32 = arith.addf %29, %31 : vector<8x896xf32>
    %cst_34 = arith.constant 0.000000e+00 : f32
    %33 = vector.broadcast %cst_34 : f32 to vector<8x896xf32>
    %34 = arith.maximumf %32, %33 : vector<8x896xf32>
    %35 = vector.extract_strided_slice %34 {offsets = [0, 0], sizes = [8, 768], strides = [1, 1]} : vector<8x896xf32> to vector<8x768xf32>
    %36 = vector.extract_strided_slice %34 {offsets = [0, 1], sizes = [8, 768], strides = [1, 1]} : vector<8x896xf32> to vector<8x768xf32>
    %37 = arith.maximumf %35, %36 : vector<8x768xf32>
    %38 = vector.extract_strided_slice %34 {offsets = [0, 13], sizes = [8, 768], strides = [1, 1]} : vector<8x896xf32> to vector<8x768xf32>
    %39 = arith.maximumf %37, %38 : vector<8x768xf32>
    %40 = vector.extract_strided_slice %34 {offsets = [0, 14], sizes = [8, 768], strides = [1, 1]} : vector<8x896xf32> to vector<8x768xf32>
    %41 = arith.maximumf %39, %40 : vector<8x768xf32>
    %42 = arith.truncf %41 : vector<8x768xf32> to vector<8x768xbf16>
    %c0_35 = arith.constant 0 : index
    %c0_36 = arith.constant 0 : index
    %c0_37 = arith.constant 0 : index
    %43 = vector.load %arg4[%c0_35, %c0_36, %c0_37] : memref<1x8x768xbf16, #tpu.memory_space<vmem>>, vector<1x8x768xbf16>
    %44 = vector.shape_cast %43 : vector<1x8x768xbf16> to vector<8x768xbf16>
    %45 = vector.shape_cast %42 : vector<8x768xbf16> to vector<1x8x768xbf16>
    tpu.vector_store %arg4[%c0_35, %c0_36, %c0_37], %45 {strides = array<i32>} : memref<1x8x768xbf16, #tpu.memory_space<vmem>>, vector<1x8x768xbf16>,
    return
  }
  func.func @transform_0(%arg0: i32) -> (i32, i32, i32) {
    %c0_i32 = arith.constant 0 : i32
    %c0_i32_0 = arith.constant 0 : i32
    %c0_i32_1 = arith.constant 0 : i32
    return %arg0, %c0_i32, %c0_i32_0 : i32, i32, i32
  }
  func.func @transform_1(%arg0: i32) -> (i32, i32) {
    %c0_i32 = arith.constant 0 : i32
    %c0_i32_0 = arith.constant 0 : i32
    %c0_i32_1 = arith.constant 0 : i32
    return %c0_i32, %c0_i32_0 : i32, i32
  }
  func.func @transform_2(%arg0: i32) -> (i32, i32) {
    %c0_i32 = arith.constant 0 : i32
    %c0_i32_0 = arith.constant 0 : i32
    %c0_i32_1 = arith.constant 0 : i32
    return %c0_i32, %c0_i32_0 : i32, i32
  }
  func.func @transform_3(%arg0: i32) -> (i32, i32, i32) {
    %c0_i32 = arith.constant 0 : i32
    %c0_i32_0 = arith.constant 0 : i32
    %c0_i32_1 = arith.constant 0 : i32
    return %arg0, %c0_i32, %c0_i32_0 : i32, i32, i32
  }
}

module attributes {stable_mosaic.version = 11 : i64} {
  func.func @kernel(%arg0: i32, %arg1: memref<1x16x1024xbf16, #tpu.memory_space<vmem>>, %arg2: memref<8x144xbf16, #tpu.memory_space<vmem>>, %arg3: memref<8x1xf32, #tpu.memory_space<vmem>>, %arg4: memref<8x8xbf16, #tpu.memory_space<vmem>>, %arg5: memref<8x1xf32, #tpu.memory_space<vmem>>, %arg6: memref<1x8x896xbf16, #tpu.memory_space<vmem>>, %arg7: memref<144x896xbf16, #tpu.memory_space<vmem>>) attributes {dimension_semantics = [#tpu.dimension_semantics<parallel>], iteration_bounds = array<i64: 2>, scalar_prefetch = 0 : i64, scratch_operands = 1 : i64, tpu.core_type = #tpu.core_type<tc>, window_params = [{transform_indices = @transform_0, window_bounds = array<i64: 1, 16, 1024>}, {pipeline_mode = #tpu.pipeline_mode<synchronous>, transform_indices = @transform_1, window_bounds = array<i64: 8, 144>}, {pipeline_mode = #tpu.pipeline_mode<synchronous>, transform_indices = @transform_2, window_bounds = array<i64: 8, 1>}, {pipeline_mode = #tpu.pipeline_mode<synchronous>, transform_indices = @transform_3, window_bounds = array<i64: 8, 8>}, {pipeline_mode = #tpu.pipeline_mode<synchronous>, transform_indices = @transform_4, window_bounds = array<i64: 8, 1>}, {transform_indices = @transform_5, window_bounds = array<i64: 1, 8, 896>}]} {
    %c0 = arith.constant 0 : index
    %c0_0 = arith.constant 0 : index
    %c0_1 = arith.constant 0 : index
    %0 = vector.load %arg1[%c0, %c0_0, %c0_1] : memref<1x16x1024xbf16, #tpu.memory_space<vmem>>, vector<1x16x896xbf16>
    %1 = vector.shape_cast %0 : vector<1x16x896xbf16> to vector<16x896xbf16>
    %c0_2 = arith.constant 0 : index
    %c0_3 = arith.constant 0 : index
    %2 = vector.load %arg7[%c0_2, %c0_3] : memref<144x896xbf16, #tpu.memory_space<vmem>>, vector<16x896xbf16>
    tpu.vector_store %arg7[%c0_2, %c0_3], %1 {strides = array<i32>} : memref<144x896xbf16, #tpu.memory_space<vmem>>, vector<16x896xbf16>,
    %c0_4 = arith.constant 0 : index
    %c0_5 = arith.constant 0 : index
    %c1 = arith.constant 1 : index
    %3 = vector.load %arg1[%c0_4, %c0_5, %c1] : memref<1x16x1024xbf16, #tpu.memory_space<vmem>>, vector<1x16x896xbf16>
    %4 = vector.shape_cast %3 : vector<1x16x896xbf16> to vector<16x896xbf16>
    %c16 = arith.constant 16 : index
    %c0_6 = arith.constant 0 : index
    %5 = vector.load %arg7[%c16, %c0_6] : memref<144x896xbf16, #tpu.memory_space<vmem>>, vector<16x896xbf16>
    tpu.vector_store %arg7[%c16, %c0_6], %4 {strides = array<i32>} : memref<144x896xbf16, #tpu.memory_space<vmem>>, vector<16x896xbf16>,
    %c0_7 = arith.constant 0 : index
    %c0_8 = arith.constant 0 : index
    %c2 = arith.constant 2 : index
    %6 = vector.load %arg1[%c0_7, %c0_8, %c2] : memref<1x16x1024xbf16, #tpu.memory_space<vmem>>, vector<1x16x896xbf16>
    %7 = vector.shape_cast %6 : vector<1x16x896xbf16> to vector<16x896xbf16>
    %c32 = arith.constant 32 : index
    %c0_9 = arith.constant 0 : index
    %8 = vector.load %arg7[%c32, %c0_9] : memref<144x896xbf16, #tpu.memory_space<vmem>>, vector<16x896xbf16>
    tpu.vector_store %arg7[%c32, %c0_9], %7 {strides = array<i32>} : memref<144x896xbf16, #tpu.memory_space<vmem>>, vector<16x896xbf16>,
    %c0_10 = arith.constant 0 : index
    %c0_11 = arith.constant 0 : index
    %c7 = arith.constant 7 : index
    %9 = vector.load %arg1[%c0_10, %c0_11, %c7] : memref<1x16x1024xbf16, #tpu.memory_space<vmem>>, vector<1x16x896xbf16>
    %10 = vector.shape_cast %9 : vector<1x16x896xbf16> to vector<16x896xbf16>
    %c48 = arith.constant 48 : index
    %c0_12 = arith.constant 0 : index
    %11 = vector.load %arg7[%c48, %c0_12] : memref<144x896xbf16, #tpu.memory_space<vmem>>, vector<16x896xbf16>
    tpu.vector_store %arg7[%c48, %c0_12], %10 {strides = array<i32>} : memref<144x896xbf16, #tpu.memory_space<vmem>>, vector<16x896xbf16>,
    %c0_13 = arith.constant 0 : index
    %c0_14 = arith.constant 0 : index
    %c8 = arith.constant 8 : index
    %12 = vector.load %arg1[%c0_13, %c0_14, %c8] : memref<1x16x1024xbf16, #tpu.memory_space<vmem>>, vector<1x16x896xbf16>
    %13 = vector.shape_cast %12 : vector<1x16x896xbf16> to vector<16x896xbf16>
    %c64 = arith.constant 64 : index
    %c0_15 = arith.constant 0 : index
    %14 = vector.load %arg7[%c64, %c0_15] : memref<144x896xbf16, #tpu.memory_space<vmem>>, vector<16x896xbf16>
    tpu.vector_store %arg7[%c64, %c0_15], %13 {strides = array<i32>} : memref<144x896xbf16, #tpu.memory_space<vmem>>, vector<16x896xbf16>,
    %c0_16 = arith.constant 0 : index
    %c0_17 = arith.constant 0 : index
    %c9 = arith.constant 9 : index
    %15 = vector.load %arg1[%c0_16, %c0_17, %c9] : memref<1x16x1024xbf16, #tpu.memory_space<vmem>>, vector<1x16x896xbf16>
    %16 = vector.shape_cast %15 : vector<1x16x896xbf16> to vector<16x896xbf16>
    %c80 = arith.constant 80 : index
    %c0_18 = arith.constant 0 : index
    %17 = vector.load %arg7[%c80, %c0_18] : memref<144x896xbf16, #tpu.memory_space<vmem>>, vector<16x896xbf16>
    tpu.vector_store %arg7[%c80, %c0_18], %16 {strides = array<i32>} : memref<144x896xbf16, #tpu.memory_space<vmem>>, vector<16x896xbf16>,
    %c0_19 = arith.constant 0 : index
    %c0_20 = arith.constant 0 : index
    %c14 = arith.constant 14 : index
    %18 = vector.load %arg1[%c0_19, %c0_20, %c14] : memref<1x16x1024xbf16, #tpu.memory_space<vmem>>, vector<1x16x896xbf16>
    %19 = vector.shape_cast %18 : vector<1x16x896xbf16> to vector<16x896xbf16>
    %c96 = arith.constant 96 : index
    %c0_21 = arith.constant 0 : index
    %20 = vector.load %arg7[%c96, %c0_21] : memref<144x896xbf16, #tpu.memory_space<vmem>>, vector<16x896xbf16>
    tpu.vector_store %arg7[%c96, %c0_21], %19 {strides = array<i32>} : memref<144x896xbf16, #tpu.memory_space<vmem>>, vector<16x896xbf16>,
    %c0_22 = arith.constant 0 : index
    %c0_23 = arith.constant 0 : index
    %c15 = arith.constant 15 : index
    %21 = vector.load %arg1[%c0_22, %c0_23, %c15] : memref<1x16x1024xbf16, #tpu.memory_space<vmem>>, vector<1x16x896xbf16>
    %22 = vector.shape_cast %21 : vector<1x16x896xbf16> to vector<16x896xbf16>
    %c112 = arith.constant 112 : index
    %c0_24 = arith.constant 0 : index
    %23 = vector.load %arg7[%c112, %c0_24] : memref<144x896xbf16, #tpu.memory_space<vmem>>, vector<16x896xbf16>
    tpu.vector_store %arg7[%c112, %c0_24], %22 {strides = array<i32>} : memref<144x896xbf16, #tpu.memory_space<vmem>>, vector<16x896xbf16>,
    %c0_25 = arith.constant 0 : index
    %c0_26 = arith.constant 0 : index
    %c16_27 = arith.constant 16 : index
    %24 = vector.load %arg1[%c0_25, %c0_26, %c16_27] : memref<1x16x1024xbf16, #tpu.memory_space<vmem>>, vector<1x16x896xbf16>
    %25 = vector.shape_cast %24 : vector<1x16x896xbf16> to vector<16x896xbf16>
    %c128 = arith.constant 128 : index
    %c0_28 = arith.constant 0 : index
    %26 = vector.load %arg7[%c128, %c0_28] : memref<144x896xbf16, #tpu.memory_space<vmem>>, vector<16x896xbf16>
    tpu.vector_store %arg7[%c128, %c0_28], %25 {strides = array<i32>} : memref<144x896xbf16, #tpu.memory_space<vmem>>, vector<16x896xbf16>,
    %c0_29 = arith.constant 0 : index
    %c0_30 = arith.constant 0 : index
    %27 = vector.load %arg2[%c0_29, %c0_30] : memref<8x144xbf16, #tpu.memory_space<vmem>>, vector<8x144xbf16>
    %c0_31 = arith.constant 0 : index
    %c0_32 = arith.constant 0 : index
    %28 = vector.load %arg7[%c0_31, %c0_32] : memref<144x896xbf16, #tpu.memory_space<vmem>>, vector<144x896xbf16>
    %cst = arith.constant dense<0.000000e+00> : vector<8x896xf32>
    %29 = tpu.matmul %27, %28, %cst {dimension_numbers = #tpu.dot_dimension_numbers<[1], [0], [0], [1], [0, 0, 1, 1], [], []>} : vector<8x144xbf16>, vector<144x896xbf16>, vector<8x896xf32> -> vector<8x896xf32>
    %c0_33 = arith.constant 0 : index
    %c0_34 = arith.constant 0 : index
    %30 = vector.load %arg3[%c0_33, %c0_34] : memref<8x1xf32, #tpu.memory_space<vmem>>, vector<8x1xf32>
    %31 = vector.broadcast %30 : vector<8x1xf32> to vector<8x896xf32>
    %32 = arith.addf %29, %31 : vector<8x896xf32>
    %cst_35 = arith.constant 0.000000e+00 : f32
    %33 = vector.broadcast %cst_35 : f32 to vector<8x896xf32>
    %34 = arith.maximumf %32, %33 : vector<8x896xf32>
    %c0_36 = arith.constant 0 : index
    %c0_37 = arith.constant 0 : index
    %35 = vector.load %arg4[%c0_36, %c0_37] : memref<8x8xbf16, #tpu.memory_space<vmem>>, vector<8x8xbf16>
    %36 = arith.truncf %34 : vector<8x896xf32> to vector<8x896xbf16>
    %cst_38 = arith.constant dense<0.000000e+00> : vector<8x896xf32>
    %37 = tpu.matmul %35, %36, %cst_38 {dimension_numbers = #tpu.dot_dimension_numbers<[1], [0], [0], [1], [0, 0, 1, 1], [], []>} : vector<8x8xbf16>, vector<8x896xbf16>, vector<8x896xf32> -> vector<8x896xf32>
    %c0_39 = arith.constant 0 : index
    %c0_40 = arith.constant 0 : index
    %38 = vector.load %arg5[%c0_39, %c0_40] : memref<8x1xf32, #tpu.memory_space<vmem>>, vector<8x1xf32>
    %39 = vector.broadcast %38 : vector<8x1xf32> to vector<8x896xf32>
    %40 = arith.addf %37, %39 : vector<8x896xf32>
    %41 = arith.truncf %40 : vector<8x896xf32> to vector<8x896xbf16>
    %c0_41 = arith.constant 0 : index
    %c0_42 = arith.constant 0 : index
    %c0_43 = arith.constant 0 : index
    %42 = vector.load %arg6[%c0_41, %c0_42, %c0_43] : memref<1x8x896xbf16, #tpu.memory_space<vmem>>, vector<1x8x896xbf16>
    %43 = vector.shape_cast %42 : vector<1x8x896xbf16> to vector<8x896xbf16>
    %44 = vector.shape_cast %41 : vector<8x896xbf16> to vector<1x8x896xbf16>
    tpu.vector_store %arg6[%c0_41, %c0_42, %c0_43], %44 {strides = array<i32>} : memref<1x8x896xbf16, #tpu.memory_space<vmem>>, vector<1x8x896xbf16>,
    return
  }
  func.func @transform_0(%arg0: i32) -> (i32, i32, i32) {
    %c0_i32 = arith.constant 0 : i32
    %c0_i32_0 = arith.constant 0 : i32
    %c0_i32_1 = arith.constant 0 : i32
    return %arg0, %c0_i32, %c0_i32_0 : i32, i32, i32
  }
  func.func @transform_1(%arg0: i32) -> (i32, i32) {
    %c0_i32 = arith.constant 0 : i32
    %c0_i32_0 = arith.constant 0 : i32
    %c0_i32_1 = arith.constant 0 : i32
    return %c0_i32, %c0_i32_0 : i32, i32
  }
  func.func @transform_2(%arg0: i32) -> (i32, i32) {
    %c0_i32 = arith.constant 0 : i32
    %c0_i32_0 = arith.constant 0 : i32
    %c0_i32_1 = arith.constant 0 : i32
    return %c0_i32, %c0_i32_0 : i32, i32
  }
  func.func @transform_3(%arg0: i32) -> (i32, i32) {
    %c0_i32 = arith.constant 0 : i32
    %c0_i32_0 = arith.constant 0 : i32
    %c0_i32_1 = arith.constant 0 : i32
    return %c0_i32, %c0_i32_0 : i32, i32
  }
  func.func @transform_4(%arg0: i32) -> (i32, i32) {
    %c0_i32 = arith.constant 0 : i32
    %c0_i32_0 = arith.constant 0 : i32
    %c0_i32_1 = arith.constant 0 : i32
    return %c0_i32, %c0_i32_0 : i32, i32
  }
  func.func @transform_5(%arg0: i32) -> (i32, i32, i32) {
    %c0_i32 = arith.constant 0 : i32
    %c0_i32_0 = arith.constant 0 : i32
    %c0_i32_1 = arith.constant 0 : i32
    return %arg0, %c0_i32, %c0_i32_0 : i32, i32, i32
  }
}

</mosaic_0001>

<llo_original>
// kernel: slimnet_forward.3
$region0: #{slimnet_forward.3}
  #allocation0 [shape = 'u32[]', space=smem, size = 0x4, offset = 0x4, fixed_abs, tag = 'smem constant byte address 0x4 - core index']
  #allocation1 [shape = 'u32[144,128]{1,0:T(1,128)}', space=vmem, size = 0x12000, scoped, tag = 'internal scratch']
  #allocation2 [shape = 'bf16[144,768]{1,0:T(8,128)(2,1)}', space=vmem, size = 0x36000, scoped, tag = 'scratch operand']
  %s0 = inlined_call_operand.vmem [shape: bf16[2,16,896], index: 0, kind: input, shape index: {}]
  %s1 = inlined_call_operand.vmem [shape: bf16[8,144], index: 1, kind: input, shape index: {}]
  %s2 = inlined_call_operand.vmem [shape: f32[8,1], index: 2, kind: input, shape index: {}]
  %s3 = inlined_call_operand.vmem [shape: bf16[2,8,640], index: 3, kind: output, shape index: {}]
  %s4 = sld [smem:[#allocation0]]
  $region45: #{slimnet_forward.3} parent=0
    _
  %s6 = ssub.s32 1, %s4
  %s7 = scalar_select 0, %s6, %s4
  loop: start=0, step=1, limit=4
  $region2: #{slimnet_forward.3} parent=0 // loop_pre_header
    _
  $region3: #{slimnet_forward.3} parent=0 // loop_header
    %s9 = sphi 0, %s13
    %p10 = scmp.ge.s32.totalorder %s9, 4
    %s19 = sphi 0, %s21
    %s22 = sphi 0, %s19
    %s23 = sphi 0, %s22
    %s39 = sphi 0, %s23
    %s43 = sphi 0, %s43
    %s45 = sphi 0, %s43
    %s46 = sphi 0, %s45
    %s60 = sphi 0, %s46
    %s64 = sphi 0, %s64
    %s66 = sphi 0, %s64
    %s67 = sphi 0, %s66
    %s81 = sphi 0, %s67
    %s87 = sphi 0, %s89
    %s90 = sphi 0, %s87
    %s91 = sphi 0, %s90
    %s107 = sphi 0, %s91
  $region4: #{slimnet_forward.3} parent=0 // loop_header_branch
    %12 = sbr.rel (%p10) target = $region8
  $region5: #{slimnet_forward.3} parent=0 // loop_body
    %s14 = ssub.s32 %s9, 1
    %s15 = ssub.s32 %s9, 2
    %s16 = sadd.s32 %s9, 1
    %s17 = ssub.s32 %s9, %s16
    %p18 = scmp.eq.s32.totalorder %s17, 0
    %s20 = sadd.s32 %s19, 1
    %s21 = scalar_select %p18, %s19, %s20
    %p24 = pneg %p18
    %p25 = scmp.eq.s32.totalorder %s9, 1
    %p26 = por %p24, %p25
    %p27 = scmp.ne.s32.totalorder %s19, %s22
    %p28 = scmp.eq.s32.totalorder %s9, 0
    %p29 = por %p27, %p28
    %p30 = scmp.ne.s32.totalorder %s19, %s22
    %p31 = scmp.eq.s32.totalorder %s14, 1
    %p32 = por %p30, %p31
    %p33 = scmp.ne.s32.totalorder %s22, %s23
    %p34 = scmp.eq.s32.totalorder %s14, 0
    %p35 = por %p33, %p34
    %p36 = scmp.ne.s32.totalorder %s22, %s23
    %p37 = scmp.eq.s32.totalorder %s15, 1
    %p38 = por %p36, %p37
    %p40 = scmp.ne.s32.totalorder %s23, %s39
    %p41 = scmp.eq.s32.totalorder %s15, 0
    %p42 = por %p40, %p41
    %s44 = sadd.s32 %s43, 1
    %p47 = scmp.eq.s32.totalorder %s9, 1
    %p48 = scmp.ne.s32.totalorder %s43, %s45
    %p49 = scmp.eq.s32.totalorder %s9, 0
    %p50 = por %p48, %p49
    %p51 = scmp.ne.s32.totalorder %s43, %s45
    %p52 = scmp.eq.s32.totalorder %s14, 1
    %p53 = por %p51, %p52
    %p54 = scmp.ne.s32.totalorder %s45, %s46
    %p55 = scmp.eq.s32.totalorder %s14, 0
    %p56 = por %p54, %p55
    %p57 = scmp.ne.s32.totalorder %s45, %s46
    %p58 = scmp.eq.s32.totalorder %s15, 1
    %p59 = por %p57, %p58
    %p61 = scmp.ne.s32.totalorder %s46, %s60
    %p62 = scmp.eq.s32.totalorder %s15, 0
    %p63 = por %p61, %p62
    %s65 = sadd.s32 %s64, 1
    %p68 = scmp.eq.s32.totalorder %s9, 1
    %p69 = scmp.ne.s32.totalorder %s64, %s66
    %p70 = scmp.eq.s32.totalorder %s9, 0
    %p71 = por %p69, %p70
    %p72 = scmp.ne.s32.totalorder %s64, %s66
    %p73 = scmp.eq.s32.totalorder %s14, 1
    %p74 = por %p72, %p73
    %p75 = scmp.ne.s32.totalorder %s66, %s67
    %p76 = scmp.eq.s32.totalorder %s14, 0
    %p77 = por %p75, %p76
    %p78 = scmp.ne.s32.totalorder %s66, %s67
    %p79 = scmp.eq.s32.totalorder %s15, 1
    %p80 = por %p78, %p79
    %p82 = scmp.ne.s32.totalorder %s67, %s81
    %p83 = scmp.eq.s32.totalorder %s15, 0
    %p84 = por %p82, %p83
    %s85 = ssub.s32 %s9, %s16
    %p86 = scmp.eq.s32.totalorder %s85, 0
    %s88 = sadd.s32 %s87, 1
    %s89 = scalar_select %p86, %s87, %s88
    %p92 = pneg %p86
    %p93 = scmp.eq.s32.totalorder %s9, 1
    %p94 = por %p92, %p93
    %p95 = scmp.ne.s32.totalorder %s87, %s90
    %p96 = scmp.eq.s32.totalorder %s9, 0
    %p97 = por %p95, %p96
    %p98 = scmp.ne.s32.totalorder %s87, %s90
    %p99 = scmp.eq.s32.totalorder %s14, 1
    %p100 = por %p98, %p99
    %p101 = scmp.ne.s32.totalorder %s90, %s91
    %p102 = scmp.eq.s32.totalorder %s14, 0
    %p103 = por %p101, %p102
    %p104 = scmp.ne.s32.totalorder %s90, %s91
    %p105 = scmp.eq.s32.totalorder %s15, 1
    %p106 = por %p104, %p105
    %p108 = scmp.ne.s32.totalorder %s91, %s107
    %p109 = scmp.eq.s32.totalorder %s15, 0
    %p110 = por %p108, %p109
    %p111 = scmp.le.s32.totalorder 1, %s9
    %p112 = scmp.lt.s32.totalorder %s9, 3
    %p113 = pnand %p111, %p112
    %p114 = pneg %p113
    // Predicated region
    $region9: #{slimnet_forward.3} parent=5 // pred_check
      _
    $region10: #{slimnet_forward.3} parent=5 // pred_check_branch
      %116 = sbr.rel (%p113) target = $region12
    $region11: #{slimnet_forward.3} parent=5 // pred_region
      %s117 = ssub.s32 %s9, 1
      // Predicated region
      $region13: #{slimnet_forward.3} parent=11 // pred_check
        %p118 = pneg %p56
      $region14: #{slimnet_forward.3} parent=11 // pred_check_branch
        %120 = sbr.rel (%p118) target = $region16
      $region15: #{slimnet_forward.3} parent=11 // pred_region
        _
      $region16: #{slimnet_forward.3} parent=11 // pred_fallthru
        _
      // Predicated region
      $region17: #{slimnet_forward.3} parent=11 // pred_check
        %p121 = pneg %p77
      $region18: #{slimnet_forward.3} parent=11 // pred_check_branch
        %123 = sbr.rel (%p121) target = $region20
      $region19: #{slimnet_forward.3} parent=11 // pred_region
        _
      $region20: #{slimnet_forward.3} parent=11 // pred_fallthru
        _
    $region12: #{slimnet_forward.3} parent=5 // pred_fallthru
      _
    %p124 = scmp.lt.s32.totalorder %s9, 2
    // Predicated region
    $region21: #{slimnet_forward.3} parent=5 // pred_check
      %p125 = pneg %p124
    $region22: #{slimnet_forward.3} parent=5 // pred_check_branch
      %127 = sbr.rel (%p125) target = $region24
    $region23: #{slimnet_forward.3} parent=5 // pred_region
      // Predicated region
      $region25: #{slimnet_forward.3} parent=23 // pred_check
        %p128 = pneg %p29
      $region26: #{slimnet_forward.3} parent=23 // pred_check_branch
        %130 = sbr.rel (%p128) target = $region28
      $region27: #{slimnet_forward.3} parent=23 // pred_region
        %p131 = scmp.lt.s32.totalorder %s9, 1
        %s132 = scalar_select %p131, %s9, 1
        %s133 = smul.addr %s132, 14
        %s134 = smul.addr %s133, 4
        %s135 = scalar_lea.vmem %s0, %s134
      $region28: #{slimnet_forward.3} parent=23 // pred_fallthru
        _
    $region24: #{slimnet_forward.3} parent=5 // pred_fallthru
      _
    %p136 = scmp.le.s32.totalorder 1, %s9
    %p137 = scmp.lt.s32.totalorder %s9, 3
    %p138 = pnand %p136, %p137
    %p139 = pneg %p138
    // Predicated region
    $region29: #{slimnet_forward.3} parent=5 // pred_check
      _
    $region30: #{slimnet_forward.3} parent=5 // pred_check_branch
      %141 = sbr.rel (%p138) target = $region32
    $region31: #{slimnet_forward.3} parent=5 // pred_region
      %s142 = ssub.s32 %s9, 1
      %p143 = scmp.lt.s32.totalorder %s14, 1
      %s144 = scalar_select %p143, %s14, 1
      %s145 = smul.addr %s144, 14
      %s146 = smul.addr %s145, 4
      %s147 = scalar_lea.vmem %s0, %s146
      %p148 = pneg %p35
      %p149 = pneg %p32
      %p150 = pneg %p56
      %p151 = pneg %p53
      %p152 = pneg %p77
      %p153 = pneg %p74
      %p154 = pneg %p103
      %p155 = pneg %p100
      %p156 = scmp.lt.s32.totalorder %s14, 1
      %s157 = scalar_select %p156, %s14, 1
      %s158 = smul.addr %s157, 5
      %s159 = smul.addr %s158, 4
      %s160 = scalar_lea.vmem %s3, %s159
      %p161 = scmp.lt.s32.totalorder %s14, 1
      %s162 = scalar_select %p161, %s14, 1
      %s163 = smul.addr %s162, 14
      %s164 = smul.addr %s163, 4
      %s165 = scalar_lea.vmem %s0, %s164
      %p166 = scmp.lt.s32.totalorder %s14, 1
      %s167 = scalar_select %p166, %s14, 1
      %s168 = smul.addr %s167, 5
      %s169 = smul.addr %s168, 4
      %s170 = scalar_lea.vmem %s3, %s169
      %v172 = vld [vmem:[%s165] sm:$0xff]
      %v173 = vld [vmem:[%s165 + $0x8] sm:$0xff]
      %v174 = vld [vmem:[%s165 + $0x10] sm:$0xff]
      %v175 = vld [vmem:[%s165 + $0x1c] sm:$0xff]
      %v176 = vld [vmem:[%s165 + $0x24] sm:$0xff]
      %v177 = vld [vmem:[%s165 + $0x2c] sm:$0xff]
      %178 = vst [vmem:[#allocation2] sm:$0xff] %v172
      %179 = vst [vmem:[#allocation2 + $0x8] sm:$0xff] %v173
      %180 = vst [vmem:[#allocation2 + $0x10] sm:$0xff] %v174
      %181 = vst [vmem:[#allocation2 + $0x18] sm:$0xff] %v175
      %182 = vst [vmem:[#allocation2 + $0x20] sm:$0xff] %v176
      %183 = vst [vmem:[#allocation2 + $0x28] sm:$0xff] %v177
      %v184 = vld [vmem:[%s165] sm:$0xff]
      %v185 = vld [vmem:[%s165 + $0x8] sm:$0xff]
      %v186 = vld [vmem:[%s165 + $0x10] sm:$0xff]
      %v187 = vld [vmem:[%s165 + $0x18] sm:$0xf]
      %v188 = vld [vmem:[%s165 + $0x1c] sm:$0xff]
      %v189 = vld [vmem:[%s165 + $0x24] sm:$0xff]
      %v190 = vld [vmem:[%s165 + $0x2c] sm:$0xff]
      %v191 = vld [vmem:[%s165 + $0x34] sm:$0xf]
      %200 = vrot.lane.b32.xlu0 %v184, 127
      %v201 = vpop.permute.xlu0 %200
      %202 = vrot.lane.b32.xlu0 %v185, 127
      %v203 = vpop.permute.xlu0 %202
      %204 = vrot.lane.b32.xlu0 %v186, 127
      %v205 = vpop.permute.xlu0 %204
      %206 = vrot.lane.b32.xlu0 %v187, 127
      %v207 = vpop.permute.xlu0 %206
      %208 = vrot.lane.b32.xlu0 %v188, 127
      %v209 = vpop.permute.xlu0 %208
      %210 = vrot.lane.b32.xlu0 %v189, 127
      %v211 = vpop.permute.xlu0 %210
      %212 = vrot.lane.b32.xlu0 %v190, 127
      %v213 = vpop.permute.xlu0 %212
      %214 = vrot.lane.b32.xlu0 %v191, 127
      %v215 = vpop.permute.xlu0 %214
      %v216 = vrot.slane %v201, 4
      %v217 = vrot.slane %v203, 4
      %v218 = vrot.slane %v205, 4
      %v219 = vrot.slane %v207, 4
      %v220 = vrot.slane %v209, 4
      %v221 = vrot.slane %v211, 4
      %v222 = vrot.slane %v213, 4
      %v223 = vrot.slane %v215, 4
      %vm224 = vcmask 1043456
      %v225 = vsel %vm224, %v216, %v217
      %vm226 = vcmask 1039360
      %v227 = vsel %vm226, %v201, %v225
      %v228 = vsel %vm224, %v217, %v218
      %v229 = vsel %vm226, %v203, %v228
      %v230 = vsel %vm224, %v218, %v219
      %v231 = vsel %vm226, %v205, %v230
      %v232 = vsel %vm224, %v220, %v221
      %v233 = vsel %vm226, %v209, %v232
      %v234 = vsel %vm224, %v221, %v222
      %v235 = vsel %vm226, %v211, %v234
      %v236 = vsel %vm224, %v222, %v223
      %v237 = vsel %vm226, %v213, %v236
      %244 = vst [vmem:[#allocation2 + $0x30] sm:$0xff] %v227
      %245 = vst [vmem:[#allocation2 + $0x38] sm:$0xff] %v229
      %246 = vst [vmem:[#allocation2 + $0x40] sm:$0xff] %v231
      %247 = vst [vmem:[#allocation2 + $0x48] sm:$0xff] %v233
      %248 = vst [vmem:[#allocation2 + $0x50] sm:$0xff] %v235
      %249 = vst [vmem:[#allocation2 + $0x58] sm:$0xff] %v237
      %v250 = vld [vmem:[%s165] sm:$0xff]
      %v251 = vld [vmem:[%s165 + $0x8] sm:$0xff]
      %v252 = vld [vmem:[%s165 + $0x10] sm:$0xff]
      %v253 = vld [vmem:[%s165 + $0x18] sm:$0xf]
      %v254 = vld [vmem:[%s165 + $0x1c] sm:$0xff]
      %v255 = vld [vmem:[%s165 + $0x24] sm:$0xff]
      %v256 = vld [vmem:[%s165 + $0x2c] sm:$0xff]
      %v257 = vld [vmem:[%s165 + $0x34] sm:$0xf]
      %266 = vrot.lane.b32.xlu0 %v250, 126
      %v267 = vpop.permute.xlu0 %266
      %268 = vrot.lane.b32.xlu0 %v251, 126
      %v269 = vpop.permute.xlu0 %268
      %270 = vrot.lane.b32.xlu0 %v252, 126
      %v271 = vpop.permute.xlu0 %270
      %272 = vrot.lane.b32.xlu0 %v253, 126
      %v273 = vpop.permute.xlu0 %272
      %274 = vrot.lane.b32.xlu0 %v254, 126
      %v275 = vpop.permute.xlu0 %274
      %276 = vrot.lane.b32.xlu0 %v255, 126
      %v277 = vpop.permute.xlu0 %276
      %278 = vrot.lane.b32.xlu0 %v256, 126
      %v279 = vpop.permute.xlu0 %278
      %280 = vrot.lane.b32.xlu0 %v257, 126
      %v281 = vpop.permute.xlu0 %280
      %v282 = vrot.slane %v267, 4
      %v283 = vrot.slane %v269, 4
      %v284 = vrot.slane %v271, 4
      %v285 = vrot.slane %v273, 4
      %v286 = vrot.slane %v275, 4
      %v287 = vrot.slane %v277, 4
      %v288 = vrot.slane %v279, 4
      %v289 = vrot.slane %v281, 4
      %v290 = vsel %vm224, %v282, %v283
      %vm291 = vcmask 1031168
      %v292 = vsel %vm291, %v267, %v290
      %v293 = vsel %vm224, %v283, %v284
      %v294 = vsel %vm291, %v269, %v293
      %v295 = vsel %vm224, %v284, %v285
      %v296 = vsel %vm291, %v271, %v295
      %v297 = vsel %vm224, %v286, %v287
      %v298 = vsel %vm291, %v275, %v297
      %v299 = vsel %vm224, %v287, %v288
      %v300 = vsel %vm291, %v277, %v299
      %v301 = vsel %vm224, %v288, %v289
      %v302 = vsel %vm291, %v279, %v301
      %309 = vst [vmem:[#allocation2 + $0x60] sm:$0xff] %v292
      %310 = vst [vmem:[#allocation2 + $0x68] sm:$0xff] %v294
      %311 = vst [vmem:[#allocation2 + $0x70] sm:$0xff] %v296
      %312 = vst [vmem:[#allocation2 + $0x78] sm:$0xff] %v298
      %313 = vst [vmem:[#allocation2 + $0x80] sm:$0xff] %v300
      %314 = vst [vmem:[#allocation2 + $0x88] sm:$0xff] %v302
      %v315 = vld [vmem:[%s165] sm:$0xff]
      %v316 = vld [vmem:[%s165 + $0x8] sm:$0xff]
      %v317 = vld [vmem:[%s165 + $0x10] sm:$0xff]
      %v318 = vld [vmem:[%s165 + $0x18] sm:$0xf]
      %v319 = vld [vmem:[%s165 + $0x1c] sm:$0xff]
      %v320 = vld [vmem:[%s165 + $0x24] sm:$0xff]
      %v321 = vld [vmem:[%s165 + $0x2c] sm:$0xff]
      %v322 = vld [vmem:[%s165 + $0x34] sm:$0xf]
      %331 = vrot.lane.b32.xlu0 %v315, 103
      %v332 = vpop.permute.xlu0 %331
      %333 = vrot.lane.b32.xlu0 %v316, 103
      %v334 = vpop.permute.xlu0 %333
      %335 = vrot.lane.b32.xlu0 %v317, 103
      %v336 = vpop.permute.xlu0 %335
      %337 = vrot.lane.b32.xlu0 %v318, 103
      %v338 = vpop.permute.xlu0 %337
      %339 = vrot.lane.b32.xlu0 %v319, 103
      %v340 = vpop.permute.xlu0 %339
      %341 = vrot.lane.b32.xlu0 %v320, 103
      %v342 = vpop.permute.xlu0 %341
      %343 = vrot.lane.b32.xlu0 %v321, 103
      %v344 = vpop.permute.xlu0 %343
      %345 = vrot.lane.b32.xlu0 %v322, 103
      %v346 = vpop.permute.xlu0 %345
      %v347 = vrot.slane %v332, 4
      %v348 = vrot.slane %v334, 4
      %v349 = vrot.slane %v336, 4
      %v350 = vrot.slane %v338, 4
      %v351 = vrot.slane %v340, 4
      %v352 = vrot.slane %v342, 4
      %v353 = vrot.slane %v344, 4
      %v354 = vrot.slane %v346, 4
      %v355 = vsel %vm224, %v347, %v348
      %vm356 = vcmask 842752
      %v357 = vsel %vm356, %v332, %v355
      %v358 = vsel %vm224, %v348, %v349
      %v359 = vsel %vm356, %v334, %v358
      %v360 = vsel %vm224, %v349, %v350
      %v361 = vsel %vm356, %v336, %v360
      %v362 = vsel %vm224, %v351, %v352
      %v363 = vsel %vm356, %v340, %v362
      %v364 = vsel %vm224, %v352, %v353
      %v365 = vsel %vm356, %v342, %v364
      %v366 = vsel %vm224, %v353, %v354
      %v367 = vsel %vm356, %v344, %v366
      %374 = vst [vmem:[#allocation2 + $0x90] sm:$0xff] %v357
      %375 = vst [vmem:[#allocation2 + $0x98] sm:$0xff] %v359
      %376 = vst [vmem:[#allocation2 + $0xa0] sm:$0xff] %v361
      %377 = vst [vmem:[#allocation2 + $0xa8] sm:$0xff] %v363
      %378 = vst [vmem:[#allocation2 + $0xb0] sm:$0xff] %v365
      %379 = vst [vmem:[#allocation2 + $0xb8] sm:$0xff] %v367
      %v380 = vld [vmem:[%s165] sm:$0xff]
      %v381 = vld [vmem:[%s165 + $0x8] sm:$0xff]
      %v382 = vld [vmem:[%s165 + $0x10] sm:$0xff]
      %v383 = vld [vmem:[%s165 + $0x18] sm:$0xf]
      %v384 = vld [vmem:[%s165 + $0x1c] sm:$0xff]
      %v385 = vld [vmem:[%s165 + $0x24] sm:$0xff]
      %v386 = vld [vmem:[%s165 + $0x2c] sm:$0xff]
      %v387 = vld [vmem:[%s165 + $0x34] sm:$0xf]
      %396 = vrot.lane.b32.xlu0 %v380, 102
      %v397 = vpop.permute.xlu0 %396
      %398 = vrot.lane.b32.xlu0 %v381, 102
      %v399 = vpop.permute.xlu0 %398
      %400 = vrot.lane.b32.xlu0 %v382, 102
      %v401 = vpop.permute.xlu0 %400
      %402 = vrot.lane.b32.xlu0 %v383, 102
      %v403 = vpop.permute.xlu0 %402
      %404 = vrot.lane.b32.xlu0 %v384, 102
      %v405 = vpop.permute.xlu0 %404
      %406 = vrot.lane.b32.xlu0 %v385, 102
      %v407 = vpop.permute.xlu0 %406
      %408 = vrot.lane.b32.xlu0 %v386, 102
      %v409 = vpop.permute.xlu0 %408
      %410 = vrot.lane.b32.xlu0 %v387, 102
      %v411 = vpop.permute.xlu0 %410
      %v412 = vrot.slane %v397, 4
      %v413 = vrot.slane %v399, 4
      %v414 = vrot.slane %v401, 4
      %v415 = vrot.slane %v403, 4
      %v416 = vrot.slane %v405, 4
      %v417 = vrot.slane %v407, 4
      %v418 = vrot.slane %v409, 4
      %v419 = vrot.slane %v411, 4
      %v420 = vsel %vm224, %v412, %v413
      %vm421 = vcmask 834560
      %v422 = vsel %vm421, %v397, %v420
      %v423 = vsel %vm224, %v413, %v414
      %v424 = vsel %vm421, %v399, %v423
      %v425 = vsel %vm224, %v414, %v415
      %v426 = vsel %vm421, %v401, %v425
      %v427 = vsel %vm224, %v416, %v417
      %v428 = vsel %vm421, %v405, %v427
      %v429 = vsel %vm224, %v417, %v418
      %v430 = vsel %vm421, %v407, %v429
      %v431 = vsel %vm224, %v418, %v419
      %v432 = vsel %vm421, %v409, %v431
      %439 = vst [vmem:[#allocation2 + $0xc0] sm:$0xff] %v422
      %440 = vst [vmem:[#allocation2 + $0xc8] sm:$0xff] %v424
      %441 = vst [vmem:[#allocation2 + $0xd0] sm:$0xff] %v426
      %442 = vst [vmem:[#allocation2 + $0xd8] sm:$0xff] %v428
      %443 = vst [vmem:[#allocation2 + $0xe0] sm:$0xff] %v430
      %444 = vst [vmem:[#allocation2 + $0xe8] sm:$0xff] %v432
      %v445 = vld [vmem:[%s165] sm:$0xff]
      %v446 = vld [vmem:[%s165 + $0x8] sm:$0xff]
      %v447 = vld [vmem:[%s165 + $0x10] sm:$0xff]
      %v448 = vld [vmem:[%s165 + $0x18] sm:$0xf]
      %v449 = vld [vmem:[%s165 + $0x1c] sm:$0xff]
      %v450 = vld [vmem:[%s165 + $0x24] sm:$0xff]
      %v451 = vld [vmem:[%s165 + $0x2c] sm:$0xff]
      %v452 = vld [vmem:[%s165 + $0x34] sm:$0xf]
      %461 = vrot.lane.b32.xlu0 %v445, 101
      %v462 = vpop.permute.xlu0 %461
      %463 = vrot.lane.b32.xlu0 %v446, 101
      %v464 = vpop.permute.xlu0 %463
      %465 = vrot.lane.b32.xlu0 %v447, 101
      %v466 = vpop.permute.xlu0 %465
      %467 = vrot.lane.b32.xlu0 %v448, 101
      %v468 = vpop.permute.xlu0 %467
      %469 = vrot.lane.b32.xlu0 %v449, 101
      %v470 = vpop.permute.xlu0 %469
      %471 = vrot.lane.b32.xlu0 %v450, 101
      %v472 = vpop.permute.xlu0 %471
      %473 = vrot.lane.b32.xlu0 %v451, 101
      %v474 = vpop.permute.xlu0 %473
      %475 = vrot.lane.b32.xlu0 %v452, 101
      %v476 = vpop.permute.xlu0 %475
      %v477 = vrot.slane %v462, 4
      %v478 = vrot.slane %v464, 4
      %v479 = vrot.slane %v466, 4
      %v480 = vrot.slane %v468, 4
      %v481 = vrot.slane %v470, 4
      %v482 = vrot.slane %v472, 4
      %v483 = vrot.slane %v474, 4
      %v484 = vrot.slane %v476, 4
      %v485 = vsel %vm224, %v477, %v478
      %vm486 = vcmask 826368
      %v487 = vsel %vm486, %v462, %v485
      %v488 = vsel %vm224, %v478, %v479
      %v489 = vsel %vm486, %v464, %v488
      %v490 = vsel %vm224, %v479, %v480
      %v491 = vsel %vm486, %v466, %v490
      %v492 = vsel %vm224, %v481, %v482
      %v493 = vsel %vm486, %v470, %v492
      %v494 = vsel %vm224, %v482, %v483
      %v495 = vsel %vm486, %v472, %v494
      %v496 = vsel %vm224, %v483, %v484
      %v497 = vsel %vm486, %v474, %v496
      %504 = vst [vmem:[#allocation2 + $0xf0] sm:$0xff] %v487
      %505 = vst [vmem:[#allocation2 + $0xf8] sm:$0xff] %v489
      %506 = vst [vmem:[#allocation2 + $0x100] sm:$0xff] %v491
      %507 = vst [vmem:[#allocation2 + $0x108] sm:$0xff] %v493
      %508 = vst [vmem:[#allocation2 + $0x110] sm:$0xff] %v495
      %509 = vst [vmem:[#allocation2 + $0x118] sm:$0xff] %v497
      %v510 = vld [vmem:[%s165] sm:$0xff]
      %v511 = vld [vmem:[%s165 + $0x8] sm:$0xff]
      %v512 = vld [vmem:[%s165 + $0x10] sm:$0xff]
      %v513 = vld [vmem:[%s165 + $0x18] sm:$0xf]
      %v514 = vld [vmem:[%s165 + $0x1c] sm:$0xff]
      %v515 = vld [vmem:[%s165 + $0x24] sm:$0xff]
      %v516 = vld [vmem:[%s165 + $0x2c] sm:$0xff]
      %v517 = vld [vmem:[%s165 + $0x34] sm:$0xf]
      %526 = vrot.lane.b32.xlu0 %v510, 78
      %v527 = vpop.permute.xlu0 %526
      %528 = vrot.lane.b32.xlu0 %v511, 78
      %v529 = vpop.permute.xlu0 %528
      %530 = vrot.lane.b32.xlu0 %v512, 78
      %v531 = vpop.permute.xlu0 %530
      %532 = vrot.lane.b32.xlu0 %v513, 78
      %v533 = vpop.permute.xlu0 %532
      %534 = vrot.lane.b32.xlu0 %v514, 78
      %v535 = vpop.permute.xlu0 %534
      %536 = vrot.lane.b32.xlu0 %v515, 78
      %v537 = vpop.permute.xlu0 %536
      %538 = vrot.lane.b32.xlu0 %v516, 78
      %v539 = vpop.permute.xlu0 %538
      %540 = vrot.lane.b32.xlu0 %v517, 78
      %v541 = vpop.permute.xlu0 %540
      %v542 = vrot.slane %v527, 4
      %v543 = vrot.slane %v529, 4
      %v544 = vrot.slane %v531, 4
      %v545 = vrot.slane %v533, 4
      %v546 = vrot.slane %v535, 4
      %v547 = vrot.slane %v537, 4
      %v548 = vrot.slane %v539, 4
      %v549 = vrot.slane %v541, 4
      %v550 = vsel %vm224, %v542, %v543
      %vm551 = vcmask 637952
      %v552 = vsel %vm551, %v527, %v550
      %v553 = vsel %vm224, %v543, %v544
      %v554 = vsel %vm551, %v529, %v553
      %v555 = vsel %vm224, %v544, %v545
      %v556 = vsel %vm551, %v531, %v555
      %v557 = vsel %vm224, %v546, %v547
      %v558 = vsel %vm551, %v535, %v557
      %v559 = vsel %vm224, %v547, %v548
      %v560 = vsel %vm551, %v537, %v559
      %v561 = vsel %vm224, %v548, %v549
      %v562 = vsel %vm551, %v539, %v561
      %569 = vst [vmem:[#allocation2 + $0x120] sm:$0xff] %v552
      %570 = vst [vmem:[#allocation2 + $0x128] sm:$0xff] %v554
      %571 = vst [vmem:[#allocation2 + $0x130] sm:$0xff] %v556
      %572 = vst [vmem:[#allocation2 + $0x138] sm:$0xff] %v558
      %573 = vst [vmem:[#allocation2 + $0x140] sm:$0xff] %v560
      %574 = vst [vmem:[#allocation2 + $0x148] sm:$0xff] %v562
      %v575 = vld [vmem:[%s165] sm:$0xff]
      %v576 = vld [vmem:[%s165 + $0x8] sm:$0xff]
      %v577 = vld [vmem:[%s165 + $0x10] sm:$0xff]
      %v578 = vld [vmem:[%s165 + $0x18] sm:$0xf]
      %v579 = vld [vmem:[%s165 + $0x1c] sm:$0xff]
      %v580 = vld [vmem:[%s165 + $0x24] sm:$0xff]
      %v581 = vld [vmem:[%s165 + $0x2c] sm:$0xff]
      %v582 = vld [vmem:[%s165 + $0x34] sm:$0xf]
      %591 = vrot.lane.b32.xlu0 %v575, 77
      %v592 = vpop.permute.xlu0 %591
      %593 = vrot.lane.b32.xlu0 %v576, 77
      %v594 = vpop.permute.xlu0 %593
      %595 = vrot.lane.b32.xlu0 %v577, 77
      %v596 = vpop.permute.xlu0 %595
      %597 = vrot.lane.b32.xlu0 %v578, 77
      %v598 = vpop.permute.xlu0 %597
      %599 = vrot.lane.b32.xlu0 %v579, 77
      %v600 = vpop.permute.xlu0 %599
      %601 = vrot.lane.b32.xlu0 %v580, 77
      %v602 = vpop.permute.xlu0 %601
      %603 = vrot.lane.b32.xlu0 %v581, 77
      %v604 = vpop.permute.xlu0 %603
      %605 = vrot.lane.b32.xlu0 %v582, 77
      %v606 = vpop.permute.xlu0 %605
      %v607 = vrot.slane %v592, 4
      %v608 = vrot.slane %v594, 4
      %v609 = vrot.slane %v596, 4
      %v610 = vrot.slane %v598, 4
      %v611 = vrot.slane %v600, 4
      %v612 = vrot.slane %v602, 4
      %v613 = vrot.slane %v604, 4
      %v614 = vrot.slane %v606, 4
      %v615 = vsel %vm224, %v607, %v608
      %vm616 = vcmask 629760
      %v617 = vsel %vm616, %v592, %v615
      %v618 = vsel %vm224, %v608, %v609
      %v619 = vsel %vm616, %v594, %v618
      %v620 = vsel %vm224, %v609, %v610
      %v621 = vsel %vm616, %v596, %v620
      %v622 = vsel %vm224, %v611, %v612
      %v623 = vsel %vm616, %v600, %v622
      %v624 = vsel %vm224, %v612, %v613
      %v625 = vsel %vm616, %v602, %v624
      %v626 = vsel %vm224, %v613, %v614
      %v627 = vsel %vm616, %v604, %v626
      %634 = vst [vmem:[#allocation2 + $0x150] sm:$0xff] %v617
      %635 = vst [vmem:[#allocation2 + $0x158] sm:$0xff] %v619
      %636 = vst [vmem:[#allocation2 + $0x160] sm:$0xff] %v621
      %637 = vst [vmem:[#allocation2 + $0x168] sm:$0xff] %v623
      %638 = vst [vmem:[#allocation2 + $0x170] sm:$0xff] %v625
      %639 = vst [vmem:[#allocation2 + $0x178] sm:$0xff] %v627
      %v640 = vld [vmem:[%s165] sm:$0xff]
      %v641 = vld [vmem:[%s165 + $0x8] sm:$0xff]
      %v642 = vld [vmem:[%s165 + $0x10] sm:$0xff]
      %v643 = vld [vmem:[%s165 + $0x18] sm:$0xf]
      %v644 = vld [vmem:[%s165 + $0x1c] sm:$0xff]
      %v645 = vld [vmem:[%s165 + $0x24] sm:$0xff]
      %v646 = vld [vmem:[%s165 + $0x2c] sm:$0xff]
      %v647 = vld [vmem:[%s165 + $0x34] sm:$0xf]
      %656 = vrot.lane.b32.xlu0 %v640, 76
      %v657 = vpop.permute.xlu0 %656
      %658 = vrot.lane.b32.xlu0 %v641, 76
      %v659 = vpop.permute.xlu0 %658
      %660 = vrot.lane.b32.xlu0 %v642, 76
      %v661 = vpop.permute.xlu0 %660
      %662 = vrot.lane.b32.xlu0 %v643, 76
      %v663 = vpop.permute.xlu0 %662
      %664 = vrot.lane.b32.xlu0 %v644, 76
      %v665 = vpop.permute.xlu0 %664
      %666 = vrot.lane.b32.xlu0 %v645, 76
      %v667 = vpop.permute.xlu0 %666
      %668 = vrot.lane.b32.xlu0 %v646, 76
      %v669 = vpop.permute.xlu0 %668
      %670 = vrot.lane.b32.xlu0 %v647, 76
      %v671 = vpop.permute.xlu0 %670
      %v672 = vrot.slane %v657, 4
      %v673 = vrot.slane %v659, 4
      %v674 = vrot.slane %v661, 4
      %v675 = vrot.slane %v663, 4
      %v676 = vrot.slane %v665, 4
      %v677 = vrot.slane %v667, 4
      %v678 = vrot.slane %v669, 4
      %v679 = vrot.slane %v671, 4
      %v680 = vsel %vm224, %v672, %v673
      %vm681 = vcmask 621568
      %v682 = vsel %vm681, %v657, %v680
      %v683 = vsel %vm224, %v673, %v674
      %v684 = vsel %vm681, %v659, %v683
      %v685 = vsel %vm224, %v674, %v675
      %v686 = vsel %vm681, %v661, %v685
      %v687 = vsel %vm224, %v676, %v677
      %v688 = vsel %vm681, %v665, %v687
      %v689 = vsel %vm224, %v677, %v678
      %v690 = vsel %vm681, %v667, %v689
      %v691 = vsel %vm224, %v678, %v679
      %v692 = vsel %vm681, %v669, %v691
      %699 = vst [vmem:[#allocation2 + $0x180] sm:$0xff] %v682
      %700 = vst [vmem:[#allocation2 + $0x188] sm:$0xff] %v684
      %701 = vst [vmem:[#allocation2 + $0x190] sm:$0xff] %v686
      %702 = vst [vmem:[#allocation2 + $0x198] sm:$0xff] %v688
      %703 = vst [vmem:[#allocation2 + $0x1a0] sm:$0xff] %v690
      %704 = vst [vmem:[#allocation2 + $0x1a8] sm:$0xff] %v692
      %v705 = vld [vmem:[%s1] sm:$0xff]
      %v706 = vld [vmem:[#allocation2] sm:$0xff]
      %v707 = vld [vmem:[#allocation2 + $0x8] sm:$0xff]
      %v708 = vld [vmem:[#allocation2 + $0x10] sm:$0xff]
      %v709 = vld [vmem:[#allocation2 + $0x18] sm:$0xff]
      %v710 = vld [vmem:[#allocation2 + $0x20] sm:$0xff]
      %v711 = vld [vmem:[#allocation2 + $0x28] sm:$0xff]
      %v712 = vld [vmem:[#allocation2 + $0x30] sm:$0xff]
      %v713 = vld [vmem:[#allocation2 + $0x38] sm:$0xff]
      %v714 = vld [vmem:[#allocation2 + $0x40] sm:$0xff]
      %v715 = vld [vmem:[#allocation2 + $0x48] sm:$0xff]
      %v716 = vld [vmem:[#allocation2 + $0x50] sm:$0xff]
      %v717 = vld [vmem:[#allocation2 + $0x58] sm:$0xff]
      %v718 = vld [vmem:[#allocation2 + $0x60] sm:$0xff]
      %v719 = vld [vmem:[#allocation2 + $0x68] sm:$0xff]
      %v720 = vld [vmem:[#allocation2 + $0x70] sm:$0xff]
      %v721 = vld [vmem:[#allocation2 + $0x78] sm:$0xff]
      %v722 = vld [vmem:[#allocation2 + $0x80] sm:$0xff]
      %v723 = vld [vmem:[#allocation2 + $0x88] sm:$0xff]
      %v724 = vld [vmem:[#allocation2 + $0x90] sm:$0xff]
      %v725 = vld [vmem:[#allocation2 + $0x98] sm:$0xff]
      %v726 = vld [vmem:[#allocation2 + $0xa0] sm:$0xff]
      %v727 = vld [vmem:[#allocation2 + $0xa8] sm:$0xff]
      %v728 = vld [vmem:[#allocation2 + $0xb0] sm:$0xff]
      %v729 = vld [vmem:[#allocation2 + $0xb8] sm:$0xff]
      %v730 = vld [vmem:[#allocation2 + $0xc0] sm:$0xff]
      %v731 = vld [vmem:[#allocation2 + $0xc8] sm:$0xff]
      %v732 = vld [vmem:[#allocation2 + $0xd0] sm:$0xff]
      %v733 = vld [vmem:[#allocation2 + $0xd8] sm:$0xff]
      %v734 = vld [vmem:[#allocation2 + $0xe0] sm:$0xff]
      %v735 = vld [vmem:[#allocation2 + $0xe8] sm:$0xff]
      %v736 = vld [vmem:[#allocation2 + $0xf0] sm:$0xff]
      %v737 = vld [vmem:[#allocation2 + $0xf8] sm:$0xff]
      %v738 = vld [vmem:[#allocation2 + $0x100] sm:$0xff]
      %v739 = vld [vmem:[#allocation2 + $0x108] sm:$0xff]
      %v740 = vld [vmem:[#allocation2 + $0x110] sm:$0xff]
      %v741 = vld [vmem:[#allocation2 + $0x118] sm:$0xff]
      %v742 = vld [vmem:[#allocation2 + $0x120] sm:$0xff]
      %v743 = vld [vmem:[#allocation2 + $0x128] sm:$0xff]
      %v744 = vld [vmem:[#allocation2 + $0x130] sm:$0xff]
      %v745 = vld [vmem:[#allocation2 + $0x138] sm:$0xff]
      %v746 = vld [vmem:[#allocation2 + $0x140] sm:$0xff]
      %v747 = vld [vmem:[#allocation2 + $0x148] sm:$0xff]
      %v748 = vld [vmem:[#allocation2 + $0x150] sm:$0xff]
      %v749 = vld [vmem:[#allocation2 + $0x158] sm:$0xff]
      %v750 = vld [vmem:[#allocation2 + $0x160] sm:$0xff]
      %v751 = vld [vmem:[#allocation2 + $0x168] sm:$0xff]
      %v752 = vld [vmem:[#allocation2 + $0x170] sm:$0xff]
      %v753 = vld [vmem:[#allocation2 + $0x178] sm:$0xff]
      %v754 = vld [vmem:[#allocation2 + $0x180] sm:$0xff]
      %v755 = vld [vmem:[#allocation2 + $0x188] sm:$0xff]
      %v756 = vld [vmem:[#allocation2 + $0x190] sm:$0xff]
      %v757 = vld [vmem:[#allocation2 + $0x198] sm:$0xff]
      %v758 = vld [vmem:[#allocation2 + $0x1a0] sm:$0xff]
      %v759 = vld [vmem:[#allocation2 + $0x1a8] sm:$0xff]
      %v760 = vld [vmem:[%s2] sm:$0xff]
      %762 = vset.pattern.permute.xlu0 0
      %763 = vperm.xlu0 %762, %v760
      %v764 = vpop.permute.xlu0 %763
      %v767 = vunpack.c.l.b16 %v705
      %v768 = vunpack.c.h.b16 %v705
      %v769 = vpack.c.b16 %v767, %v767
      %v770 = vpack.c.b16 %v768, %v768
      %v826 = vunpack.c.l.b16 %v706
      %v827 = vunpack.c.h.b16 %v706
      %v828 = vunpack.c.l.b16 %v707
      %v829 = vunpack.c.h.b16 %v707
      %v830 = vunpack.c.l.b16 %v708
      %v831 = vunpack.c.h.b16 %v708
      %v832 = vunpack.c.l.b16 %v709
      %v833 = vunpack.c.h.b16 %v709
      %v834 = vunpack.c.l.b16 %v710
      %v835 = vunpack.c.h.b16 %v710
      %v836 = vunpack.c.l.b16 %v711
      %v837 = vunpack.c.h.b16 %v711
      %v838 = vunpack.c.l.b16 %v712
      %v839 = vunpack.c.h.b16 %v712
      %v840 = vunpack.c.l.b16 %v713
      %v841 = vunpack.c.h.b16 %v713
      %v842 = vunpack.c.l.b16 %v714
      %v843 = vunpack.c.h.b16 %v714
      %v844 = vunpack.c.l.b16 %v715
      %v845 = vunpack.c.h.b16 %v715
      %v846 = vunpack.c.l.b16 %v716
      %v847 = vunpack.c.h.b16 %v716
      %v848 = vunpack.c.l.b16 %v717
      %v849 = vunpack.c.h.b16 %v717
      %v850 = vunpack.c.l.b16 %v718
      %v851 = vunpack.c.h.b16 %v718
      %v852 = vunpack.c.l.b16 %v719
      %v853 = vunpack.c.h.b16 %v719
      %v854 = vunpack.c.l.b16 %v720
      %v855 = vunpack.c.h.b16 %v720
      %v856 = vunpack.c.l.b16 %v721
      %v857 = vunpack.c.h.b16 %v721
      %v858 = vunpack.c.l.b16 %v722
      %v859 = vunpack.c.h.b16 %v722
      %v860 = vunpack.c.l.b16 %v723
      %v861 = vunpack.c.h.b16 %v723
      %v862 = vunpack.c.l.b16 %v724
      %v863 = vunpack.c.h.b16 %v724
      %v864 = vunpack.c.l.b16 %v725
      %v865 = vunpack.c.h.b16 %v725
      %v866 = vunpack.c.l.b16 %v726
      %v867 = vunpack.c.h.b16 %v726
      %v868 = vunpack.c.l.b16 %v727
      %v869 = vunpack.c.h.b16 %v727
      %v870 = vunpack.c.l.b16 %v728
      %v871 = vunpack.c.h.b16 %v728
      %v872 = vunpack.c.l.b16 %v729
      %v873 = vunpack.c.h.b16 %v729
      %v874 = vunpack.c.l.b16 %v730
      %v875 = vunpack.c.h.b16 %v730
      %v876 = vunpack.c.l.b16 %v731
      %v877 = vunpack.c.h.b16 %v731
      %v878 = vunpack.c.l.b16 %v732
      %v879 = vunpack.c.h.b16 %v732
      %v880 = vunpack.c.l.b16 %v733
      %v881 = vunpack.c.h.b16 %v733
      %v882 = vunpack.c.l.b16 %v734
      %v883 = vunpack.c.h.b16 %v734
      %v884 = vunpack.c.l.b16 %v735
      %v885 = vunpack.c.h.b16 %v735
      %v886 = vunpack.c.l.b16 %v736
      %v887 = vunpack.c.h.b16 %v736
      %v888 = vunpack.c.l.b16 %v737
      %v889 = vunpack.c.h.b16 %v737
      %v890 = vunpack.c.l.b16 %v738
      %v891 = vunpack.c.h.b16 %v738
      %v892 = vunpack.c.l.b16 %v739
      %v893 = vunpack.c.h.b16 %v739
      %v894 = vunpack.c.l.b16 %v740
      %v895 = vunpack.c.h.b16 %v740
      %v896 = vunpack.c.l.b16 %v741
      %v897 = vunpack.c.h.b16 %v741
      %v898 = vunpack.c.l.b16 %v742
      %v899 = vunpack.c.h.b16 %v742
      %v900 = vunpack.c.l.b16 %v743
      %v901 = vunpack.c.h.b16 %v743
      %v902 = vunpack.c.l.b16 %v744
      %v903 = vunpack.c.h.b16 %v744
      %v904 = vunpack.c.l.b16 %v745
      %v905 = vunpack.c.h.b16 %v745
      %v906 = vunpack.c.l.b16 %v746
      %v907 = vunpack.c.h.b16 %v746
      %v908 = vunpack.c.l.b16 %v747
      %v909 = vunpack.c.h.b16 %v747
      %v910 = vunpack.c.l.b16 %v748
      %v911 = vunpack.c.h.b16 %v748
      %v912 = vunpack.c.l.b16 %v749
      %v913 = vunpack.c.h.b16 %v749
      %v914 = vunpack.c.l.b16 %v750
      %v915 = vunpack.c.h.b16 %v750
      %v916 = vunpack.c.l.b16 %v751
      %v917 = vunpack.c.h.b16 %v751
      %v918 = vunpack.c.l.b16 %v752
      %v919 = vunpack.c.h.b16 %v752
      %v920 = vunpack.c.l.b16 %v753
      %v921 = vunpack.c.h.b16 %v753
      %v922 = vunpack.c.l.b16 %v754
      %v923 = vunpack.c.h.b16 %v754
      %v924 = vunpack.c.l.b16 %v755
      %v925 = vunpack.c.h.b16 %v755
      %v926 = vunpack.c.l.b16 %v756
      %v927 = vunpack.c.h.b16 %v756
      %v928 = vunpack.c.l.b16 %v757
      %v929 = vunpack.c.h.b16 %v757
      %v930 = vunpack.c.l.b16 %v758
      %v931 = vunpack.c.h.b16 %v758
      %v932 = vunpack.c.l.b16 %v759
      %v933 = vunpack.c.h.b16 %v759
      %v934 = vpack.c.b16 %v832, %v826
      %v935 = vpack.c.b16 %v833, %v827
      %v936 = vpack.c.b16 %v834, %v828
      %v937 = vpack.c.b16 %v835, %v829
      %v938 = vpack.c.b16 %v836, %v830
      %v939 = vpack.c.b16 %v837, %v831
      %v940 = vpack.c.b16 %v844, %v838
      %v941 = vpack.c.b16 %v845, %v839
      %v942 = vpack.c.b16 %v846, %v840
      %v943 = vpack.c.b16 %v847, %v841
      %v944 = vpack.c.b16 %v848, %v842
      %v945 = vpack.c.b16 %v849, %v843
      %v946 = vpack.c.b16 %v856, %v850
      %v947 = vpack.c.b16 %v857, %v851
      %v948 = vpack.c.b16 %v858, %v852
      %v949 = vpack.c.b16 %v859, %v853
      %v950 = vpack.c.b16 %v860, %v854
      %v951 = vpack.c.b16 %v861, %v855
      %v952 = vpack.c.b16 %v868, %v862
      %v953 = vpack.c.b16 %v869, %v863
      %v954 = vpack.c.b16 %v870, %v864
      %v955 = vpack.c.b16 %v871, %v865
      %v956 = vpack.c.b16 %v872, %v866
      %v957 = vpack.c.b16 %v873, %v867
      %v958 = vpack.c.b16 %v880, %v874
      %v959 = vpack.c.b16 %v881, %v875
      %v960 = vpack.c.b16 %v882, %v876
      %v961 = vpack.c.b16 %v883, %v877
      %v962 = vpack.c.b16 %v884, %v878
      %v963 = vpack.c.b16 %v885, %v879
      %v964 = vpack.c.b16 %v892, %v886
      %v965 = vpack.c.b16 %v893, %v887
      %v966 = vpack.c.b16 %v894, %v888
      %v967 = vpack.c.b16 %v895, %v889
      %v968 = vpack.c.b16 %v896, %v890
      %v969 = vpack.c.b16 %v897, %v891
      %v970 = vpack.c.b16 %v904, %v898
      %v971 = vpack.c.b16 %v905, %v899
      %v972 = vpack.c.b16 %v906, %v900
      %v973 = vpack.c.b16 %v907, %v901
      %v974 = vpack.c.b16 %v908, %v902
      %v975 = vpack.c.b16 %v909, %v903
      %v976 = vpack.c.b16 %v916, %v910
      %v977 = vpack.c.b16 %v917, %v911
      %v978 = vpack.c.b16 %v918, %v912
      %v979 = vpack.c.b16 %v919, %v913
      %v980 = vpack.c.b16 %v920, %v914
      %v981 = vpack.c.b16 %v921, %v915
      %v982 = vpack.c.b16 %v928, %v922
      %v983 = vpack.c.b16 %v929, %v923
      %v984 = vpack.c.b16 %v930, %v924
      %v985 = vpack.c.b16 %v931, %v925
      %v986 = vpack.c.b16 %v932, %v926
      %v987 = vpack.c.b16 %v933, %v927
      %vm1042 = vcmask 130048
      %v1044 = vsel %vm1042, %v770, 0
      %1046 = vmatprep.subr.bf16.mxu0 %v977
      %1047 = vmatpush1.bf16.msra.mxu0 %v976
      %1048 = vmatprep.subr.bf16.mxu0 %v971
      %1049 = vmatpush1.bf16.msra.mxu0 %v970
      %1050 = vmatprep.subr.bf16.mxu0 %v965
      %1051 = vmatpush1.bf16.msra.mxu0 %v964
      %1052 = vmatprep.subr.bf16.mxu0 %v959
      %1053 = vmatpush1.bf16.msra.mxu0 %v958
      %1054 = vmatprep.subr.bf16.mxu0 %v953
      %1055 = vmatpush1.bf16.msra.mxu0 %v952
      %1056 = vmatprep.subr.bf16.mxu0 %v947
      %1057 = vmatpush1.bf16.msra.mxu0 %v946
      %1058 = vmatprep.subr.bf16.mxu0 %v941
      %1059 = vmatpush1.bf16.msra.mxu0 %v940
      %1060 = vmatprep.subr.bf16.mxu0 %v935
      %1061 = vmatpush1.bf16.msra.mxu0 %v934
      %1062 = vmatprep.subr.bf16.mxu0 0
      %1063 = vmatpush2.bf16.msra.mxu0 0
      %1064 = vmatprep.subr.bf16.mxu0 0
      %1065 = vmatpush2.bf16.msra.mxu0 0
      %1066 = vmatprep.subr.bf16.mxu0 0
      %1067 = vmatpush2.bf16.msra.mxu0 0
      %1068 = vmatprep.subr.bf16.mxu0 0
      %1069 = vmatpush2.bf16.msra.mxu0 0
      %1070 = vmatprep.subr.bf16.mxu0 0
      %1071 = vmatpush2.bf16.msra.mxu0 0
      %1072 = vmatprep.subr.bf16.mxu0 0
      %1073 = vmatpush2.bf16.msra.mxu0 0
      %1074 = vmatprep.subr.bf16.mxu0 0
      %1075 = vmatpush2.bf16.msra.mxu0 0
      %1076 = vmatprep.subr.bf16.mxu0 %v983
      %1077 = vmatpush2.bf16.msra.mxu0 %v982
      %1078 = vmatprep.mubr.bf16.mxu0 %v1044
      %1079 = vmatmul.mubr.bf16.gmra.mxu0 %v769
      %v1080 = vpop.f32.mrf.mxu0
      %v1081 = vadd.f32 %v764, %v1080
      %v1082 = vpop.f32.mrf.mxu0
      %v1083 = vadd.f32 %v764, %v1082
      %v1084 = vpop.f32.mrf.mxu0
      %v1085 = vpop.f32.mrf.mxu0
      %1086 = vdwg.mxu0
      %1087 = vmatprep.subr.bf16.mxu0 %v979
      %1088 = vmatpush1.bf16.msra.mxu0 %v978
      %1089 = vmatprep.subr.bf16.mxu0 %v973
      %1090 = vmatpush1.bf16.msra.mxu0 %v972
      %1091 = vmatprep.subr.bf16.mxu0 %v967
      %1092 = vmatpush1.bf16.msra.mxu0 %v966
      %1093 = vmatprep.subr.bf16.mxu0 %v961
      %1094 = vmatpush1.bf16.msra.mxu0 %v960
      %1095 = vmatprep.subr.bf16.mxu0 %v955
      %1096 = vmatpush1.bf16.msra.mxu0 %v954
      %1097 = vmatprep.subr.bf16.mxu0 %v949
      %1098 = vmatpush1.bf16.msra.mxu0 %v948
      %1099 = vmatprep.subr.bf16.mxu0 %v943
      %1100 = vmatpush1.bf16.msra.mxu0 %v942
      %1101 = vmatprep.subr.bf16.mxu0 %v937
      %1102 = vmatpush1.bf16.msra.mxu0 %v936
      %1103 = vmatprep.subr.bf16.mxu0 0
      %1104 = vmatpush2.bf16.msra.mxu0 0
      %1105 = vmatprep.subr.bf16.mxu0 0
      %1106 = vmatpush2.bf16.msra.mxu0 0
      %1107 = vmatprep.subr.bf16.mxu0 0
      %1108 = vmatpush2.bf16.msra.mxu0 0
      %1109 = vmatprep.subr.bf16.mxu0 0
      %1110 = vmatpush2.bf16.msra.mxu0 0
      %1111 = vmatprep.subr.bf16.mxu0 0
      %1112 = vmatpush2.bf16.msra.mxu0 0
      %1113 = vmatprep.subr.bf16.mxu0 0
      %1114 = vmatpush2.bf16.msra.mxu0 0
      %1115 = vmatprep.subr.bf16.mxu0 0
      %1116 = vmatpush2.bf16.msra.mxu0 0
      %1117 = vmatprep.subr.bf16.mxu0 %v985
      %1118 = vmatpush2.bf16.msra.mxu0 %v984
      %1119 = vmatprep.mubr.bf16.mxu0 %v1044
      %1120 = vmatmul.mubr.bf16.gmra.mxu0 %v769
      %v1121 = vpop.f32.mrf.mxu0
      %v1122 = vadd.f32 %v764, %v1121
      %v1123 = vpop.f32.mrf.mxu0
      %v1124 = vadd.f32 %v764, %v1123
      %v1125 = vpop.f32.mrf.mxu0
      %v1126 = vpop.f32.mrf.mxu0
      %1127 = vdwg.mxu0
      %1128 = vmatprep.subr.bf16.mxu0 %v981
      %1129 = vmatpush1.bf16.msra.mxu0 %v980
      %1130 = vmatprep.subr.bf16.mxu0 %v975
      %1131 = vmatpush1.bf16.msra.mxu0 %v974
      %1132 = vmatprep.subr.bf16.mxu0 %v969
      %1133 = vmatpush1.bf16.msra.mxu0 %v968
      %1134 = vmatprep.subr.bf16.mxu0 %v963
      %1135 = vmatpush1.bf16.msra.mxu0 %v962
      %1136 = vmatprep.subr.bf16.mxu0 %v957
      %1137 = vmatpush1.bf16.msra.mxu0 %v956
      %1138 = vmatprep.subr.bf16.mxu0 %v951
      %1139 = vmatpush1.bf16.msra.mxu0 %v950
      %1140 = vmatprep.subr.bf16.mxu0 %v945
      %1141 = vmatpush1.bf16.msra.mxu0 %v944
      %1142 = vmatprep.subr.bf16.mxu0 %v939
      %1143 = vmatpush1.bf16.msra.mxu0 %v938
      %1144 = vmatprep.subr.bf16.mxu0 0
      %1145 = vmatpush2.bf16.msra.mxu0 0
      %1146 = vmatprep.subr.bf16.mxu0 0
      %1147 = vmatpush2.bf16.msra.mxu0 0
      %1148 = vmatprep.subr.bf16.mxu0 0
      %1149 = vmatpush2.bf16.msra.mxu0 0
      %1150 = vmatprep.subr.bf16.mxu0 0
      %1151 = vmatpush2.bf16.msra.mxu0 0
      %1152 = vmatprep.subr.bf16.mxu0 0
      %1153 = vmatpush2.bf16.msra.mxu0 0
      %1154 = vmatprep.subr.bf16.mxu0 0
      %1155 = vmatpush2.bf16.msra.mxu0 0
      %1156 = vmatprep.subr.bf16.mxu0 0
      %1157 = vmatpush2.bf16.msra.mxu0 0
      %1158 = vmatprep.subr.bf16.mxu0 %v987
      %1159 = vmatpush2.bf16.msra.mxu0 %v986
      %1160 = vmatprep.mubr.bf16.mxu0 %v1044
      %1161 = vmatmul.mubr.bf16.gmra.mxu0 %v769
      %v1162 = vpop.f32.mrf.mxu0
      %v1163 = vadd.f32 %v764, %v1162
      %v1164 = vpop.f32.mrf.mxu0
      %v1165 = vadd.f32 %v764, %v1164
      %v1166 = vpop.f32.mrf.mxu0
      %v1167 = vpop.f32.mrf.mxu0
      %1168 = vdwg.mxu0
      %v1169 = vmax.f32 %v1081, 0.0
      %v1170 = vmax.f32 %v1083, 0.0
      %v1171 = vmax.f32 %v1122, 0.0
      %v1172 = vmax.f32 %v1124, 0.0
      %v1173 = vmax.f32 %v1163, 0.0
      %v1174 = vmax.f32 %v1165, 0.0
      %1181 = vrot.lane.b32.xlu0 %v1169, 127
      %v1182 = vpop.permute.xlu0 %1181
      %1183 = vrot.lane.b32.xlu0 %v1170, 127
      %v1184 = vpop.permute.xlu0 %1183
      %1185 = vrot.lane.b32.xlu0 %v1171, 127
      %v1186 = vpop.permute.xlu0 %1185
      %1187 = vrot.lane.b32.xlu0 %v1172, 127
      %v1188 = vpop.permute.xlu0 %1187
      %1189 = vrot.lane.b32.xlu0 %v1173, 127
      %v1190 = vpop.permute.xlu0 %1189
      %1191 = vrot.lane.b32.xlu0 %v1174, 127
      %v1192 = vpop.permute.xlu0 %1191
      %vm1193 = vcmask 1039360
      %v1194 = vsel %vm1193, %v1182, %v1184
      %v1195 = vsel %vm1193, %v1184, %v1186
      %v1196 = vsel %vm1193, %v1186, %v1188
      %v1197 = vsel %vm1193, %v1188, %v1190
      %v1198 = vsel %vm1193, %v1190, %v1192
      %v1204 = vmax.f32 %v1169, %v1194
      %v1205 = vmax.f32 %v1170, %v1195
      %v1206 = vmax.f32 %v1171, %v1196
      %v1207 = vmax.f32 %v1172, %v1197
      %v1208 = vmax.f32 %v1173, %v1198
      %1209 = vrot.lane.b32.xlu0 %v1169, 103
      %v1210 = vpop.permute.xlu0 %1209
      %1211 = vrot.lane.b32.xlu0 %v1170, 103
      %v1212 = vpop.permute.xlu0 %1211
      %1213 = vrot.lane.b32.xlu0 %v1171, 103
      %v1214 = vpop.permute.xlu0 %1213
      %1215 = vrot.lane.b32.xlu0 %v1172, 103
      %v1216 = vpop.permute.xlu0 %1215
      %1217 = vrot.lane.b32.xlu0 %v1173, 103
      %v1218 = vpop.permute.xlu0 %1217
      %1219 = vrot.lane.b32.xlu0 %v1174, 103
      %v1220 = vpop.permute.xlu0 %1219
      %vm1221 = vcmask 842752
      %v1222 = vsel %vm1221, %v1210, %v1212
      %v1223 = vsel %vm1221, %v1212, %v1214
      %v1224 = vsel %vm1221, %v1214, %v1216
      %v1225 = vsel %vm1221, %v1216, %v1218
      %v1226 = vsel %vm1221, %v1218, %v1220
      %v1232 = vmax.f32 %v1204, %v1222
      %v1233 = vmax.f32 %v1205, %v1223
      %v1234 = vmax.f32 %v1206, %v1224
      %v1235 = vmax.f32 %v1207, %v1225
      %v1236 = vmax.f32 %v1208, %v1226
      %1237 = vrot.lane.b32.xlu0 %v1169, 102
      %v1238 = vpop.permute.xlu0 %1237
      %1239 = vrot.lane.b32.xlu0 %v1170, 102
      %v1240 = vpop.permute.xlu0 %1239
      %1241 = vrot.lane.b32.xlu0 %v1171, 102
      %v1242 = vpop.permute.xlu0 %1241
      %1243 = vrot.lane.b32.xlu0 %v1172, 102
      %v1244 = vpop.permute.xlu0 %1243
      %1245 = vrot.lane.b32.xlu0 %v1173, 102
      %v1246 = vpop.permute.xlu0 %1245
      %1247 = vrot.lane.b32.xlu0 %v1174, 102
      %v1248 = vpop.permute.xlu0 %1247
      %vm1249 = vcmask 834560
      %v1250 = vsel %vm1249, %v1238, %v1240
      %v1251 = vsel %vm1249, %v1240, %v1242
      %v1252 = vsel %vm1249, %v1242, %v1244
      %v1253 = vsel %vm1249, %v1244, %v1246
      %v1254 = vsel %vm1249, %v1246, %v1248
      %v1260 = vmax.f32 %v1232, %v1250
      %v1261 = vmax.f32 %v1233, %v1251
      %v1262 = vmax.f32 %v1234, %v1252
      %v1263 = vmax.f32 %v1235, %v1253
      %v1264 = vmax.f32 %v1236, %v1254
      %v1265 = vpack.c.bf16 %v1260, %v1260
      %v1266 = vpack.c.bf16 %v1261, %v1261
      %v1267 = vpack.c.bf16 %v1262, %v1262
      %v1268 = vpack.c.bf16 %v1263, %v1263
      %v1269 = vpack.c.bf16 %v1264, %v1264
      %v1275 = vunpack.c.l.b16 %v1265
      %v1276 = vunpack.c.l.b16 %v1266
      %v1277 = vunpack.c.l.b16 %v1267
      %v1278 = vunpack.c.l.b16 %v1268
      %v1279 = vunpack.c.l.b16 %v1269
      %v1280 = vpack.c.b16 %v1276, %v1275
      %v1281 = vpack.c.b16 %v1278, %v1277
      %v1282 = vpack.c.b16 %v1279, %v1279
      %1286 = vst [vmem:[%s170] sm:$0xff] %v1280
      %1287 = vst [vmem:[%s170 + $0x8] sm:$0xff] %v1281
      %1288 = vst [vmem:[%s170 + $0x10] sm:$0xf] %v1282
      %p1289 = scmp.lt.s32.totalorder %s14, 1
      %s1290 = scalar_select %p1289, %s14, 1
      %s1291 = smul.addr %s1290, 5
      %s1292 = smul.addr %s1291, 4
      %s1293 = scalar_lea.vmem %s3, %s1292
      // Predicated region
      $region33: #{slimnet_forward.3} parent=31 // pred_check
        %p1294 = pneg %p100
      $region34: #{slimnet_forward.3} parent=31 // pred_check_branch
        %1296 = sbr.rel (%p1294) target = $region36
      $region35: #{slimnet_forward.3} parent=31 // pred_region
        _
      $region36: #{slimnet_forward.3} parent=31 // pred_fallthru
        _
    $region32: #{slimnet_forward.3} parent=5 // pred_fallthru
      _
    %p1297 = scmp.le.s32.totalorder 2, %s9
    // Predicated region
    $region37: #{slimnet_forward.3} parent=5 // pred_check
      %p1298 = pneg %p1297
    $region38: #{slimnet_forward.3} parent=5 // pred_check_branch
      %1300 = sbr.rel (%p1298) target = $region40
    $region39: #{slimnet_forward.3} parent=5 // pred_region
      %s1301 = ssub.s32 %s9, 2
      // Predicated region
      $region41: #{slimnet_forward.3} parent=39 // pred_check
        %p1302 = pneg %p106
      $region42: #{slimnet_forward.3} parent=39 // pred_check_branch
        %1304 = sbr.rel (%p1302) target = $region44
      $region43: #{slimnet_forward.3} parent=39 // pred_region
        %p1305 = scmp.lt.s32.totalorder %s15, 1
        %s1306 = scalar_select %p1305, %s15, 1
        %s1307 = smul.addr %s1306, 5
        %s1308 = smul.addr %s1307, 4
        %s1309 = scalar_lea.vmem %s3, %s1308
      $region44: #{slimnet_forward.3} parent=39 // pred_fallthru
        _
    $region40: #{slimnet_forward.3} parent=5 // pred_fallthru
      _
  $region6: #{slimnet_forward.3} parent=0 // loop_footer
    %s13 = sadd.s32 1, %s9
  $region7: #{slimnet_forward.3} parent=0 // loop_footer_branch
    %8 = sbr.rel target = $region3
  $region8: #{slimnet_forward.3} parent=0 // loop_exit
    _

// kernel: slimnet_forward.4
$region0: #{slimnet_forward.4}
  #allocation0 [shape = 'u32[]', space=smem, size = 0x4, offset = 0x4, fixed_abs, tag = 'smem constant byte address 0x4 - core index']
  #allocation1 [shape = 'u32[144,128]{1,0:T(1,128)}', space=vmem, size = 0x12000, scoped, tag = 'internal scratch']
  #allocation2 [shape = 'bf16[144,896]{1,0:T(8,128)(2,1)}', space=vmem, size = 0x3f000, scoped, tag = 'scratch operand']
  %s0 = inlined_call_operand.vmem [shape: bf16[2,16,1024], index: 0, kind: input, shape index: {}]
  %s1 = inlined_call_operand.vmem [shape: bf16[8,144], index: 1, kind: input, shape index: {}]
  %s2 = inlined_call_operand.vmem [shape: f32[8,1], index: 2, kind: input, shape index: {}]
  %s3 = inlined_call_operand.vmem [shape: bf16[2,8,768], index: 3, kind: output, shape index: {}]
  %s4 = sld [smem:[#allocation0]]
  $region45: #{slimnet_forward.4} parent=0
    _
  %s6 = ssub.s32 1, %s4
  %s7 = scalar_select 0, %s6, %s4
  loop: start=0, step=1, limit=4
  $region2: #{slimnet_forward.4} parent=0 // loop_pre_header
    _
  $region3: #{slimnet_forward.4} parent=0 // loop_header
    %s9 = sphi 0, %s13
    %p10 = scmp.ge.s32.totalorder %s9, 4
    %s19 = sphi 0, %s21
    %s22 = sphi 0, %s19
    %s23 = sphi 0, %s22
    %s39 = sphi 0, %s23
    %s43 = sphi 0, %s43
    %s45 = sphi 0, %s43
    %s46 = sphi 0, %s45
    %s60 = sphi 0, %s46
    %s64 = sphi 0, %s64
    %s66 = sphi 0, %s64
    %s67 = sphi 0, %s66
    %s81 = sphi 0, %s67
    %s87 = sphi 0, %s89
    %s90 = sphi 0, %s87
    %s91 = sphi 0, %s90
    %s107 = sphi 0, %s91
  $region4: #{slimnet_forward.4} parent=0 // loop_header_branch
    %12 = sbr.rel (%p10) target = $region8
  $region5: #{slimnet_forward.4} parent=0 // loop_body
    %s14 = ssub.s32 %s9, 1
    %s15 = ssub.s32 %s9, 2
    %s16 = sadd.s32 %s9, 1
    %s17 = ssub.s32 %s9, %s16
    %p18 = scmp.eq.s32.totalorder %s17, 0
    %s20 = sadd.s32 %s19, 1
    %s21 = scalar_select %p18, %s19, %s20
    %p24 = pneg %p18
    %p25 = scmp.eq.s32.totalorder %s9, 1
    %p26 = por %p24, %p25
    %p27 = scmp.ne.s32.totalorder %s19, %s22
    %p28 = scmp.eq.s32.totalorder %s9, 0
    %p29 = por %p27, %p28
    %p30 = scmp.ne.s32.totalorder %s19, %s22
    %p31 = scmp.eq.s32.totalorder %s14, 1
    %p32 = por %p30, %p31
    %p33 = scmp.ne.s32.totalorder %s22, %s23
    %p34 = scmp.eq.s32.totalorder %s14, 0
    %p35 = por %p33, %p34
    %p36 = scmp.ne.s32.totalorder %s22, %s23
    %p37 = scmp.eq.s32.totalorder %s15, 1
    %p38 = por %p36, %p37
    %p40 = scmp.ne.s32.totalorder %s23, %s39
    %p41 = scmp.eq.s32.totalorder %s15, 0
    %p42 = por %p40, %p41
    %s44 = sadd.s32 %s43, 1
    %p47 = scmp.eq.s32.totalorder %s9, 1
    %p48 = scmp.ne.s32.totalorder %s43, %s45
    %p49 = scmp.eq.s32.totalorder %s9, 0
    %p50 = por %p48, %p49
    %p51 = scmp.ne.s32.totalorder %s43, %s45
    %p52 = scmp.eq.s32.totalorder %s14, 1
    %p53 = por %p51, %p52
    %p54 = scmp.ne.s32.totalorder %s45, %s46
    %p55 = scmp.eq.s32.totalorder %s14, 0
    %p56 = por %p54, %p55
    %p57 = scmp.ne.s32.totalorder %s45, %s46
    %p58 = scmp.eq.s32.totalorder %s15, 1
    %p59 = por %p57, %p58
    %p61 = scmp.ne.s32.totalorder %s46, %s60
    %p62 = scmp.eq.s32.totalorder %s15, 0
    %p63 = por %p61, %p62
    %s65 = sadd.s32 %s64, 1
    %p68 = scmp.eq.s32.totalorder %s9, 1
    %p69 = scmp.ne.s32.totalorder %s64, %s66
    %p70 = scmp.eq.s32.totalorder %s9, 0
    %p71 = por %p69, %p70
    %p72 = scmp.ne.s32.totalorder %s64, %s66
    %p73 = scmp.eq.s32.totalorder %s14, 1
    %p74 = por %p72, %p73
    %p75 = scmp.ne.s32.totalorder %s66, %s67
    %p76 = scmp.eq.s32.totalorder %s14, 0
    %p77 = por %p75, %p76
    %p78 = scmp.ne.s32.totalorder %s66, %s67
    %p79 = scmp.eq.s32.totalorder %s15, 1
    %p80 = por %p78, %p79
    %p82 = scmp.ne.s32.totalorder %s67, %s81
    %p83 = scmp.eq.s32.totalorder %s15, 0
    %p84 = por %p82, %p83
    %s85 = ssub.s32 %s9, %s16
    %p86 = scmp.eq.s32.totalorder %s85, 0
    %s88 = sadd.s32 %s87, 1
    %s89 = scalar_select %p86, %s87, %s88
    %p92 = pneg %p86
    %p93 = scmp.eq.s32.totalorder %s9, 1
    %p94 = por %p92, %p93
    %p95 = scmp.ne.s32.totalorder %s87, %s90
    %p96 = scmp.eq.s32.totalorder %s9, 0
    %p97 = por %p95, %p96
    %p98 = scmp.ne.s32.totalorder %s87, %s90
    %p99 = scmp.eq.s32.totalorder %s14, 1
    %p100 = por %p98, %p99
    %p101 = scmp.ne.s32.totalorder %s90, %s91
    %p102 = scmp.eq.s32.totalorder %s14, 0
    %p103 = por %p101, %p102
    %p104 = scmp.ne.s32.totalorder %s90, %s91
    %p105 = scmp.eq.s32.totalorder %s15, 1
    %p106 = por %p104, %p105
    %p108 = scmp.ne.s32.totalorder %s91, %s107
    %p109 = scmp.eq.s32.totalorder %s15, 0
    %p110 = por %p108, %p109
    %p111 = scmp.le.s32.totalorder 1, %s9
    %p112 = scmp.lt.s32.totalorder %s9, 3
    %p113 = pnand %p111, %p112
    %p114 = pneg %p113
    // Predicated region
    $region9: #{slimnet_forward.4} parent=5 // pred_check
      _
    $region10: #{slimnet_forward.4} parent=5 // pred_check_branch
      %116 = sbr.rel (%p113) target = $region12
    $region11: #{slimnet_forward.4} parent=5 // pred_region
      %s117 = ssub.s32 %s9, 1
      // Predicated region
      $region13: #{slimnet_forward.4} parent=11 // pred_check
        %p118 = pneg %p56
      $region14: #{slimnet_forward.4} parent=11 // pred_check_branch
        %120 = sbr.rel (%p118) target = $region16
      $region15: #{slimnet_forward.4} parent=11 // pred_region
        _
      $region16: #{slimnet_forward.4} parent=11 // pred_fallthru
        _
      // Predicated region
      $region17: #{slimnet_forward.4} parent=11 // pred_check
        %p121 = pneg %p77
      $region18: #{slimnet_forward.4} parent=11 // pred_check_branch
        %123 = sbr.rel (%p121) target = $region20
      $region19: #{slimnet_forward.4} parent=11 // pred_region
        _
      $region20: #{slimnet_forward.4} parent=11 // pred_fallthru
        _
    $region12: #{slimnet_forward.4} parent=5 // pred_fallthru
      _
    %p124 = scmp.lt.s32.totalorder %s9, 2
    // Predicated region
    $region21: #{slimnet_forward.4} parent=5 // pred_check
      %p125 = pneg %p124
    $region22: #{slimnet_forward.4} parent=5 // pred_check_branch
      %127 = sbr.rel (%p125) target = $region24
    $region23: #{slimnet_forward.4} parent=5 // pred_region
      // Predicated region
      $region25: #{slimnet_forward.4} parent=23 // pred_check
        %p128 = pneg %p29
      $region26: #{slimnet_forward.4} parent=23 // pred_check_branch
        %130 = sbr.rel (%p128) target = $region28
      $region27: #{slimnet_forward.4} parent=23 // pred_region
        %p131 = scmp.lt.s32.totalorder %s9, 1
        %s132 = scalar_select %p131, %s9, 1
        %s133 = smul.addr %s132, 16
        %s134 = smul.addr %s133, 4
        %s135 = scalar_lea.vmem %s0, %s134
      $region28: #{slimnet_forward.4} parent=23 // pred_fallthru
        _
    $region24: #{slimnet_forward.4} parent=5 // pred_fallthru
      _
    %p136 = scmp.le.s32.totalorder 1, %s9
    %p137 = scmp.lt.s32.totalorder %s9, 3
    %p138 = pnand %p136, %p137
    %p139 = pneg %p138
    // Predicated region
    $region29: #{slimnet_forward.4} parent=5 // pred_check
      _
    $region30: #{slimnet_forward.4} parent=5 // pred_check_branch
      %141 = sbr.rel (%p138) target = $region32
    $region31: #{slimnet_forward.4} parent=5 // pred_region
      %s142 = ssub.s32 %s9, 1
      %p143 = scmp.lt.s32.totalorder %s14, 1
      %s144 = scalar_select %p143, %s14, 1
      %s145 = smul.addr %s144, 16
      %s146 = smul.addr %s145, 4
      %s147 = scalar_lea.vmem %s0, %s146
      %p148 = pneg %p35
      %p149 = pneg %p32
      %p150 = pneg %p56
      %p151 = pneg %p53
      %p152 = pneg %p77
      %p153 = pneg %p74
      %p154 = pneg %p103
      %p155 = pneg %p100
      %p156 = scmp.lt.s32.totalorder %s14, 1
      %s157 = scalar_select %p156, %s14, 1
      %s158 = smul.addr %s157, 6
      %s159 = smul.addr %s158, 4
      %s160 = scalar_lea.vmem %s3, %s159
      %p161 = scmp.lt.s32.totalorder %s14, 1
      %s162 = scalar_select %p161, %s14, 1
      %s163 = smul.addr %s162, 16
      %s164 = smul.addr %s163, 4
      %s165 = scalar_lea.vmem %s0, %s164
      %p166 = scmp.lt.s32.totalorder %s14, 1
      %s167 = scalar_select %p166, %s14, 1
      %s168 = smul.addr %s167, 6
      %s169 = smul.addr %s168, 4
      %s170 = scalar_lea.vmem %s3, %s169
      %v172 = vld [vmem:[%s165] sm:$0xff]
      %v173 = vld [vmem:[%s165 + $0x8] sm:$0xff]
      %v174 = vld [vmem:[%s165 + $0x10] sm:$0xff]
      %v175 = vld [vmem:[%s165 + $0x18] sm:$0xf]
      %v176 = vld [vmem:[%s165 + $0x20] sm:$0xff]
      %v177 = vld [vmem:[%s165 + $0x28] sm:$0xff]
      %v178 = vld [vmem:[%s165 + $0x30] sm:$0xff]
      %v179 = vld [vmem:[%s165 + $0x38] sm:$0xf]
      %180 = vst [vmem:[#allocation2] sm:$0xff] %v172
      %181 = vst [vmem:[#allocation2 + $0x8] sm:$0xff] %v173
      %182 = vst [vmem:[#allocation2 + $0x10] sm:$0xff] %v174
      %183 = vst [vmem:[#allocation2 + $0x18] sm:$0xf] %v175
      %184 = vst [vmem:[#allocation2 + $0x1c] sm:$0xff] %v176
      %185 = vst [vmem:[#allocation2 + $0x24] sm:$0xff] %v177
      %186 = vst [vmem:[#allocation2 + $0x2c] sm:$0xff] %v178
      %187 = vst [vmem:[#allocation2 + $0x34] sm:$0xf] %v179
      %v188 = vld [vmem:[%s165] sm:$0xff]
      %v189 = vld [vmem:[%s165 + $0x8] sm:$0xff]
      %v190 = vld [vmem:[%s165 + $0x10] sm:$0xff]
      %v191 = vld [vmem:[%s165 + $0x18] sm:$0xff]
      %v192 = vld [vmem:[%s165 + $0x20] sm:$0xff]
      %v193 = vld [vmem:[%s165 + $0x28] sm:$0xff]
      %v194 = vld [vmem:[%s165 + $0x30] sm:$0xff]
      %v195 = vld [vmem:[%s165 + $0x38] sm:$0xff]
      %204 = vrot.lane.b32.xlu0 %v188, 127
      %v205 = vpop.permute.xlu0 %204
      %206 = vrot.lane.b32.xlu0 %v189, 127
      %v207 = vpop.permute.xlu0 %206
      %208 = vrot.lane.b32.xlu0 %v190, 127
      %v209 = vpop.permute.xlu0 %208
      %210 = vrot.lane.b32.xlu0 %v191, 127
      %v211 = vpop.permute.xlu0 %210
      %212 = vrot.lane.b32.xlu0 %v192, 127
      %v213 = vpop.permute.xlu0 %212
      %214 = vrot.lane.b32.xlu0 %v193, 127
      %v215 = vpop.permute.xlu0 %214
      %216 = vrot.lane.b32.xlu0 %v194, 127
      %v217 = vpop.permute.xlu0 %216
      %218 = vrot.lane.b32.xlu0 %v195, 127
      %v219 = vpop.permute.xlu0 %218
      %v220 = vrot.slane %v205, 4
      %v221 = vrot.slane %v207, 4
      %v222 = vrot.slane %v209, 4
      %v223 = vrot.slane %v211, 4
      %v224 = vrot.slane %v213, 4
      %v225 = vrot.slane %v215, 4
      %v226 = vrot.slane %v217, 4
      %v227 = vrot.slane %v219, 4
      %vm228 = vcmask 1043456
      %v229 = vsel %vm228, %v220, %v221
      %vm230 = vcmask 1039360
      %v231 = vsel %vm230, %v205, %v229
      %v232 = vsel %vm228, %v221, %v222
      %v233 = vsel %vm230, %v207, %v232
      %v234 = vsel %vm228, %v222, %v223
      %v235 = vsel %vm230, %v209, %v234
      %v236 = vsel %vm230, %v211, %v223
      %v237 = vsel %vm228, %v224, %v225
      %v238 = vsel %vm230, %v213, %v237
      %v239 = vsel %vm228, %v225, %v226
      %v240 = vsel %vm230, %v215, %v239
      %v241 = vsel %vm228, %v226, %v227
      %v242 = vsel %vm230, %v217, %v241
      %v243 = vsel %vm230, %v219, %v227
      %252 = vst [vmem:[#allocation2 + $0x38] sm:$0xff] %v231
      %253 = vst [vmem:[#allocation2 + $0x40] sm:$0xff] %v233
      %254 = vst [vmem:[#allocation2 + $0x48] sm:$0xff] %v235
      %255 = vst [vmem:[#allocation2 + $0x50] sm:$0xf] %v236
      %256 = vst [vmem:[#allocation2 + $0x54] sm:$0xff] %v238
      %257 = vst [vmem:[#allocation2 + $0x5c] sm:$0xff] %v240
      %258 = vst [vmem:[#allocation2 + $0x64] sm:$0xff] %v242
      %259 = vst [vmem:[#allocation2 + $0x6c] sm:$0xf] %v243
      %v260 = vld [vmem:[%s165] sm:$0xff]
      %v261 = vld [vmem:[%s165 + $0x8] sm:$0xff]
      %v262 = vld [vmem:[%s165 + $0x10] sm:$0xff]
      %v263 = vld [vmem:[%s165 + $0x18] sm:$0xff]
      %v264 = vld [vmem:[%s165 + $0x20] sm:$0xff]
      %v265 = vld [vmem:[%s165 + $0x28] sm:$0xff]
      %v266 = vld [vmem:[%s165 + $0x30] sm:$0xff]
      %v267 = vld [vmem:[%s165 + $0x38] sm:$0xff]
      %276 = vrot.lane.b32.xlu0 %v260, 126
      %v277 = vpop.permute.xlu0 %276
      %278 = vrot.lane.b32.xlu0 %v261, 126
      %v279 = vpop.permute.xlu0 %278
      %280 = vrot.lane.b32.xlu0 %v262, 126
      %v281 = vpop.permute.xlu0 %280
      %282 = vrot.lane.b32.xlu0 %v263, 126
      %v283 = vpop.permute.xlu0 %282
      %284 = vrot.lane.b32.xlu0 %v264, 126
      %v285 = vpop.permute.xlu0 %284
      %286 = vrot.lane.b32.xlu0 %v265, 126
      %v287 = vpop.permute.xlu0 %286
      %288 = vrot.lane.b32.xlu0 %v266, 126
      %v289 = vpop.permute.xlu0 %288
      %290 = vrot.lane.b32.xlu0 %v267, 126
      %v291 = vpop.permute.xlu0 %290
      %v292 = vrot.slane %v277, 4
      %v293 = vrot.slane %v279, 4
      %v294 = vrot.slane %v281, 4
      %v295 = vrot.slane %v283, 4
      %v296 = vrot.slane %v285, 4
      %v297 = vrot.slane %v287, 4
      %v298 = vrot.slane %v289, 4
      %v299 = vrot.slane %v291, 4
      %v300 = vsel %vm228, %v292, %v293
      %vm301 = vcmask 1031168
      %v302 = vsel %vm301, %v277, %v300
      %v303 = vsel %vm228, %v293, %v294
      %v304 = vsel %vm301, %v279, %v303
      %v305 = vsel %vm228, %v294, %v295
      %v306 = vsel %vm301, %v281, %v305
      %v307 = vsel %vm301, %v283, %v295
      %v308 = vsel %vm228, %v296, %v297
      %v309 = vsel %vm301, %v285, %v308
      %v310 = vsel %vm228, %v297, %v298
      %v311 = vsel %vm301, %v287, %v310
      %v312 = vsel %vm228, %v298, %v299
      %v313 = vsel %vm301, %v289, %v312
      %v314 = vsel %vm301, %v291, %v299
      %323 = vst [vmem:[#allocation2 + $0x70] sm:$0xff] %v302
      %324 = vst [vmem:[#allocation2 + $0x78] sm:$0xff] %v304
      %325 = vst [vmem:[#allocation2 + $0x80] sm:$0xff] %v306
      %326 = vst [vmem:[#allocation2 + $0x88] sm:$0xf] %v307
      %327 = vst [vmem:[#allocation2 + $0x8c] sm:$0xff] %v309
      %328 = vst [vmem:[#allocation2 + $0x94] sm:$0xff] %v311
      %329 = vst [vmem:[#allocation2 + $0x9c] sm:$0xff] %v313
      %330 = vst [vmem:[#allocation2 + $0xa4] sm:$0xf] %v314
      %v331 = vld [vmem:[%s165] sm:$0xff]
      %v332 = vld [vmem:[%s165 + $0x8] sm:$0xff]
      %v333 = vld [vmem:[%s165 + $0x10] sm:$0xff]
      %v334 = vld [vmem:[%s165 + $0x18] sm:$0xff]
      %v335 = vld [vmem:[%s165 + $0x20] sm:$0xff]
      %v336 = vld [vmem:[%s165 + $0x28] sm:$0xff]
      %v337 = vld [vmem:[%s165 + $0x30] sm:$0xff]
      %v338 = vld [vmem:[%s165 + $0x38] sm:$0xff]
      %347 = vrot.lane.b32.xlu0 %v331, 115
      %v348 = vpop.permute.xlu0 %347
      %349 = vrot.lane.b32.xlu0 %v332, 115
      %v350 = vpop.permute.xlu0 %349
      %351 = vrot.lane.b32.xlu0 %v333, 115
      %v352 = vpop.permute.xlu0 %351
      %353 = vrot.lane.b32.xlu0 %v334, 115
      %v354 = vpop.permute.xlu0 %353
      %355 = vrot.lane.b32.xlu0 %v335, 115
      %v356 = vpop.permute.xlu0 %355
      %357 = vrot.lane.b32.xlu0 %v336, 115
      %v358 = vpop.permute.xlu0 %357
      %359 = vrot.lane.b32.xlu0 %v337, 115
      %v360 = vpop.permute.xlu0 %359
      %361 = vrot.lane.b32.xlu0 %v338, 115
      %v362 = vpop.permute.xlu0 %361
      %v363 = vrot.slane %v348, 4
      %v364 = vrot.slane %v350, 4
      %v365 = vrot.slane %v352, 4
      %v366 = vrot.slane %v354, 4
      %v367 = vrot.slane %v356, 4
      %v368 = vrot.slane %v358, 4
      %v369 = vrot.slane %v360, 4
      %v370 = vrot.slane %v362, 4
      %v371 = vsel %vm228, %v363, %v364
      %vm372 = vcmask 941056
      %v373 = vsel %vm372, %v348, %v371
      %v374 = vsel %vm228, %v364, %v365
      %v375 = vsel %vm372, %v350, %v374
      %v376 = vsel %vm228, %v365, %v366
      %v377 = vsel %vm372, %v352, %v376
      %v378 = vsel %vm372, %v354, %v366
      %v379 = vsel %vm228, %v367, %v368
      %v380 = vsel %vm372, %v356, %v379
      %v381 = vsel %vm228, %v368, %v369
      %v382 = vsel %vm372, %v358, %v381
      %v383 = vsel %vm228, %v369, %v370
      %v384 = vsel %vm372, %v360, %v383
      %v385 = vsel %vm372, %v362, %v370
      %394 = vst [vmem:[#allocation2 + $0xa8] sm:$0xff] %v373
      %395 = vst [vmem:[#allocation2 + $0xb0] sm:$0xff] %v375
      %396 = vst [vmem:[#allocation2 + $0xb8] sm:$0xff] %v377
      %397 = vst [vmem:[#allocation2 + $0xc0] sm:$0xf] %v378
      %398 = vst [vmem:[#allocation2 + $0xc4] sm:$0xff] %v380
      %399 = vst [vmem:[#allocation2 + $0xcc] sm:$0xff] %v382
      %400 = vst [vmem:[#allocation2 + $0xd4] sm:$0xff] %v384
      %401 = vst [vmem:[#allocation2 + $0xdc] sm:$0xf] %v385
      %v402 = vld [vmem:[%s165] sm:$0xff]
      %v403 = vld [vmem:[%s165 + $0x8] sm:$0xff]
      %v404 = vld [vmem:[%s165 + $0x10] sm:$0xff]
      %v405 = vld [vmem:[%s165 + $0x18] sm:$0xff]
      %v406 = vld [vmem:[%s165 + $0x20] sm:$0xff]
      %v407 = vld [vmem:[%s165 + $0x28] sm:$0xff]
      %v408 = vld [vmem:[%s165 + $0x30] sm:$0xff]
      %v409 = vld [vmem:[%s165 + $0x38] sm:$0xff]
      %418 = vrot.lane.b32.xlu0 %v402, 114
      %v419 = vpop.permute.xlu0 %418
      %420 = vrot.lane.b32.xlu0 %v403, 114
      %v421 = vpop.permute.xlu0 %420
      %422 = vrot.lane.b32.xlu0 %v404, 114
      %v423 = vpop.permute.xlu0 %422
      %424 = vrot.lane.b32.xlu0 %v405, 114
      %v425 = vpop.permute.xlu0 %424
      %426 = vrot.lane.b32.xlu0 %v406, 114
      %v427 = vpop.permute.xlu0 %426
      %428 = vrot.lane.b32.xlu0 %v407, 114
      %v429 = vpop.permute.xlu0 %428
      %430 = vrot.lane.b32.xlu0 %v408, 114
      %v431 = vpop.permute.xlu0 %430
      %432 = vrot.lane.b32.xlu0 %v409, 114
      %v433 = vpop.permute.xlu0 %432
      %v434 = vrot.slane %v419, 4
      %v435 = vrot.slane %v421, 4
      %v436 = vrot.slane %v423, 4
      %v437 = vrot.slane %v425, 4
      %v438 = vrot.slane %v427, 4
      %v439 = vrot.slane %v429, 4
      %v440 = vrot.slane %v431, 4
      %v441 = vrot.slane %v433, 4
      %v442 = vsel %vm228, %v434, %v435
      %vm443 = vcmask 932864
      %v444 = vsel %vm443, %v419, %v442
      %v445 = vsel %vm228, %v435, %v436
      %v446 = vsel %vm443, %v421, %v445
      %v447 = vsel %vm228, %v436, %v437
      %v448 = vsel %vm443, %v423, %v447
      %v449 = vsel %vm443, %v425, %v437
      %v450 = vsel %vm228, %v438, %v439
      %v451 = vsel %vm443, %v427, %v450
      %v452 = vsel %vm228, %v439, %v440
      %v453 = vsel %vm443, %v429, %v452
      %v454 = vsel %vm228, %v440, %v441
      %v455 = vsel %vm443, %v431, %v454
      %v456 = vsel %vm443, %v433, %v441
      %465 = vst [vmem:[#allocation2 + $0xe0] sm:$0xff] %v444
      %466 = vst [vmem:[#allocation2 + $0xe8] sm:$0xff] %v446
      %467 = vst [vmem:[#allocation2 + $0xf0] sm:$0xff] %v448
      %468 = vst [vmem:[#allocation2 + $0xf8] sm:$0xf] %v449
      %469 = vst [vmem:[#allocation2 + $0xfc] sm:$0xff] %v451
      %470 = vst [vmem:[#allocation2 + $0x104] sm:$0xff] %v453
      %471 = vst [vmem:[#allocation2 + $0x10c] sm:$0xff] %v455
      %472 = vst [vmem:[#allocation2 + $0x114] sm:$0xf] %v456
      %v473 = vld [vmem:[%s165] sm:$0xff]
      %v474 = vld [vmem:[%s165 + $0x8] sm:$0xff]
      %v475 = vld [vmem:[%s165 + $0x10] sm:$0xff]
      %v476 = vld [vmem:[%s165 + $0x18] sm:$0xff]
      %v477 = vld [vmem:[%s165 + $0x20] sm:$0xff]
      %v478 = vld [vmem:[%s165 + $0x28] sm:$0xff]
      %v479 = vld [vmem:[%s165 + $0x30] sm:$0xff]
      %v480 = vld [vmem:[%s165 + $0x38] sm:$0xff]
      %489 = vrot.lane.b32.xlu0 %v473, 113
      %v490 = vpop.permute.xlu0 %489
      %491 = vrot.lane.b32.xlu0 %v474, 113
      %v492 = vpop.permute.xlu0 %491
      %493 = vrot.lane.b32.xlu0 %v475, 113
      %v494 = vpop.permute.xlu0 %493
      %495 = vrot.lane.b32.xlu0 %v476, 113
      %v496 = vpop.permute.xlu0 %495
      %497 = vrot.lane.b32.xlu0 %v477, 113
      %v498 = vpop.permute.xlu0 %497
      %499 = vrot.lane.b32.xlu0 %v478, 113
      %v500 = vpop.permute.xlu0 %499
      %501 = vrot.lane.b32.xlu0 %v479, 113
      %v502 = vpop.permute.xlu0 %501
      %503 = vrot.lane.b32.xlu0 %v480, 113
      %v504 = vpop.permute.xlu0 %503
      %v505 = vrot.slane %v490, 4
      %v506 = vrot.slane %v492, 4
      %v507 = vrot.slane %v494, 4
      %v508 = vrot.slane %v496, 4
      %v509 = vrot.slane %v498, 4
      %v510 = vrot.slane %v500, 4
      %v511 = vrot.slane %v502, 4
      %v512 = vrot.slane %v504, 4
      %v513 = vsel %vm228, %v505, %v506
      %vm514 = vcmask 924672
      %v515 = vsel %vm514, %v490, %v513
      %v516 = vsel %vm228, %v506, %v507
      %v517 = vsel %vm514, %v492, %v516
      %v518 = vsel %vm228, %v507, %v508
      %v519 = vsel %vm514, %v494, %v518
      %v520 = vsel %vm514, %v496, %v508
      %v521 = vsel %vm228, %v509, %v510
      %v522 = vsel %vm514, %v498, %v521
      %v523 = vsel %vm228, %v510, %v511
      %v524 = vsel %vm514, %v500, %v523
      %v525 = vsel %vm228, %v511, %v512
      %v526 = vsel %vm514, %v502, %v525
      %v527 = vsel %vm514, %v504, %v512
      %536 = vst [vmem:[#allocation2 + $0x118] sm:$0xff] %v515
      %537 = vst [vmem:[#allocation2 + $0x120] sm:$0xff] %v517
      %538 = vst [vmem:[#allocation2 + $0x128] sm:$0xff] %v519
      %539 = vst [vmem:[#allocation2 + $0x130] sm:$0xf] %v520
      %540 = vst [vmem:[#allocation2 + $0x134] sm:$0xff] %v522
      %541 = vst [vmem:[#allocation2 + $0x13c] sm:$0xff] %v524
      %542 = vst [vmem:[#allocation2 + $0x144] sm:$0xff] %v526
      %543 = vst [vmem:[#allocation2 + $0x14c] sm:$0xf] %v527
      %v544 = vld [vmem:[%s165] sm:$0xff]
      %v545 = vld [vmem:[%s165 + $0x8] sm:$0xff]
      %v546 = vld [vmem:[%s165 + $0x10] sm:$0xff]
      %v547 = vld [vmem:[%s165 + $0x18] sm:$0xff]
      %v548 = vld [vmem:[%s165 + $0x20] sm:$0xff]
      %v549 = vld [vmem:[%s165 + $0x28] sm:$0xff]
      %v550 = vld [vmem:[%s165 + $0x30] sm:$0xff]
      %v551 = vld [vmem:[%s165 + $0x38] sm:$0xff]
      %560 = vrot.lane.b32.xlu0 %v544, 102
      %v561 = vpop.permute.xlu0 %560
      %562 = vrot.lane.b32.xlu0 %v545, 102
      %v563 = vpop.permute.xlu0 %562
      %564 = vrot.lane.b32.xlu0 %v546, 102
      %v565 = vpop.permute.xlu0 %564
      %566 = vrot.lane.b32.xlu0 %v547, 102
      %v567 = vpop.permute.xlu0 %566
      %568 = vrot.lane.b32.xlu0 %v548, 102
      %v569 = vpop.permute.xlu0 %568
      %570 = vrot.lane.b32.xlu0 %v549, 102
      %v571 = vpop.permute.xlu0 %570
      %572 = vrot.lane.b32.xlu0 %v550, 102
      %v573 = vpop.permute.xlu0 %572
      %574 = vrot.lane.b32.xlu0 %v551, 102
      %v575 = vpop.permute.xlu0 %574
      %v576 = vrot.slane %v561, 4
      %v577 = vrot.slane %v563, 4
      %v578 = vrot.slane %v565, 4
      %v579 = vrot.slane %v567, 4
      %v580 = vrot.slane %v569, 4
      %v581 = vrot.slane %v571, 4
      %v582 = vrot.slane %v573, 4
      %v583 = vrot.slane %v575, 4
      %v584 = vsel %vm228, %v576, %v577
      %vm585 = vcmask 834560
      %v586 = vsel %vm585, %v561, %v584
      %v587 = vsel %vm228, %v577, %v578
      %v588 = vsel %vm585, %v563, %v587
      %v589 = vsel %vm228, %v578, %v579
      %v590 = vsel %vm585, %v565, %v589
      %v591 = vsel %vm585, %v567, %v579
      %v592 = vsel %vm228, %v580, %v581
      %v593 = vsel %vm585, %v569, %v592
      %v594 = vsel %vm228, %v581, %v582
      %v595 = vsel %vm585, %v571, %v594
      %v596 = vsel %vm228, %v582, %v583
      %v597 = vsel %vm585, %v573, %v596
      %v598 = vsel %vm585, %v575, %v583
      %607 = vst [vmem:[#allocation2 + $0x150] sm:$0xff] %v586
      %608 = vst [vmem:[#allocation2 + $0x158] sm:$0xff] %v588
      %609 = vst [vmem:[#allocation2 + $0x160] sm:$0xff] %v590
      %610 = vst [vmem:[#allocation2 + $0x168] sm:$0xf] %v591
      %611 = vst [vmem:[#allocation2 + $0x16c] sm:$0xff] %v593
      %612 = vst [vmem:[#allocation2 + $0x174] sm:$0xff] %v595
      %613 = vst [vmem:[#allocation2 + $0x17c] sm:$0xff] %v597
      %614 = vst [vmem:[#allocation2 + $0x184] sm:$0xf] %v598
      %v615 = vld [vmem:[%s165] sm:$0xff]
      %v616 = vld [vmem:[%s165 + $0x8] sm:$0xff]
      %v617 = vld [vmem:[%s165 + $0x10] sm:$0xff]
      %v618 = vld [vmem:[%s165 + $0x18] sm:$0xff]
      %v619 = vld [vmem:[%s165 + $0x20] sm:$0xff]
      %v620 = vld [vmem:[%s165 + $0x28] sm:$0xff]
      %v621 = vld [vmem:[%s165 + $0x30] sm:$0xff]
      %v622 = vld [vmem:[%s165 + $0x38] sm:$0xff]
      %631 = vrot.lane.b32.xlu0 %v615, 101
      %v632 = vpop.permute.xlu0 %631
      %633 = vrot.lane.b32.xlu0 %v616, 101
      %v634 = vpop.permute.xlu0 %633
      %635 = vrot.lane.b32.xlu0 %v617, 101
      %v636 = vpop.permute.xlu0 %635
      %637 = vrot.lane.b32.xlu0 %v618, 101
      %v638 = vpop.permute.xlu0 %637
      %639 = vrot.lane.b32.xlu0 %v619, 101
      %v640 = vpop.permute.xlu0 %639
      %641 = vrot.lane.b32.xlu0 %v620, 101
      %v642 = vpop.permute.xlu0 %641
      %643 = vrot.lane.b32.xlu0 %v621, 101
      %v644 = vpop.permute.xlu0 %643
      %645 = vrot.lane.b32.xlu0 %v622, 101
      %v646 = vpop.permute.xlu0 %645
      %v647 = vrot.slane %v632, 4
      %v648 = vrot.slane %v634, 4
      %v649 = vrot.slane %v636, 4
      %v650 = vrot.slane %v638, 4
      %v651 = vrot.slane %v640, 4
      %v652 = vrot.slane %v642, 4
      %v653 = vrot.slane %v644, 4
      %v654 = vrot.slane %v646, 4
      %v655 = vsel %vm228, %v647, %v648
      %vm656 = vcmask 826368
      %v657 = vsel %vm656, %v632, %v655
      %v658 = vsel %vm228, %v648, %v649
      %v659 = vsel %vm656, %v634, %v658
      %v660 = vsel %vm228, %v649, %v650
      %v661 = vsel %vm656, %v636, %v660
      %v662 = vsel %vm656, %v638, %v650
      %v663 = vsel %vm228, %v651, %v652
      %v664 = vsel %vm656, %v640, %v663
      %v665 = vsel %vm228, %v652, %v653
      %v666 = vsel %vm656, %v642, %v665
      %v667 = vsel %vm228, %v653, %v654
      %v668 = vsel %vm656, %v644, %v667
      %v669 = vsel %vm656, %v646, %v654
      %678 = vst [vmem:[#allocation2 + $0x188] sm:$0xff] %v657
      %679 = vst [vmem:[#allocation2 + $0x190] sm:$0xff] %v659
      %680 = vst [vmem:[#allocation2 + $0x198] sm:$0xff] %v661
      %681 = vst [vmem:[#allocation2 + $0x1a0] sm:$0xf] %v662
      %682 = vst [vmem:[#allocation2 + $0x1a4] sm:$0xff] %v664
      %683 = vst [vmem:[#allocation2 + $0x1ac] sm:$0xff] %v666
      %684 = vst [vmem:[#allocation2 + $0x1b4] sm:$0xff] %v668
      %685 = vst [vmem:[#allocation2 + $0x1bc] sm:$0xf] %v669
      %v686 = vld [vmem:[%s165] sm:$0xff]
      %v687 = vld [vmem:[%s165 + $0x8] sm:$0xff]
      %v688 = vld [vmem:[%s165 + $0x10] sm:$0xff]
      %v689 = vld [vmem:[%s165 + $0x18] sm:$0xff]
      %v690 = vld [vmem:[%s165 + $0x20] sm:$0xff]
      %v691 = vld [vmem:[%s165 + $0x28] sm:$0xff]
      %v692 = vld [vmem:[%s165 + $0x30] sm:$0xff]
      %v693 = vld [vmem:[%s165 + $0x38] sm:$0xff]
      %702 = vrot.lane.b32.xlu0 %v686, 100
      %v703 = vpop.permute.xlu0 %702
      %704 = vrot.lane.b32.xlu0 %v687, 100
      %v705 = vpop.permute.xlu0 %704
      %706 = vrot.lane.b32.xlu0 %v688, 100
      %v707 = vpop.permute.xlu0 %706
      %708 = vrot.lane.b32.xlu0 %v689, 100
      %v709 = vpop.permute.xlu0 %708
      %710 = vrot.lane.b32.xlu0 %v690, 100
      %v711 = vpop.permute.xlu0 %710
      %712 = vrot.lane.b32.xlu0 %v691, 100
      %v713 = vpop.permute.xlu0 %712
      %714 = vrot.lane.b32.xlu0 %v692, 100
      %v715 = vpop.permute.xlu0 %714
      %716 = vrot.lane.b32.xlu0 %v693, 100
      %v717 = vpop.permute.xlu0 %716
      %v718 = vrot.slane %v703, 4
      %v719 = vrot.slane %v705, 4
      %v720 = vrot.slane %v707, 4
      %v721 = vrot.slane %v709, 4
      %v722 = vrot.slane %v711, 4
      %v723 = vrot.slane %v713, 4
      %v724 = vrot.slane %v715, 4
      %v725 = vrot.slane %v717, 4
      %v726 = vsel %vm228, %v718, %v719
      %vm727 = vcmask 818176
      %v728 = vsel %vm727, %v703, %v726
      %v729 = vsel %vm228, %v719, %v720
      %v730 = vsel %vm727, %v705, %v729
      %v731 = vsel %vm228, %v720, %v721
      %v732 = vsel %vm727, %v707, %v731
      %v733 = vsel %vm727, %v709, %v721
      %v734 = vsel %vm228, %v722, %v723
      %v735 = vsel %vm727, %v711, %v734
      %v736 = vsel %vm228, %v723, %v724
      %v737 = vsel %vm727, %v713, %v736
      %v738 = vsel %vm228, %v724, %v725
      %v739 = vsel %vm727, %v715, %v738
      %v740 = vsel %vm727, %v717, %v725
      %749 = vst [vmem:[#allocation2 + $0x1c0] sm:$0xff] %v728
      %750 = vst [vmem:[#allocation2 + $0x1c8] sm:$0xff] %v730
      %751 = vst [vmem:[#allocation2 + $0x1d0] sm:$0xff] %v732
      %752 = vst [vmem:[#allocation2 + $0x1d8] sm:$0xf] %v733
      %753 = vst [vmem:[#allocation2 + $0x1dc] sm:$0xff] %v735
      %754 = vst [vmem:[#allocation2 + $0x1e4] sm:$0xff] %v737
      %755 = vst [vmem:[#allocation2 + $0x1ec] sm:$0xff] %v739
      %756 = vst [vmem:[#allocation2 + $0x1f4] sm:$0xf] %v740
      %v757 = vld [vmem:[%s1] sm:$0xff]
      %v758 = vld [vmem:[#allocation2] sm:$0xff]
      %v759 = vld [vmem:[#allocation2 + $0x8] sm:$0xff]
      %v760 = vld [vmem:[#allocation2 + $0x10] sm:$0xff]
      %v761 = vld [vmem:[#allocation2 + $0x18] sm:$0xf]
      %v762 = vld [vmem:[#allocation2 + $0x1c] sm:$0xff]
      %v763 = vld [vmem:[#allocation2 + $0x24] sm:$0xff]
      %v764 = vld [vmem:[#allocation2 + $0x2c] sm:$0xff]
      %v765 = vld [vmem:[#allocation2 + $0x34] sm:$0xf]
      %v766 = vld [vmem:[#allocation2 + $0x38] sm:$0xff]
      %v767 = vld [vmem:[#allocation2 + $0x40] sm:$0xff]
      %v768 = vld [vmem:[#allocation2 + $0x48] sm:$0xff]
      %v769 = vld [vmem:[#allocation2 + $0x50] sm:$0xf]
      %v770 = vld [vmem:[#allocation2 + $0x54] sm:$0xff]
      %v771 = vld [vmem:[#allocation2 + $0x5c] sm:$0xff]
      %v772 = vld [vmem:[#allocation2 + $0x64] sm:$0xff]
      %v773 = vld [vmem:[#allocation2 + $0x6c] sm:$0xf]
      %v774 = vld [vmem:[#allocation2 + $0x70] sm:$0xff]
      %v775 = vld [vmem:[#allocation2 + $0x78] sm:$0xff]
      %v776 = vld [vmem:[#allocation2 + $0x80] sm:$0xff]
      %v777 = vld [vmem:[#allocation2 + $0x88] sm:$0xf]
      %v778 = vld [vmem:[#allocation2 + $0x8c] sm:$0xff]
      %v779 = vld [vmem:[#allocation2 + $0x94] sm:$0xff]
      %v780 = vld [vmem:[#allocation2 + $0x9c] sm:$0xff]
      %v781 = vld [vmem:[#allocation2 + $0xa4] sm:$0xf]
      %v782 = vld [vmem:[#allocation2 + $0xa8] sm:$0xff]
      %v783 = vld [vmem:[#allocation2 + $0xb0] sm:$0xff]
      %v784 = vld [vmem:[#allocation2 + $0xb8] sm:$0xff]
      %v785 = vld [vmem:[#allocation2 + $0xc0] sm:$0xf]
      %v786 = vld [vmem:[#allocation2 + $0xc4] sm:$0xff]
      %v787 = vld [vmem:[#allocation2 + $0xcc] sm:$0xff]
      %v788 = vld [vmem:[#allocation2 + $0xd4] sm:$0xff]
      %v789 = vld [vmem:[#allocation2 + $0xdc] sm:$0xf]
      %v790 = vld [vmem:[#allocation2 + $0xe0] sm:$0xff]
      %v791 = vld [vmem:[#allocation2 + $0xe8] sm:$0xff]
      %v792 = vld [vmem:[#allocation2 + $0xf0] sm:$0xff]
      %v793 = vld [vmem:[#allocation2 + $0xf8] sm:$0xf]
      %v794 = vld [vmem:[#allocation2 + $0xfc] sm:$0xff]
      %v795 = vld [vmem:[#allocation2 + $0x104] sm:$0xff]
      %v796 = vld [vmem:[#allocation2 + $0x10c] sm:$0xff]
      %v797 = vld [vmem:[#allocation2 + $0x114] sm:$0xf]
      %v798 = vld [vmem:[#allocation2 + $0x118] sm:$0xff]
      %v799 = vld [vmem:[#allocation2 + $0x120] sm:$0xff]
      %v800 = vld [vmem:[#allocation2 + $0x128] sm:$0xff]
      %v801 = vld [vmem:[#allocation2 + $0x130] sm:$0xf]
      %v802 = vld [vmem:[#allocation2 + $0x134] sm:$0xff]
      %v803 = vld [vmem:[#allocation2 + $0x13c] sm:$0xff]
      %v804 = vld [vmem:[#allocation2 + $0x144] sm:$0xff]
      %v805 = vld [vmem:[#allocation2 + $0x14c] sm:$0xf]
      %v806 = vld [vmem:[#allocation2 + $0x150] sm:$0xff]
      %v807 = vld [vmem:[#allocation2 + $0x158] sm:$0xff]
      %v808 = vld [vmem:[#allocation2 + $0x160] sm:$0xff]
      %v809 = vld [vmem:[#allocation2 + $0x168] sm:$0xf]
      %v810 = vld [vmem:[#allocation2 + $0x16c] sm:$0xff]
      %v811 = vld [vmem:[#allocation2 + $0x174] sm:$0xff]
      %v812 = vld [vmem:[#allocation2 + $0x17c] sm:$0xff]
      %v813 = vld [vmem:[#allocation2 + $0x184] sm:$0xf]
      %v814 = vld [vmem:[#allocation2 + $0x188] sm:$0xff]
      %v815 = vld [vmem:[#allocation2 + $0x190] sm:$0xff]
      %v816 = vld [vmem:[#allocation2 + $0x198] sm:$0xff]
      %v817 = vld [vmem:[#allocation2 + $0x1a0] sm:$0xf]
      %v818 = vld [vmem:[#allocation2 + $0x1a4] sm:$0xff]
      %v819 = vld [vmem:[#allocation2 + $0x1ac] sm:$0xff]
      %v820 = vld [vmem:[#allocation2 + $0x1b4] sm:$0xff]
      %v821 = vld [vmem:[#allocation2 + $0x1bc] sm:$0xf]
      %v822 = vld [vmem:[#allocation2 + $0x1c0] sm:$0xff]
      %v823 = vld [vmem:[#allocation2 + $0x1c8] sm:$0xff]
      %v824 = vld [vmem:[#allocation2 + $0x1d0] sm:$0xff]
      %v825 = vld [vmem:[#allocation2 + $0x1d8] sm:$0xf]
      %v826 = vld [vmem:[#allocation2 + $0x1dc] sm:$0xff]
      %v827 = vld [vmem:[#allocation2 + $0x1e4] sm:$0xff]
      %v828 = vld [vmem:[#allocation2 + $0x1ec] sm:$0xff]
      %v829 = vld [vmem:[#allocation2 + $0x1f4] sm:$0xf]
      %v830 = vld [vmem:[%s2] sm:$0xff]
      %832 = vset.pattern.permute.xlu0 0
      %833 = vperm.xlu0 %832, %v830
      %v834 = vpop.permute.xlu0 %833
      %v837 = vunpack.c.l.b16 %v757
      %v838 = vunpack.c.h.b16 %v757
      %v839 = vpack.c.b16 %v837, %v837
      %v840 = vpack.c.b16 %v838, %v838
      %v914 = vunpack.c.l.b16 %v758
      %v915 = vunpack.c.h.b16 %v758
      %v916 = vunpack.c.l.b16 %v759
      %v917 = vunpack.c.h.b16 %v759
      %v918 = vunpack.c.l.b16 %v760
      %v919 = vunpack.c.h.b16 %v760
      %v920 = vunpack.c.l.b16 %v761
      %v921 = vunpack.c.l.b16 %v762
      %v922 = vunpack.c.h.b16 %v762
      %v923 = vunpack.c.l.b16 %v763
      %v924 = vunpack.c.h.b16 %v763
      %v925 = vunpack.c.l.b16 %v764
      %v926 = vunpack.c.h.b16 %v764
      %v927 = vunpack.c.l.b16 %v765
      %v928 = vunpack.c.l.b16 %v766
      %v929 = vunpack.c.h.b16 %v766
      %v930 = vunpack.c.l.b16 %v767
      %v931 = vunpack.c.h.b16 %v767
      %v932 = vunpack.c.l.b16 %v768
      %v933 = vunpack.c.h.b16 %v768
      %v934 = vunpack.c.l.b16 %v769
      %v935 = vunpack.c.l.b16 %v770
      %v936 = vunpack.c.h.b16 %v770
      %v937 = vunpack.c.l.b16 %v771
      %v938 = vunpack.c.h.b16 %v771
      %v939 = vunpack.c.l.b16 %v772
      %v940 = vunpack.c.h.b16 %v772
      %v941 = vunpack.c.l.b16 %v773
      %v942 = vunpack.c.l.b16 %v774
      %v943 = vunpack.c.h.b16 %v774
      %v944 = vunpack.c.l.b16 %v775
      %v945 = vunpack.c.h.b16 %v775
      %v946 = vunpack.c.l.b16 %v776
      %v947 = vunpack.c.h.b16 %v776
      %v948 = vunpack.c.l.b16 %v777
      %v949 = vunpack.c.l.b16 %v778
      %v950 = vunpack.c.h.b16 %v778
      %v951 = vunpack.c.l.b16 %v779
      %v952 = vunpack.c.h.b16 %v779
      %v953 = vunpack.c.l.b16 %v780
      %v954 = vunpack.c.h.b16 %v780
      %v955 = vunpack.c.l.b16 %v781
      %v956 = vunpack.c.l.b16 %v782
      %v957 = vunpack.c.h.b16 %v782
      %v958 = vunpack.c.l.b16 %v783
      %v959 = vunpack.c.h.b16 %v783
      %v960 = vunpack.c.l.b16 %v784
      %v961 = vunpack.c.h.b16 %v784
      %v962 = vunpack.c.l.b16 %v785
      %v963 = vunpack.c.l.b16 %v786
      %v964 = vunpack.c.h.b16 %v786
      %v965 = vunpack.c.l.b16 %v787
      %v966 = vunpack.c.h.b16 %v787
      %v967 = vunpack.c.l.b16 %v788
      %v968 = vunpack.c.h.b16 %v788
      %v969 = vunpack.c.l.b16 %v789
      %v970 = vunpack.c.l.b16 %v790
      %v971 = vunpack.c.h.b16 %v790
      %v972 = vunpack.c.l.b16 %v791
      %v973 = vunpack.c.h.b16 %v791
      %v974 = vunpack.c.l.b16 %v792
      %v975 = vunpack.c.h.b16 %v792
      %v976 = vunpack.c.l.b16 %v793
      %v977 = vunpack.c.l.b16 %v794
      %v978 = vunpack.c.h.b16 %v794
      %v979 = vunpack.c.l.b16 %v795
      %v980 = vunpack.c.h.b16 %v795
      %v981 = vunpack.c.l.b16 %v796
      %v982 = vunpack.c.h.b16 %v796
      %v983 = vunpack.c.l.b16 %v797
      %v984 = vunpack.c.l.b16 %v798
      %v985 = vunpack.c.h.b16 %v798
      %v986 = vunpack.c.l.b16 %v799
      %v987 = vunpack.c.h.b16 %v799
      %v988 = vunpack.c.l.b16 %v800
      %v989 = vunpack.c.h.b16 %v800
      %v990 = vunpack.c.l.b16 %v801
      %v991 = vunpack.c.l.b16 %v802
      %v992 = vunpack.c.h.b16 %v802
      %v993 = vunpack.c.l.b16 %v803
      %v994 = vunpack.c.h.b16 %v803
      %v995 = vunpack.c.l.b16 %v804
      %v996 = vunpack.c.h.b16 %v804
      %v997 = vunpack.c.l.b16 %v805
      %v998 = vunpack.c.l.b16 %v806
      %v999 = vunpack.c.h.b16 %v806
      %v1000 = vunpack.c.l.b16 %v807
      %v1001 = vunpack.c.h.b16 %v807
      %v1002 = vunpack.c.l.b16 %v808
      %v1003 = vunpack.c.h.b16 %v808
      %v1004 = vunpack.c.l.b16 %v809
      %v1005 = vunpack.c.l.b16 %v810
      %v1006 = vunpack.c.h.b16 %v810
      %v1007 = vunpack.c.l.b16 %v811
      %v1008 = vunpack.c.h.b16 %v811
      %v1009 = vunpack.c.l.b16 %v812
      %v1010 = vunpack.c.h.b16 %v812
      %v1011 = vunpack.c.l.b16 %v813
      %v1012 = vunpack.c.l.b16 %v814
      %v1013 = vunpack.c.h.b16 %v814
      %v1014 = vunpack.c.l.b16 %v815
      %v1015 = vunpack.c.h.b16 %v815
      %v1016 = vunpack.c.l.b16 %v816
      %v1017 = vunpack.c.h.b16 %v816
      %v1018 = vunpack.c.l.b16 %v817
      %v1019 = vunpack.c.l.b16 %v818
      %v1020 = vunpack.c.h.b16 %v818
      %v1021 = vunpack.c.l.b16 %v819
      %v1022 = vunpack.c.h.b16 %v819
      %v1023 = vunpack.c.l.b16 %v820
      %v1024 = vunpack.c.h.b16 %v820
      %v1025 = vunpack.c.l.b16 %v821
      %v1026 = vunpack.c.l.b16 %v822
      %v1027 = vunpack.c.h.b16 %v822
      %v1028 = vunpack.c.l.b16 %v823
      %v1029 = vunpack.c.h.b16 %v823
      %v1030 = vunpack.c.l.b16 %v824
      %v1031 = vunpack.c.h.b16 %v824
      %v1032 = vunpack.c.l.b16 %v825
      %v1033 = vunpack.c.l.b16 %v826
      %v1034 = vunpack.c.h.b16 %v826
      %v1035 = vunpack.c.l.b16 %v827
      %v1036 = vunpack.c.h.b16 %v827
      %v1037 = vunpack.c.l.b16 %v828
      %v1038 = vunpack.c.h.b16 %v828
      %v1039 = vunpack.c.l.b16 %v829
      %v1040 = vpack.c.b16 %v921, %v914
      %v1041 = vpack.c.b16 %v922, %v915
      %v1042 = vpack.c.b16 %v923, %v916
      %v1043 = vpack.c.b16 %v924, %v917
      %v1044 = vpack.c.b16 %v925, %v918
      %v1045 = vpack.c.b16 %v926, %v919
      %v1046 = vpack.c.b16 %v927, %v920
      %v1047 = vpack.c.b16 %v935, %v928
      %v1048 = vpack.c.b16 %v936, %v929
      %v1049 = vpack.c.b16 %v937, %v930
      %v1050 = vpack.c.b16 %v938, %v931
      %v1051 = vpack.c.b16 %v939, %v932
      %v1052 = vpack.c.b16 %v940, %v933
      %v1053 = vpack.c.b16 %v941, %v934
      %v1054 = vpack.c.b16 %v949, %v942
      %v1055 = vpack.c.b16 %v950, %v943
      %v1056 = vpack.c.b16 %v951, %v944
      %v1057 = vpack.c.b16 %v952, %v945
      %v1058 = vpack.c.b16 %v953, %v946
      %v1059 = vpack.c.b16 %v954, %v947
      %v1060 = vpack.c.b16 %v955, %v948
      %v1061 = vpack.c.b16 %v963, %v956
      %v1062 = vpack.c.b16 %v964, %v957
      %v1063 = vpack.c.b16 %v965, %v958
      %v1064 = vpack.c.b16 %v966, %v959
      %v1065 = vpack.c.b16 %v967, %v960
      %v1066 = vpack.c.b16 %v968, %v961
      %v1067 = vpack.c.b16 %v969, %v962
      %v1068 = vpack.c.b16 %v977, %v970
      %v1069 = vpack.c.b16 %v978, %v971
      %v1070 = vpack.c.b16 %v979, %v972
      %v1071 = vpack.c.b16 %v980, %v973
      %v1072 = vpack.c.b16 %v981, %v974
      %v1073 = vpack.c.b16 %v982, %v975
      %v1074 = vpack.c.b16 %v983, %v976
      %v1075 = vpack.c.b16 %v991, %v984
      %v1076 = vpack.c.b16 %v992, %v985
      %v1077 = vpack.c.b16 %v993, %v986
      %v1078 = vpack.c.b16 %v994, %v987
      %v1079 = vpack.c.b16 %v995, %v988
      %v1080 = vpack.c.b16 %v996, %v989
      %v1081 = vpack.c.b16 %v997, %v990
      %v1082 = vpack.c.b16 %v1005, %v998
      %v1083 = vpack.c.b16 %v1006, %v999
      %v1084 = vpack.c.b16 %v1007, %v1000
      %v1085 = vpack.c.b16 %v1008, %v1001
      %v1086 = vpack.c.b16 %v1009, %v1002
      %v1087 = vpack.c.b16 %v1010, %v1003
      %v1088 = vpack.c.b16 %v1011, %v1004
      %v1089 = vpack.c.b16 %v1019, %v1012
      %v1090 = vpack.c.b16 %v1020, %v1013
      %v1091 = vpack.c.b16 %v1021, %v1014
      %v1092 = vpack.c.b16 %v1022, %v1015
      %v1093 = vpack.c.b16 %v1023, %v1016
      %v1094 = vpack.c.b16 %v1024, %v1017
      %v1095 = vpack.c.b16 %v1025, %v1018
      %v1096 = vpack.c.b16 %v1033, %v1026
      %v1097 = vpack.c.b16 %v1034, %v1027
      %v1098 = vpack.c.b16 %v1035, %v1028
      %v1099 = vpack.c.b16 %v1036, %v1029
      %v1100 = vpack.c.b16 %v1037, %v1030
      %v1101 = vpack.c.b16 %v1038, %v1031
      %v1102 = vpack.c.b16 %v1039, %v1032
      %vm1166 = vcmask 130048
      %v1168 = vsel %vm1166, %v840, 0
      %1170 = vmatprep.subr.bf16.mxu0 %v1090
      %1171 = vmatpush1.bf16.msra.mxu0 %v1089
      %1172 = vmatprep.subr.bf16.mxu0 %v1083
      %1173 = vmatpush1.bf16.msra.mxu0 %v1082
      %1174 = vmatprep.subr.bf16.mxu0 %v1076
      %1175 = vmatpush1.bf16.msra.mxu0 %v1075
      %1176 = vmatprep.subr.bf16.mxu0 %v1069
      %1177 = vmatpush1.bf16.msra.mxu0 %v1068
      %1178 = vmatprep.subr.bf16.mxu0 %v1062
      %1179 = vmatpush1.bf16.msra.mxu0 %v1061
      %1180 = vmatprep.subr.bf16.mxu0 %v1055
      %1181 = vmatpush1.bf16.msra.mxu0 %v1054
      %1182 = vmatprep.subr.bf16.mxu0 %v1048
      %1183 = vmatpush1.bf16.msra.mxu0 %v1047
      %1184 = vmatprep.subr.bf16.mxu0 %v1041
      %1185 = vmatpush1.bf16.msra.mxu0 %v1040
      %1186 = vmatprep.subr.bf16.mxu0 0
      %1187 = vmatpush2.bf16.msra.mxu0 0
      %1188 = vmatprep.subr.bf16.mxu0 0
      %1189 = vmatpush2.bf16.msra.mxu0 0
      %1190 = vmatprep.subr.bf16.mxu0 0
      %1191 = vmatpush2.bf16.msra.mxu0 0
      %1192 = vmatprep.subr.bf16.mxu0 0
      %1193 = vmatpush2.bf16.msra.mxu0 0
      %1194 = vmatprep.subr.bf16.mxu0 0
      %1195 = vmatpush2.bf16.msra.mxu0 0
      %1196 = vmatprep.subr.bf16.mxu0 0
      %1197 = vmatpush2.bf16.msra.mxu0 0
      %1198 = vmatprep.subr.bf16.mxu0 0
      %1199 = vmatpush2.bf16.msra.mxu0 0
      %1200 = vmatprep.subr.bf16.mxu0 %v1097
      %1201 = vmatpush2.bf16.msra.mxu0 %v1096
      %1202 = vmatprep.mubr.bf16.mxu0 %v1168
      %1203 = vmatmul.mubr.bf16.gmra.mxu0 %v839
      %v1204 = vpop.f32.mrf.mxu0
      %v1205 = vadd.f32 %v834, %v1204
      %v1206 = vpop.f32.mrf.mxu0
      %v1207 = vadd.f32 %v834, %v1206
      %v1208 = vpop.f32.mrf.mxu0
      %v1209 = vpop.f32.mrf.mxu0
      %1210 = vdwg.mxu0
      %1211 = vmatprep.subr.bf16.mxu0 %v1092
      %1212 = vmatpush1.bf16.msra.mxu0 %v1091
      %1213 = vmatprep.subr.bf16.mxu0 %v1085
      %1214 = vmatpush1.bf16.msra.mxu0 %v1084
      %1215 = vmatprep.subr.bf16.mxu0 %v1078
      %1216 = vmatpush1.bf16.msra.mxu0 %v1077
      %1217 = vmatprep.subr.bf16.mxu0 %v1071
      %1218 = vmatpush1.bf16.msra.mxu0 %v1070
      %1219 = vmatprep.subr.bf16.mxu0 %v1064
      %1220 = vmatpush1.bf16.msra.mxu0 %v1063
      %1221 = vmatprep.subr.bf16.mxu0 %v1057
      %1222 = vmatpush1.bf16.msra.mxu0 %v1056
      %1223 = vmatprep.subr.bf16.mxu0 %v1050
      %1224 = vmatpush1.bf16.msra.mxu0 %v1049
      %1225 = vmatprep.subr.bf16.mxu0 %v1043
      %1226 = vmatpush1.bf16.msra.mxu0 %v1042
      %1227 = vmatprep.subr.bf16.mxu0 0
      %1228 = vmatpush2.bf16.msra.mxu0 0
      %1229 = vmatprep.subr.bf16.mxu0 0
      %1230 = vmatpush2.bf16.msra.mxu0 0
      %1231 = vmatprep.subr.bf16.mxu0 0
      %1232 = vmatpush2.bf16.msra.mxu0 0
      %1233 = vmatprep.subr.bf16.mxu0 0
      %1234 = vmatpush2.bf16.msra.mxu0 0
      %1235 = vmatprep.subr.bf16.mxu0 0
      %1236 = vmatpush2.bf16.msra.mxu0 0
      %1237 = vmatprep.subr.bf16.mxu0 0
      %1238 = vmatpush2.bf16.msra.mxu0 0
      %1239 = vmatprep.subr.bf16.mxu0 0
      %1240 = vmatpush2.bf16.msra.mxu0 0
      %1241 = vmatprep.subr.bf16.mxu0 %v1099
      %1242 = vmatpush2.bf16.msra.mxu0 %v1098
      %1243 = vmatprep.mubr.bf16.mxu0 %v1168
      %1244 = vmatmul.mubr.bf16.gmra.mxu0 %v839
      %v1245 = vpop.f32.mrf.mxu0
      %v1246 = vadd.f32 %v834, %v1245
      %v1247 = vpop.f32.mrf.mxu0
      %v1248 = vadd.f32 %v834, %v1247
      %v1249 = vpop.f32.mrf.mxu0
      %v1250 = vpop.f32.mrf.mxu0
      %1251 = vdwg.mxu0
      %1252 = vmatprep.subr.bf16.mxu0 %v1094
      %1253 = vmatpush1.bf16.msra.mxu0 %v1093
      %1254 = vmatprep.subr.bf16.mxu0 %v1087
      %1255 = vmatpush1.bf16.msra.mxu0 %v1086
      %1256 = vmatprep.subr.bf16.mxu0 %v1080
      %1257 = vmatpush1.bf16.msra.mxu0 %v1079
      %1258 = vmatprep.subr.bf16.mxu0 %v1073
      %1259 = vmatpush1.bf16.msra.mxu0 %v1072
      %1260 = vmatprep.subr.bf16.mxu0 %v1066
      %1261 = vmatpush1.bf16.msra.mxu0 %v1065
      %1262 = vmatprep.subr.bf16.mxu0 %v1059
      %1263 = vmatpush1.bf16.msra.mxu0 %v1058
      %1264 = vmatprep.subr.bf16.mxu0 %v1052
      %1265 = vmatpush1.bf16.msra.mxu0 %v1051
      %1266 = vmatprep.subr.bf16.mxu0 %v1045
      %1267 = vmatpush1.bf16.msra.mxu0 %v1044
      %1268 = vmatprep.subr.bf16.mxu0 0
      %1269 = vmatpush2.bf16.msra.mxu0 0
      %1270 = vmatprep.subr.bf16.mxu0 0
      %1271 = vmatpush2.bf16.msra.mxu0 0
      %1272 = vmatprep.subr.bf16.mxu0 0
      %1273 = vmatpush2.bf16.msra.mxu0 0
      %1274 = vmatprep.subr.bf16.mxu0 0
      %1275 = vmatpush2.bf16.msra.mxu0 0
      %1276 = vmatprep.subr.bf16.mxu0 0
      %1277 = vmatpush2.bf16.msra.mxu0 0
      %1278 = vmatprep.subr.bf16.mxu0 0
      %1279 = vmatpush2.bf16.msra.mxu0 0
      %1280 = vmatprep.subr.bf16.mxu0 0
      %1281 = vmatpush2.bf16.msra.mxu0 0
      %1282 = vmatprep.subr.bf16.mxu0 %v1101
      %1283 = vmatpush2.bf16.msra.mxu0 %v1100
      %1284 = vmatprep.mubr.bf16.mxu0 %v1168
      %1285 = vmatmul.mubr.bf16.gmra.mxu0 %v839
      %v1286 = vpop.f32.mrf.mxu0
      %v1287 = vadd.f32 %v834, %v1286
      %v1288 = vpop.f32.mrf.mxu0
      %v1289 = vadd.f32 %v834, %v1288
      %v1290 = vpop.f32.mrf.mxu0
      %v1291 = vpop.f32.mrf.mxu0
      %1292 = vdwg.mxu0
      %1293 = vmatprep.subr.bf16.mxu0 0
      %1294 = vmatpush1.bf16.msra.mxu0 %v1095
      %1295 = vmatprep.subr.bf16.mxu0 0
      %1296 = vmatpush1.bf16.msra.mxu0 %v1088
      %1297 = vmatprep.subr.bf16.mxu0 0
      %1298 = vmatpush1.bf16.msra.mxu0 %v1081
      %1299 = vmatprep.subr.bf16.mxu0 0
      %1300 = vmatpush1.bf16.msra.mxu0 %v1074
      %1301 = vmatprep.subr.bf16.mxu0 0
      %1302 = vmatpush1.bf16.msra.mxu0 %v1067
      %1303 = vmatprep.subr.bf16.mxu0 0
      %1304 = vmatpush1.bf16.msra.mxu0 %v1060
      %1305 = vmatprep.subr.bf16.mxu0 0
      %1306 = vmatpush1.bf16.msra.mxu0 %v1053
      %1307 = vmatprep.subr.bf16.mxu0 0
      %1308 = vmatpush1.bf16.msra.mxu0 %v1046
      %1309 = vmatprep.subr.bf16.mxu0 0
      %1310 = vmatpush2.bf16.msra.mxu0 0
      %1311 = vmatprep.subr.bf16.mxu0 0
      %1312 = vmatpush2.bf16.msra.mxu0 0
      %1313 = vmatprep.subr.bf16.mxu0 0
      %1314 = vmatpush2.bf16.msra.mxu0 0
      %1315 = vmatprep.subr.bf16.mxu0 0
      %1316 = vmatpush2.bf16.msra.mxu0 0
      %1317 = vmatprep.subr.bf16.mxu0 0
      %1318 = vmatpush2.bf16.msra.mxu0 0
      %1319 = vmatprep.subr.bf16.mxu0 0
      %1320 = vmatpush2.bf16.msra.mxu0 0
      %1321 = vmatprep.subr.bf16.mxu0 0
      %1322 = vmatpush2.bf16.msra.mxu0 0
      %1323 = vmatprep.subr.bf16.mxu0 0
      %1324 = vmatpush2.bf16.msra.mxu0 %v1102
      %1325 = vmatprep.mubr.bf16.mxu0 %v1168
      %1326 = vmatmul.mubr.bf16.gmra.mxu0 %v839
      %v1327 = vpop.f32.mrf.mxu0
      %v1328 = vadd.f32 %v834, %v1327
      %v1329 = vpop.f32.mrf.mxu0
      %v1330 = vpop.f32.mrf.mxu0
      %v1331 = vpop.f32.mrf.mxu0
      %1332 = vdwg.mxu0
      %v1333 = vmax.f32 %v1205, 0.0
      %v1334 = vmax.f32 %v1207, 0.0
      %v1335 = vmax.f32 %v1246, 0.0
      %v1336 = vmax.f32 %v1248, 0.0
      %v1337 = vmax.f32 %v1287, 0.0
      %v1338 = vmax.f32 %v1289, 0.0
      %v1339 = vmax.f32 %v1328, 0.0
      %1347 = vrot.lane.b32.xlu0 %v1333, 127
      %v1348 = vpop.permute.xlu0 %1347
      %1349 = vrot.lane.b32.xlu0 %v1334, 127
      %v1350 = vpop.permute.xlu0 %1349
      %1351 = vrot.lane.b32.xlu0 %v1335, 127
      %v1352 = vpop.permute.xlu0 %1351
      %1353 = vrot.lane.b32.xlu0 %v1336, 127
      %v1354 = vpop.permute.xlu0 %1353
      %1355 = vrot.lane.b32.xlu0 %v1337, 127
      %v1356 = vpop.permute.xlu0 %1355
      %1357 = vrot.lane.b32.xlu0 %v1338, 127
      %v1358 = vpop.permute.xlu0 %1357
      %1359 = vrot.lane.b32.xlu0 %v1339, 127
      %v1360 = vpop.permute.xlu0 %1359
      %vm1361 = vcmask 1039360
      %v1362 = vsel %vm1361, %v1348, %v1350
      %v1363 = vsel %vm1361, %v1350, %v1352
      %v1364 = vsel %vm1361, %v1352, %v1354
      %v1365 = vsel %vm1361, %v1354, %v1356
      %v1366 = vsel %vm1361, %v1356, %v1358
      %v1367 = vsel %vm1361, %v1358, %v1360
      %v1374 = vmax.f32 %v1333, %v1362
      %v1375 = vmax.f32 %v1334, %v1363
      %v1376 = vmax.f32 %v1335, %v1364
      %v1377 = vmax.f32 %v1336, %v1365
      %v1378 = vmax.f32 %v1337, %v1366
      %v1379 = vmax.f32 %v1338, %v1367
      %1380 = vrot.lane.b32.xlu0 %v1333, 115
      %v1381 = vpop.permute.xlu0 %1380
      %1382 = vrot.lane.b32.xlu0 %v1334, 115
      %v1383 = vpop.permute.xlu0 %1382
      %1384 = vrot.lane.b32.xlu0 %v1335, 115
      %v1385 = vpop.permute.xlu0 %1384
      %1386 = vrot.lane.b32.xlu0 %v1336, 115
      %v1387 = vpop.permute.xlu0 %1386
      %1388 = vrot.lane.b32.xlu0 %v1337, 115
      %v1389 = vpop.permute.xlu0 %1388
      %1390 = vrot.lane.b32.xlu0 %v1338, 115
      %v1391 = vpop.permute.xlu0 %1390
      %1392 = vrot.lane.b32.xlu0 %v1339, 115
      %v1393 = vpop.permute.xlu0 %1392
      %vm1394 = vcmask 941056
      %v1395 = vsel %vm1394, %v1381, %v1383
      %v1396 = vsel %vm1394, %v1383, %v1385
      %v1397 = vsel %vm1394, %v1385, %v1387
      %v1398 = vsel %vm1394, %v1387, %v1389
      %v1399 = vsel %vm1394, %v1389, %v1391
      %v1400 = vsel %vm1394, %v1391, %v1393
      %v1407 = vmax.f32 %v1374, %v1395
      %v1408 = vmax.f32 %v1375, %v1396
      %v1409 = vmax.f32 %v1376, %v1397
      %v1410 = vmax.f32 %v1377, %v1398
      %v1411 = vmax.f32 %v1378, %v1399
      %v1412 = vmax.f32 %v1379, %v1400
      %1413 = vrot.lane.b32.xlu0 %v1333, 114
      %v1414 = vpop.permute.xlu0 %1413
      %1415 = vrot.lane.b32.xlu0 %v1334, 114
      %v1416 = vpop.permute.xlu0 %1415
      %1417 = vrot.lane.b32.xlu0 %v1335, 114
      %v1418 = vpop.permute.xlu0 %1417
      %1419 = vrot.lane.b32.xlu0 %v1336, 114
      %v1420 = vpop.permute.xlu0 %1419
      %1421 = vrot.lane.b32.xlu0 %v1337, 114
      %v1422 = vpop.permute.xlu0 %1421
      %1423 = vrot.lane.b32.xlu0 %v1338, 114
      %v1424 = vpop.permute.xlu0 %1423
      %1425 = vrot.lane.b32.xlu0 %v1339, 114
      %v1426 = vpop.permute.xlu0 %1425
      %vm1427 = vcmask 932864
      %v1428 = vsel %vm1427, %v1414, %v1416
      %v1429 = vsel %vm1427, %v1416, %v1418
      %v1430 = vsel %vm1427, %v1418, %v1420
      %v1431 = vsel %vm1427, %v1420, %v1422
      %v1432 = vsel %vm1427, %v1422, %v1424
      %v1433 = vsel %vm1427, %v1424, %v1426
      %v1440 = vmax.f32 %v1407, %v1428
      %v1441 = vmax.f32 %v1408, %v1429
      %v1442 = vmax.f32 %v1409, %v1430
      %v1443 = vmax.f32 %v1410, %v1431
      %v1444 = vmax.f32 %v1411, %v1432
      %v1445 = vmax.f32 %v1412, %v1433
      %v1446 = vpack.c.bf16 %v1440, %v1440
      %v1447 = vpack.c.bf16 %v1441, %v1441
      %v1448 = vpack.c.bf16 %v1442, %v1442
      %v1449 = vpack.c.bf16 %v1443, %v1443
      %v1450 = vpack.c.bf16 %v1444, %v1444
      %v1451 = vpack.c.bf16 %v1445, %v1445
      %v1458 = vunpack.c.l.b16 %v1446
      %v1459 = vunpack.c.l.b16 %v1447
      %v1460 = vunpack.c.l.b16 %v1448
      %v1461 = vunpack.c.l.b16 %v1449
      %v1462 = vunpack.c.l.b16 %v1450
      %v1463 = vunpack.c.l.b16 %v1451
      %v1464 = vpack.c.b16 %v1459, %v1458
      %v1465 = vpack.c.b16 %v1461, %v1460
      %v1466 = vpack.c.b16 %v1463, %v1462
      %1470 = vst [vmem:[%s170] sm:$0xff] %v1464
      %1471 = vst [vmem:[%s170 + $0x8] sm:$0xff] %v1465
      %1472 = vst [vmem:[%s170 + $0x10] sm:$0xff] %v1466
      %p1473 = scmp.lt.s32.totalorder %s14, 1
      %s1474 = scalar_select %p1473, %s14, 1
      %s1475 = smul.addr %s1474, 6
      %s1476 = smul.addr %s1475, 4
      %s1477 = scalar_lea.vmem %s3, %s1476
      // Predicated region
      $region33: #{slimnet_forward.4} parent=31 // pred_check
        %p1478 = pneg %p100
      $region34: #{slimnet_forward.4} parent=31 // pred_check_branch
        %1480 = sbr.rel (%p1478) target = $region36
      $region35: #{slimnet_forward.4} parent=31 // pred_region
        _
      $region36: #{slimnet_forward.4} parent=31 // pred_fallthru
        _
    $region32: #{slimnet_forward.4} parent=5 // pred_fallthru
      _
    %p1481 = scmp.le.s32.totalorder 2, %s9
    // Predicated region
    $region37: #{slimnet_forward.4} parent=5 // pred_check
      %p1482 = pneg %p1481
    $region38: #{slimnet_forward.4} parent=5 // pred_check_branch
      %1484 = sbr.rel (%p1482) target = $region40
    $region39: #{slimnet_forward.4} parent=5 // pred_region
      %s1485 = ssub.s32 %s9, 2
      // Predicated region
      $region41: #{slimnet_forward.4} parent=39 // pred_check
        %p1486 = pneg %p106
      $region42: #{slimnet_forward.4} parent=39 // pred_check_branch
        %1488 = sbr.rel (%p1486) target = $region44
      $region43: #{slimnet_forward.4} parent=39 // pred_region
        %p1489 = scmp.lt.s32.totalorder %s15, 1
        %s1490 = scalar_select %p1489, %s15, 1
        %s1491 = smul.addr %s1490, 6
        %s1492 = smul.addr %s1491, 4
        %s1493 = scalar_lea.vmem %s3, %s1492
      $region44: #{slimnet_forward.4} parent=39 // pred_fallthru
        _
    $region40: #{slimnet_forward.4} parent=5 // pred_fallthru
      _
  $region6: #{slimnet_forward.4} parent=0 // loop_footer
    %s13 = sadd.s32 1, %s9
  $region7: #{slimnet_forward.4} parent=0 // loop_footer_branch
    %8 = sbr.rel target = $region3
  $region8: #{slimnet_forward.4} parent=0 // loop_exit
    _

// kernel: slimnet_forward.5
$region0: #{slimnet_forward.5}
  #allocation0 [shape = 'u32[]', space=smem, size = 0x4, offset = 0x4, fixed_abs, tag = 'smem constant byte address 0x4 - core index']
  #allocation1 [shape = 'u32[144,128]{1,0:T(1,128)}', space=vmem, size = 0x12000, scoped, tag = 'internal scratch']
  #allocation2 [shape = 'bf16[144,896]{1,0:T(8,128)(2,1)}', space=vmem, size = 0x3f000, scoped, tag = 'scratch operand']
  %s0 = inlined_call_operand.vmem [shape: bf16[2,16,1024], index: 0, kind: input, shape index: {}]
  %s1 = inlined_call_operand.vmem [shape: bf16[8,144], index: 1, kind: input, shape index: {}]
  %s2 = inlined_call_operand.vmem [shape: f32[8,1], index: 2, kind: input, shape index: {}]
  %s3 = inlined_call_operand.vmem [shape: bf16[8,8], index: 3, kind: input, shape index: {}]
  %s4 = inlined_call_operand.vmem [shape: f32[8,1], index: 4, kind: input, shape index: {}]
  %s5 = inlined_call_operand.vmem [shape: bf16[2,8,896], index: 5, kind: output, shape index: {}]
  %s6 = sld [smem:[#allocation0]]
  $region53: #{slimnet_forward.5} parent=0
    _
  %s8 = ssub.s32 1, %s6
  %s9 = scalar_select 0, %s8, %s6
  loop: start=0, step=1, limit=4
  $region2: #{slimnet_forward.5} parent=0 // loop_pre_header
    _
  $region3: #{slimnet_forward.5} parent=0 // loop_header
    %s11 = sphi 0, %s15
    %p12 = scmp.ge.s32.totalorder %s11, 4
    %s21 = sphi 0, %s23
    %s24 = sphi 0, %s21
    %s25 = sphi 0, %s24
    %s41 = sphi 0, %s25
    %s45 = sphi 0, %s45
    %s47 = sphi 0, %s45
    %s48 = sphi 0, %s47
    %s62 = sphi 0, %s48
    %s66 = sphi 0, %s66
    %s68 = sphi 0, %s66
    %s69 = sphi 0, %s68
    %s83 = sphi 0, %s69
    %s87 = sphi 0, %s87
    %s89 = sphi 0, %s87
    %s90 = sphi 0, %s89
    %s104 = sphi 0, %s90
    %s108 = sphi 0, %s108
    %s110 = sphi 0, %s108
    %s111 = sphi 0, %s110
    %s125 = sphi 0, %s111
    %s131 = sphi 0, %s133
    %s134 = sphi 0, %s131
    %s135 = sphi 0, %s134
    %s151 = sphi 0, %s135
  $region4: #{slimnet_forward.5} parent=0 // loop_header_branch
    %14 = sbr.rel (%p12) target = $region8
  $region5: #{slimnet_forward.5} parent=0 // loop_body
    %s16 = ssub.s32 %s11, 1
    %s17 = ssub.s32 %s11, 2
    %s18 = sadd.s32 %s11, 1
    %s19 = ssub.s32 %s11, %s18
    %p20 = scmp.eq.s32.totalorder %s19, 0
    %s22 = sadd.s32 %s21, 1
    %s23 = scalar_select %p20, %s21, %s22
    %p26 = pneg %p20
    %p27 = scmp.eq.s32.totalorder %s11, 1
    %p28 = por %p26, %p27
    %p29 = scmp.ne.s32.totalorder %s21, %s24
    %p30 = scmp.eq.s32.totalorder %s11, 0
    %p31 = por %p29, %p30
    %p32 = scmp.ne.s32.totalorder %s21, %s24
    %p33 = scmp.eq.s32.totalorder %s16, 1
    %p34 = por %p32, %p33
    %p35 = scmp.ne.s32.totalorder %s24, %s25
    %p36 = scmp.eq.s32.totalorder %s16, 0
    %p37 = por %p35, %p36
    %p38 = scmp.ne.s32.totalorder %s24, %s25
    %p39 = scmp.eq.s32.totalorder %s17, 1
    %p40 = por %p38, %p39
    %p42 = scmp.ne.s32.totalorder %s25, %s41
    %p43 = scmp.eq.s32.totalorder %s17, 0
    %p44 = por %p42, %p43
    %s46 = sadd.s32 %s45, 1
    %p49 = scmp.eq.s32.totalorder %s11, 1
    %p50 = scmp.ne.s32.totalorder %s45, %s47
    %p51 = scmp.eq.s32.totalorder %s11, 0
    %p52 = por %p50, %p51
    %p53 = scmp.ne.s32.totalorder %s45, %s47
    %p54 = scmp.eq.s32.totalorder %s16, 1
    %p55 = por %p53, %p54
    %p56 = scmp.ne.s32.totalorder %s47, %s48
    %p57 = scmp.eq.s32.totalorder %s16, 0
    %p58 = por %p56, %p57
    %p59 = scmp.ne.s32.totalorder %s47, %s48
    %p60 = scmp.eq.s32.totalorder %s17, 1
    %p61 = por %p59, %p60
    %p63 = scmp.ne.s32.totalorder %s48, %s62
    %p64 = scmp.eq.s32.totalorder %s17, 0
    %p65 = por %p63, %p64
    %s67 = sadd.s32 %s66, 1
    %p70 = scmp.eq.s32.totalorder %s11, 1
    %p71 = scmp.ne.s32.totalorder %s66, %s68
    %p72 = scmp.eq.s32.totalorder %s11, 0
    %p73 = por %p71, %p72
    %p74 = scmp.ne.s32.totalorder %s66, %s68
    %p75 = scmp.eq.s32.totalorder %s16, 1
    %p76 = por %p74, %p75
    %p77 = scmp.ne.s32.totalorder %s68, %s69
    %p78 = scmp.eq.s32.totalorder %s16, 0
    %p79 = por %p77, %p78
    %p80 = scmp.ne.s32.totalorder %s68, %s69
    %p81 = scmp.eq.s32.totalorder %s17, 1
    %p82 = por %p80, %p81
    %p84 = scmp.ne.s32.totalorder %s69, %s83
    %p85 = scmp.eq.s32.totalorder %s17, 0
    %p86 = por %p84, %p85
    %s88 = sadd.s32 %s87, 1
    %p91 = scmp.eq.s32.totalorder %s11, 1
    %p92 = scmp.ne.s32.totalorder %s87, %s89
    %p93 = scmp.eq.s32.totalorder %s11, 0
    %p94 = por %p92, %p93
    %p95 = scmp.ne.s32.totalorder %s87, %s89
    %p96 = scmp.eq.s32.totalorder %s16, 1
    %p97 = por %p95, %p96
    %p98 = scmp.ne.s32.totalorder %s89, %s90
    %p99 = scmp.eq.s32.totalorder %s16, 0
    %p100 = por %p98, %p99
    %p101 = scmp.ne.s32.totalorder %s89, %s90
    %p102 = scmp.eq.s32.totalorder %s17, 1
    %p103 = por %p101, %p102
    %p105 = scmp.ne.s32.totalorder %s90, %s104
    %p106 = scmp.eq.s32.totalorder %s17, 0
    %p107 = por %p105, %p106
    %s109 = sadd.s32 %s108, 1
    %p112 = scmp.eq.s32.totalorder %s11, 1
    %p113 = scmp.ne.s32.totalorder %s108, %s110
    %p114 = scmp.eq.s32.totalorder %s11, 0
    %p115 = por %p113, %p114
    %p116 = scmp.ne.s32.totalorder %s108, %s110
    %p117 = scmp.eq.s32.totalorder %s16, 1
    %p118 = por %p116, %p117
    %p119 = scmp.ne.s32.totalorder %s110, %s111
    %p120 = scmp.eq.s32.totalorder %s16, 0
    %p121 = por %p119, %p120
    %p122 = scmp.ne.s32.totalorder %s110, %s111
    %p123 = scmp.eq.s32.totalorder %s17, 1
    %p124 = por %p122, %p123
    %p126 = scmp.ne.s32.totalorder %s111, %s125
    %p127 = scmp.eq.s32.totalorder %s17, 0
    %p128 = por %p126, %p127
    %s129 = ssub.s32 %s11, %s18
    %p130 = scmp.eq.s32.totalorder %s129, 0
    %s132 = sadd.s32 %s131, 1
    %s133 = scalar_select %p130, %s131, %s132
    %p136 = pneg %p130
    %p137 = scmp.eq.s32.totalorder %s11, 1
    %p138 = por %p136, %p137
    %p139 = scmp.ne.s32.totalorder %s131, %s134
    %p140 = scmp.eq.s32.totalorder %s11, 0
    %p141 = por %p139, %p140
    %p142 = scmp.ne.s32.totalorder %s131, %s134
    %p143 = scmp.eq.s32.totalorder %s16, 1
    %p144 = por %p142, %p143
    %p145 = scmp.ne.s32.totalorder %s134, %s135
    %p146 = scmp.eq.s32.totalorder %s16, 0
    %p147 = por %p145, %p146
    %p148 = scmp.ne.s32.totalorder %s134, %s135
    %p149 = scmp.eq.s32.totalorder %s17, 1
    %p150 = por %p148, %p149
    %p152 = scmp.ne.s32.totalorder %s135, %s151
    %p153 = scmp.eq.s32.totalorder %s17, 0
    %p154 = por %p152, %p153
    %p155 = scmp.le.s32.totalorder 1, %s11
    %p156 = scmp.lt.s32.totalorder %s11, 3
    %p157 = pnand %p155, %p156
    %p158 = pneg %p157
    // Predicated region
    $region9: #{slimnet_forward.5} parent=5 // pred_check
      _
    $region10: #{slimnet_forward.5} parent=5 // pred_check_branch
      %160 = sbr.rel (%p157) target = $region12
    $region11: #{slimnet_forward.5} parent=5 // pred_region
      %s161 = ssub.s32 %s11, 1
      // Predicated region
      $region13: #{slimnet_forward.5} parent=11 // pred_check
        %p162 = pneg %p58
      $region14: #{slimnet_forward.5} parent=11 // pred_check_branch
        %164 = sbr.rel (%p162) target = $region16
      $region15: #{slimnet_forward.5} parent=11 // pred_region
        _
      $region16: #{slimnet_forward.5} parent=11 // pred_fallthru
        _
      // Predicated region
      $region17: #{slimnet_forward.5} parent=11 // pred_check
        %p165 = pneg %p79
      $region18: #{slimnet_forward.5} parent=11 // pred_check_branch
        %167 = sbr.rel (%p165) target = $region20
      $region19: #{slimnet_forward.5} parent=11 // pred_region
        _
      $region20: #{slimnet_forward.5} parent=11 // pred_fallthru
        _
      // Predicated region
      $region21: #{slimnet_forward.5} parent=11 // pred_check
        %p168 = pneg %p100
      $region22: #{slimnet_forward.5} parent=11 // pred_check_branch
        %170 = sbr.rel (%p168) target = $region24
      $region23: #{slimnet_forward.5} parent=11 // pred_region
        _
      $region24: #{slimnet_forward.5} parent=11 // pred_fallthru
        _
      // Predicated region
      $region25: #{slimnet_forward.5} parent=11 // pred_check
        %p171 = pneg %p121
      $region26: #{slimnet_forward.5} parent=11 // pred_check_branch
        %173 = sbr.rel (%p171) target = $region28
      $region27: #{slimnet_forward.5} parent=11 // pred_region
        _
      $region28: #{slimnet_forward.5} parent=11 // pred_fallthru
        _
    $region12: #{slimnet_forward.5} parent=5 // pred_fallthru
      _
    %p174 = scmp.lt.s32.totalorder %s11, 2
    // Predicated region
    $region29: #{slimnet_forward.5} parent=5 // pred_check
      %p175 = pneg %p174
    $region30: #{slimnet_forward.5} parent=5 // pred_check_branch
      %177 = sbr.rel (%p175) target = $region32
    $region31: #{slimnet_forward.5} parent=5 // pred_region
      // Predicated region
      $region33: #{slimnet_forward.5} parent=31 // pred_check
        %p178 = pneg %p31
      $region34: #{slimnet_forward.5} parent=31 // pred_check_branch
        %180 = sbr.rel (%p178) target = $region36
      $region35: #{slimnet_forward.5} parent=31 // pred_region
        %p181 = scmp.lt.s32.totalorder %s11, 1
        %s182 = scalar_select %p181, %s11, 1
        %s183 = smul.addr %s182, 16
        %s184 = smul.addr %s183, 4
        %s185 = scalar_lea.vmem %s0, %s184
      $region36: #{slimnet_forward.5} parent=31 // pred_fallthru
        _
    $region32: #{slimnet_forward.5} parent=5 // pred_fallthru
      _
    %p186 = scmp.le.s32.totalorder 1, %s11
    %p187 = scmp.lt.s32.totalorder %s11, 3
    %p188 = pnand %p186, %p187
    %p189 = pneg %p188
    // Predicated region
    $region37: #{slimnet_forward.5} parent=5 // pred_check
      _
    $region38: #{slimnet_forward.5} parent=5 // pred_check_branch
      %191 = sbr.rel (%p188) target = $region40
    $region39: #{slimnet_forward.5} parent=5 // pred_region
      %s192 = ssub.s32 %s11, 1
      %p193 = scmp.lt.s32.totalorder %s16, 1
      %s194 = scalar_select %p193, %s16, 1
      %s195 = smul.addr %s194, 16
      %s196 = smul.addr %s195, 4
      %s197 = scalar_lea.vmem %s0, %s196
      %p198 = pneg %p37
      %p199 = pneg %p34
      %p200 = pneg %p58
      %p201 = pneg %p55
      %p202 = pneg %p79
      %p203 = pneg %p76
      %p204 = pneg %p100
      %p205 = pneg %p97
      %p206 = pneg %p121
      %p207 = pneg %p118
      %p208 = pneg %p147
      %p209 = pneg %p144
      %p210 = scmp.lt.s32.totalorder %s16, 1
      %s211 = scalar_select %p210, %s16, 1
      %s212 = smul.addr %s211, 7
      %s213 = smul.addr %s212, 4
      %s214 = scalar_lea.vmem %s5, %s213
      %p215 = scmp.lt.s32.totalorder %s16, 1
      %s216 = scalar_select %p215, %s16, 1
      %s217 = smul.addr %s216, 16
      %s218 = smul.addr %s217, 4
      %s219 = scalar_lea.vmem %s0, %s218
      %p220 = scmp.lt.s32.totalorder %s16, 1
      %s221 = scalar_select %p220, %s16, 1
      %s222 = smul.addr %s221, 7
      %s223 = smul.addr %s222, 4
      %s224 = scalar_lea.vmem %s5, %s223
      %v226 = vld [vmem:[%s219] sm:$0xff]
      %v227 = vld [vmem:[%s219 + $0x8] sm:$0xff]
      %v228 = vld [vmem:[%s219 + $0x10] sm:$0xff]
      %v229 = vld [vmem:[%s219 + $0x18] sm:$0xf]
      %v230 = vld [vmem:[%s219 + $0x20] sm:$0xff]
      %v231 = vld [vmem:[%s219 + $0x28] sm:$0xff]
      %v232 = vld [vmem:[%s219 + $0x30] sm:$0xff]
      %v233 = vld [vmem:[%s219 + $0x38] sm:$0xf]
      %234 = vst [vmem:[#allocation2] sm:$0xff] %v226
      %235 = vst [vmem:[#allocation2 + $0x8] sm:$0xff] %v227
      %236 = vst [vmem:[#allocation2 + $0x10] sm:$0xff] %v228
      %237 = vst [vmem:[#allocation2 + $0x18] sm:$0xf] %v229
      %238 = vst [vmem:[#allocation2 + $0x1c] sm:$0xff] %v230
      %239 = vst [vmem:[#allocation2 + $0x24] sm:$0xff] %v231
      %240 = vst [vmem:[#allocation2 + $0x2c] sm:$0xff] %v232
      %241 = vst [vmem:[#allocation2 + $0x34] sm:$0xf] %v233
      %v242 = vld [vmem:[%s219] sm:$0xff]
      %v243 = vld [vmem:[%s219 + $0x8] sm:$0xff]
      %v244 = vld [vmem:[%s219 + $0x10] sm:$0xff]
      %v245 = vld [vmem:[%s219 + $0x18] sm:$0xff]
      %v246 = vld [vmem:[%s219 + $0x20] sm:$0xff]
      %v247 = vld [vmem:[%s219 + $0x28] sm:$0xff]
      %v248 = vld [vmem:[%s219 + $0x30] sm:$0xff]
      %v249 = vld [vmem:[%s219 + $0x38] sm:$0xff]
      %258 = vrot.lane.b32.xlu0 %v242, 127
      %v259 = vpop.permute.xlu0 %258
      %260 = vrot.lane.b32.xlu0 %v243, 127
      %v261 = vpop.permute.xlu0 %260
      %262 = vrot.lane.b32.xlu0 %v244, 127
      %v263 = vpop.permute.xlu0 %262
      %264 = vrot.lane.b32.xlu0 %v245, 127
      %v265 = vpop.permute.xlu0 %264
      %266 = vrot.lane.b32.xlu0 %v246, 127
      %v267 = vpop.permute.xlu0 %266
      %268 = vrot.lane.b32.xlu0 %v247, 127
      %v269 = vpop.permute.xlu0 %268
      %270 = vrot.lane.b32.xlu0 %v248, 127
      %v271 = vpop.permute.xlu0 %270
      %272 = vrot.lane.b32.xlu0 %v249, 127
      %v273 = vpop.permute.xlu0 %272
      %v274 = vrot.slane %v259, 4
      %v275 = vrot.slane %v261, 4
      %v276 = vrot.slane %v263, 4
      %v277 = vrot.slane %v265, 4
      %v278 = vrot.slane %v267, 4
      %v279 = vrot.slane %v269, 4
      %v280 = vrot.slane %v271, 4
      %v281 = vrot.slane %v273, 4
      %vm282 = vcmask 1043456
      %v283 = vsel %vm282, %v274, %v275
      %vm284 = vcmask 1039360
      %v285 = vsel %vm284, %v259, %v283
      %v286 = vsel %vm282, %v275, %v276
      %v287 = vsel %vm284, %v261, %v286
      %v288 = vsel %vm282, %v276, %v277
      %v289 = vsel %vm284, %v263, %v288
      %v290 = vsel %vm284, %v265, %v277
      %v291 = vsel %vm282, %v278, %v279
      %v292 = vsel %vm284, %v267, %v291
      %v293 = vsel %vm282, %v279, %v280
      %v294 = vsel %vm284, %v269, %v293
      %v295 = vsel %vm282, %v280, %v281
      %v296 = vsel %vm284, %v271, %v295
      %v297 = vsel %vm284, %v273, %v281
      %306 = vst [vmem:[#allocation2 + $0x38] sm:$0xff] %v285
      %307 = vst [vmem:[#allocation2 + $0x40] sm:$0xff] %v287
      %308 = vst [vmem:[#allocation2 + $0x48] sm:$0xff] %v289
      %309 = vst [vmem:[#allocation2 + $0x50] sm:$0xf] %v290
      %310 = vst [vmem:[#allocation2 + $0x54] sm:$0xff] %v292
      %311 = vst [vmem:[#allocation2 + $0x5c] sm:$0xff] %v294
      %312 = vst [vmem:[#allocation2 + $0x64] sm:$0xff] %v296
      %313 = vst [vmem:[#allocation2 + $0x6c] sm:$0xf] %v297
      %v314 = vld [vmem:[%s219] sm:$0xff]
      %v315 = vld [vmem:[%s219 + $0x8] sm:$0xff]
      %v316 = vld [vmem:[%s219 + $0x10] sm:$0xff]
      %v317 = vld [vmem:[%s219 + $0x18] sm:$0xff]
      %v318 = vld [vmem:[%s219 + $0x20] sm:$0xff]
      %v319 = vld [vmem:[%s219 + $0x28] sm:$0xff]
      %v320 = vld [vmem:[%s219 + $0x30] sm:$0xff]
      %v321 = vld [vmem:[%s219 + $0x38] sm:$0xff]
      %330 = vrot.lane.b32.xlu0 %v314, 126
      %v331 = vpop.permute.xlu0 %330
      %332 = vrot.lane.b32.xlu0 %v315, 126
      %v333 = vpop.permute.xlu0 %332
      %334 = vrot.lane.b32.xlu0 %v316, 126
      %v335 = vpop.permute.xlu0 %334
      %336 = vrot.lane.b32.xlu0 %v317, 126
      %v337 = vpop.permute.xlu0 %336
      %338 = vrot.lane.b32.xlu0 %v318, 126
      %v339 = vpop.permute.xlu0 %338
      %340 = vrot.lane.b32.xlu0 %v319, 126
      %v341 = vpop.permute.xlu0 %340
      %342 = vrot.lane.b32.xlu0 %v320, 126
      %v343 = vpop.permute.xlu0 %342
      %344 = vrot.lane.b32.xlu0 %v321, 126
      %v345 = vpop.permute.xlu0 %344
      %v346 = vrot.slane %v331, 4
      %v347 = vrot.slane %v333, 4
      %v348 = vrot.slane %v335, 4
      %v349 = vrot.slane %v337, 4
      %v350 = vrot.slane %v339, 4
      %v351 = vrot.slane %v341, 4
      %v352 = vrot.slane %v343, 4
      %v353 = vrot.slane %v345, 4
      %v354 = vsel %vm282, %v346, %v347
      %vm355 = vcmask 1031168
      %v356 = vsel %vm355, %v331, %v354
      %v357 = vsel %vm282, %v347, %v348
      %v358 = vsel %vm355, %v333, %v357
      %v359 = vsel %vm282, %v348, %v349
      %v360 = vsel %vm355, %v335, %v359
      %v361 = vsel %vm355, %v337, %v349
      %v362 = vsel %vm282, %v350, %v351
      %v363 = vsel %vm355, %v339, %v362
      %v364 = vsel %vm282, %v351, %v352
      %v365 = vsel %vm355, %v341, %v364
      %v366 = vsel %vm282, %v352, %v353
      %v367 = vsel %vm355, %v343, %v366
      %v368 = vsel %vm355, %v345, %v353
      %377 = vst [vmem:[#allocation2 + $0x70] sm:$0xff] %v356
      %378 = vst [vmem:[#allocation2 + $0x78] sm:$0xff] %v358
      %379 = vst [vmem:[#allocation2 + $0x80] sm:$0xff] %v360
      %380 = vst [vmem:[#allocation2 + $0x88] sm:$0xf] %v361
      %381 = vst [vmem:[#allocation2 + $0x8c] sm:$0xff] %v363
      %382 = vst [vmem:[#allocation2 + $0x94] sm:$0xff] %v365
      %383 = vst [vmem:[#allocation2 + $0x9c] sm:$0xff] %v367
      %384 = vst [vmem:[#allocation2 + $0xa4] sm:$0xf] %v368
      %v385 = vld [vmem:[%s219] sm:$0xff]
      %v386 = vld [vmem:[%s219 + $0x8] sm:$0xff]
      %v387 = vld [vmem:[%s219 + $0x10] sm:$0xff]
      %v388 = vld [vmem:[%s219 + $0x18] sm:$0xff]
      %v389 = vld [vmem:[%s219 + $0x20] sm:$0xff]
      %v390 = vld [vmem:[%s219 + $0x28] sm:$0xff]
      %v391 = vld [vmem:[%s219 + $0x30] sm:$0xff]
      %v392 = vld [vmem:[%s219 + $0x38] sm:$0xff]
      %401 = vrot.lane.b32.xlu0 %v385, 121
      %v402 = vpop.permute.xlu0 %401
      %403 = vrot.lane.b32.xlu0 %v386, 121
      %v404 = vpop.permute.xlu0 %403
      %405 = vrot.lane.b32.xlu0 %v387, 121
      %v406 = vpop.permute.xlu0 %405
      %407 = vrot.lane.b32.xlu0 %v388, 121
      %v408 = vpop.permute.xlu0 %407
      %409 = vrot.lane.b32.xlu0 %v389, 121
      %v410 = vpop.permute.xlu0 %409
      %411 = vrot.lane.b32.xlu0 %v390, 121
      %v412 = vpop.permute.xlu0 %411
      %413 = vrot.lane.b32.xlu0 %v391, 121
      %v414 = vpop.permute.xlu0 %413
      %415 = vrot.lane.b32.xlu0 %v392, 121
      %v416 = vpop.permute.xlu0 %415
      %v417 = vrot.slane %v402, 4
      %v418 = vrot.slane %v404, 4
      %v419 = vrot.slane %v406, 4
      %v420 = vrot.slane %v408, 4
      %v421 = vrot.slane %v410, 4
      %v422 = vrot.slane %v412, 4
      %v423 = vrot.slane %v414, 4
      %v424 = vrot.slane %v416, 4
      %v425 = vsel %vm282, %v417, %v418
      %vm426 = vcmask 990208
      %v427 = vsel %vm426, %v402, %v425
      %v428 = vsel %vm282, %v418, %v419
      %v429 = vsel %vm426, %v404, %v428
      %v430 = vsel %vm282, %v419, %v420
      %v431 = vsel %vm426, %v406, %v430
      %v432 = vsel %vm426, %v408, %v420
      %v433 = vsel %vm282, %v421, %v422
      %v434 = vsel %vm426, %v410, %v433
      %v435 = vsel %vm282, %v422, %v423
      %v436 = vsel %vm426, %v412, %v435
      %v437 = vsel %vm282, %v423, %v424
      %v438 = vsel %vm426, %v414, %v437
      %v439 = vsel %vm426, %v416, %v424
      %448 = vst [vmem:[#allocation2 + $0xa8] sm:$0xff] %v427
      %449 = vst [vmem:[#allocation2 + $0xb0] sm:$0xff] %v429
      %450 = vst [vmem:[#allocation2 + $0xb8] sm:$0xff] %v431
      %451 = vst [vmem:[#allocation2 + $0xc0] sm:$0xf] %v432
      %452 = vst [vmem:[#allocation2 + $0xc4] sm:$0xff] %v434
      %453 = vst [vmem:[#allocation2 + $0xcc] sm:$0xff] %v436
      %454 = vst [vmem:[#allocation2 + $0xd4] sm:$0xff] %v438
      %455 = vst [vmem:[#allocation2 + $0xdc] sm:$0xf] %v439
      %v456 = vld [vmem:[%s219] sm:$0xff]
      %v457 = vld [vmem:[%s219 + $0x8] sm:$0xff]
      %v458 = vld [vmem:[%s219 + $0x10] sm:$0xff]
      %v459 = vld [vmem:[%s219 + $0x18] sm:$0xff]
      %v460 = vld [vmem:[%s219 + $0x20] sm:$0xff]
      %v461 = vld [vmem:[%s219 + $0x28] sm:$0xff]
      %v462 = vld [vmem:[%s219 + $0x30] sm:$0xff]
      %v463 = vld [vmem:[%s219 + $0x38] sm:$0xff]
      %472 = vrot.lane.b32.xlu0 %v456, 120
      %v473 = vpop.permute.xlu0 %472
      %474 = vrot.lane.b32.xlu0 %v457, 120
      %v475 = vpop.permute.xlu0 %474
      %476 = vrot.lane.b32.xlu0 %v458, 120
      %v477 = vpop.permute.xlu0 %476
      %478 = vrot.lane.b32.xlu0 %v459, 120
      %v479 = vpop.permute.xlu0 %478
      %480 = vrot.lane.b32.xlu0 %v460, 120
      %v481 = vpop.permute.xlu0 %480
      %482 = vrot.lane.b32.xlu0 %v461, 120
      %v483 = vpop.permute.xlu0 %482
      %484 = vrot.lane.b32.xlu0 %v462, 120
      %v485 = vpop.permute.xlu0 %484
      %486 = vrot.lane.b32.xlu0 %v463, 120
      %v487 = vpop.permute.xlu0 %486
      %v488 = vrot.slane %v473, 4
      %v489 = vrot.slane %v475, 4
      %v490 = vrot.slane %v477, 4
      %v491 = vrot.slane %v479, 4
      %v492 = vrot.slane %v481, 4
      %v493 = vrot.slane %v483, 4
      %v494 = vrot.slane %v485, 4
      %v495 = vrot.slane %v487, 4
      %v496 = vsel %vm282, %v488, %v489
      %vm497 = vcmask 982016
      %v498 = vsel %vm497, %v473, %v496
      %v499 = vsel %vm282, %v489, %v490
      %v500 = vsel %vm497, %v475, %v499
      %v501 = vsel %vm282, %v490, %v491
      %v502 = vsel %vm497, %v477, %v501
      %v503 = vsel %vm497, %v479, %v491
      %v504 = vsel %vm282, %v492, %v493
      %v505 = vsel %vm497, %v481, %v504
      %v506 = vsel %vm282, %v493, %v494
      %v507 = vsel %vm497, %v483, %v506
      %v508 = vsel %vm282, %v494, %v495
      %v509 = vsel %vm497, %v485, %v508
      %v510 = vsel %vm497, %v487, %v495
      %519 = vst [vmem:[#allocation2 + $0xe0] sm:$0xff] %v498
      %520 = vst [vmem:[#allocation2 + $0xe8] sm:$0xff] %v500
      %521 = vst [vmem:[#allocation2 + $0xf0] sm:$0xff] %v502
      %522 = vst [vmem:[#allocation2 + $0xf8] sm:$0xf] %v503
      %523 = vst [vmem:[#allocation2 + $0xfc] sm:$0xff] %v505
      %524 = vst [vmem:[#allocation2 + $0x104] sm:$0xff] %v507
      %525 = vst [vmem:[#allocation2 + $0x10c] sm:$0xff] %v509
      %526 = vst [vmem:[#allocation2 + $0x114] sm:$0xf] %v510
      %v527 = vld [vmem:[%s219] sm:$0xff]
      %v528 = vld [vmem:[%s219 + $0x8] sm:$0xff]
      %v529 = vld [vmem:[%s219 + $0x10] sm:$0xff]
      %v530 = vld [vmem:[%s219 + $0x18] sm:$0xff]
      %v531 = vld [vmem:[%s219 + $0x20] sm:$0xff]
      %v532 = vld [vmem:[%s219 + $0x28] sm:$0xff]
      %v533 = vld [vmem:[%s219 + $0x30] sm:$0xff]
      %v534 = vld [vmem:[%s219 + $0x38] sm:$0xff]
      %543 = vrot.lane.b32.xlu0 %v527, 119
      %v544 = vpop.permute.xlu0 %543
      %545 = vrot.lane.b32.xlu0 %v528, 119
      %v546 = vpop.permute.xlu0 %545
      %547 = vrot.lane.b32.xlu0 %v529, 119
      %v548 = vpop.permute.xlu0 %547
      %549 = vrot.lane.b32.xlu0 %v530, 119
      %v550 = vpop.permute.xlu0 %549
      %551 = vrot.lane.b32.xlu0 %v531, 119
      %v552 = vpop.permute.xlu0 %551
      %553 = vrot.lane.b32.xlu0 %v532, 119
      %v554 = vpop.permute.xlu0 %553
      %555 = vrot.lane.b32.xlu0 %v533, 119
      %v556 = vpop.permute.xlu0 %555
      %557 = vrot.lane.b32.xlu0 %v534, 119
      %v558 = vpop.permute.xlu0 %557
      %v559 = vrot.slane %v544, 4
      %v560 = vrot.slane %v546, 4
      %v561 = vrot.slane %v548, 4
      %v562 = vrot.slane %v550, 4
      %v563 = vrot.slane %v552, 4
      %v564 = vrot.slane %v554, 4
      %v565 = vrot.slane %v556, 4
      %v566 = vrot.slane %v558, 4
      %v567 = vsel %vm282, %v559, %v560
      %vm568 = vcmask 973824
      %v569 = vsel %vm568, %v544, %v567
      %v570 = vsel %vm282, %v560, %v561
      %v571 = vsel %vm568, %v546, %v570
      %v572 = vsel %vm282, %v561, %v562
      %v573 = vsel %vm568, %v548, %v572
      %v574 = vsel %vm568, %v550, %v562
      %v575 = vsel %vm282, %v563, %v564
      %v576 = vsel %vm568, %v552, %v575
      %v577 = vsel %vm282, %v564, %v565
      %v578 = vsel %vm568, %v554, %v577
      %v579 = vsel %vm282, %v565, %v566
      %v580 = vsel %vm568, %v556, %v579
      %v581 = vsel %vm568, %v558, %v566
      %590 = vst [vmem:[#allocation2 + $0x118] sm:$0xff] %v569
      %591 = vst [vmem:[#allocation2 + $0x120] sm:$0xff] %v571
      %592 = vst [vmem:[#allocation2 + $0x128] sm:$0xff] %v573
      %593 = vst [vmem:[#allocation2 + $0x130] sm:$0xf] %v574
      %594 = vst [vmem:[#allocation2 + $0x134] sm:$0xff] %v576
      %595 = vst [vmem:[#allocation2 + $0x13c] sm:$0xff] %v578
      %596 = vst [vmem:[#allocation2 + $0x144] sm:$0xff] %v580
      %597 = vst [vmem:[#allocation2 + $0x14c] sm:$0xf] %v581
      %v598 = vld [vmem:[%s219] sm:$0xff]
      %v599 = vld [vmem:[%s219 + $0x8] sm:$0xff]
      %v600 = vld [vmem:[%s219 + $0x10] sm:$0xff]
      %v601 = vld [vmem:[%s219 + $0x18] sm:$0xff]
      %v602 = vld [vmem:[%s219 + $0x20] sm:$0xff]
      %v603 = vld [vmem:[%s219 + $0x28] sm:$0xff]
      %v604 = vld [vmem:[%s219 + $0x30] sm:$0xff]
      %v605 = vld [vmem:[%s219 + $0x38] sm:$0xff]
      %614 = vrot.lane.b32.xlu0 %v598, 114
      %v615 = vpop.permute.xlu0 %614
      %616 = vrot.lane.b32.xlu0 %v599, 114
      %v617 = vpop.permute.xlu0 %616
      %618 = vrot.lane.b32.xlu0 %v600, 114
      %v619 = vpop.permute.xlu0 %618
      %620 = vrot.lane.b32.xlu0 %v601, 114
      %v621 = vpop.permute.xlu0 %620
      %622 = vrot.lane.b32.xlu0 %v602, 114
      %v623 = vpop.permute.xlu0 %622
      %624 = vrot.lane.b32.xlu0 %v603, 114
      %v625 = vpop.permute.xlu0 %624
      %626 = vrot.lane.b32.xlu0 %v604, 114
      %v627 = vpop.permute.xlu0 %626
      %628 = vrot.lane.b32.xlu0 %v605, 114
      %v629 = vpop.permute.xlu0 %628
      %v630 = vrot.slane %v615, 4
      %v631 = vrot.slane %v617, 4
      %v632 = vrot.slane %v619, 4
      %v633 = vrot.slane %v621, 4
      %v634 = vrot.slane %v623, 4
      %v635 = vrot.slane %v625, 4
      %v636 = vrot.slane %v627, 4
      %v637 = vrot.slane %v629, 4
      %v638 = vsel %vm282, %v630, %v631
      %vm639 = vcmask 932864
      %v640 = vsel %vm639, %v615, %v638
      %v641 = vsel %vm282, %v631, %v632
      %v642 = vsel %vm639, %v617, %v641
      %v643 = vsel %vm282, %v632, %v633
      %v644 = vsel %vm639, %v619, %v643
      %v645 = vsel %vm639, %v621, %v633
      %v646 = vsel %vm282, %v634, %v635
      %v647 = vsel %vm639, %v623, %v646
      %v648 = vsel %vm282, %v635, %v636
      %v649 = vsel %vm639, %v625, %v648
      %v650 = vsel %vm282, %v636, %v637
      %v651 = vsel %vm639, %v627, %v650
      %v652 = vsel %vm639, %v629, %v637
      %661 = vst [vmem:[#allocation2 + $0x150] sm:$0xff] %v640
      %662 = vst [vmem:[#allocation2 + $0x158] sm:$0xff] %v642
      %663 = vst [vmem:[#allocation2 + $0x160] sm:$0xff] %v644
      %664 = vst [vmem:[#allocation2 + $0x168] sm:$0xf] %v645
      %665 = vst [vmem:[#allocation2 + $0x16c] sm:$0xff] %v647
      %666 = vst [vmem:[#allocation2 + $0x174] sm:$0xff] %v649
      %667 = vst [vmem:[#allocation2 + $0x17c] sm:$0xff] %v651
      %668 = vst [vmem:[#allocation2 + $0x184] sm:$0xf] %v652
      %v669 = vld [vmem:[%s219] sm:$0xff]
      %v670 = vld [vmem:[%s219 + $0x8] sm:$0xff]
      %v671 = vld [vmem:[%s219 + $0x10] sm:$0xff]
      %v672 = vld [vmem:[%s219 + $0x18] sm:$0xff]
      %v673 = vld [vmem:[%s219 + $0x20] sm:$0xff]
      %v674 = vld [vmem:[%s219 + $0x28] sm:$0xff]
      %v675 = vld [vmem:[%s219 + $0x30] sm:$0xff]
      %v676 = vld [vmem:[%s219 + $0x38] sm:$0xff]
      %685 = vrot.lane.b32.xlu0 %v669, 113
      %v686 = vpop.permute.xlu0 %685
      %687 = vrot.lane.b32.xlu0 %v670, 113
      %v688 = vpop.permute.xlu0 %687
      %689 = vrot.lane.b32.xlu0 %v671, 113
      %v690 = vpop.permute.xlu0 %689
      %691 = vrot.lane.b32.xlu0 %v672, 113
      %v692 = vpop.permute.xlu0 %691
      %693 = vrot.lane.b32.xlu0 %v673, 113
      %v694 = vpop.permute.xlu0 %693
      %695 = vrot.lane.b32.xlu0 %v674, 113
      %v696 = vpop.permute.xlu0 %695
      %697 = vrot.lane.b32.xlu0 %v675, 113
      %v698 = vpop.permute.xlu0 %697
      %699 = vrot.lane.b32.xlu0 %v676, 113
      %v700 = vpop.permute.xlu0 %699
      %v701 = vrot.slane %v686, 4
      %v702 = vrot.slane %v688, 4
      %v703 = vrot.slane %v690, 4
      %v704 = vrot.slane %v692, 4
      %v705 = vrot.slane %v694, 4
      %v706 = vrot.slane %v696, 4
      %v707 = vrot.slane %v698, 4
      %v708 = vrot.slane %v700, 4
      %v709 = vsel %vm282, %v701, %v702
      %vm710 = vcmask 924672
      %v711 = vsel %vm710, %v686, %v709
      %v712 = vsel %vm282, %v702, %v703
      %v713 = vsel %vm710, %v688, %v712
      %v714 = vsel %vm282, %v703, %v704
      %v715 = vsel %vm710, %v690, %v714
      %v716 = vsel %vm710, %v692, %v704
      %v717 = vsel %vm282, %v705, %v706
      %v718 = vsel %vm710, %v694, %v717
      %v719 = vsel %vm282, %v706, %v707
      %v720 = vsel %vm710, %v696, %v719
      %v721 = vsel %vm282, %v707, %v708
      %v722 = vsel %vm710, %v698, %v721
      %v723 = vsel %vm710, %v700, %v708
      %732 = vst [vmem:[#allocation2 + $0x188] sm:$0xff] %v711
      %733 = vst [vmem:[#allocation2 + $0x190] sm:$0xff] %v713
      %734 = vst [vmem:[#allocation2 + $0x198] sm:$0xff] %v715
      %735 = vst [vmem:[#allocation2 + $0x1a0] sm:$0xf] %v716
      %736 = vst [vmem:[#allocation2 + $0x1a4] sm:$0xff] %v718
      %737 = vst [vmem:[#allocation2 + $0x1ac] sm:$0xff] %v720
      %738 = vst [vmem:[#allocation2 + $0x1b4] sm:$0xff] %v722
      %739 = vst [vmem:[#allocation2 + $0x1bc] sm:$0xf] %v723
      %v740 = vld [vmem:[%s219] sm:$0xff]
      %v741 = vld [vmem:[%s219 + $0x8] sm:$0xff]
      %v742 = vld [vmem:[%s219 + $0x10] sm:$0xff]
      %v743 = vld [vmem:[%s219 + $0x18] sm:$0xff]
      %v744 = vld [vmem:[%s219 + $0x20] sm:$0xff]
      %v745 = vld [vmem:[%s219 + $0x28] sm:$0xff]
      %v746 = vld [vmem:[%s219 + $0x30] sm:$0xff]
      %v747 = vld [vmem:[%s219 + $0x38] sm:$0xff]
      %756 = vrot.lane.b32.xlu0 %v740, 112
      %v757 = vpop.permute.xlu0 %756
      %758 = vrot.lane.b32.xlu0 %v741, 112
      %v759 = vpop.permute.xlu0 %758
      %760 = vrot.lane.b32.xlu0 %v742, 112
      %v761 = vpop.permute.xlu0 %760
      %762 = vrot.lane.b32.xlu0 %v743, 112
      %v763 = vpop.permute.xlu0 %762
      %764 = vrot.lane.b32.xlu0 %v744, 112
      %v765 = vpop.permute.xlu0 %764
      %766 = vrot.lane.b32.xlu0 %v745, 112
      %v767 = vpop.permute.xlu0 %766
      %768 = vrot.lane.b32.xlu0 %v746, 112
      %v769 = vpop.permute.xlu0 %768
      %770 = vrot.lane.b32.xlu0 %v747, 112
      %v771 = vpop.permute.xlu0 %770
      %v772 = vrot.slane %v757, 4
      %v773 = vrot.slane %v759, 4
      %v774 = vrot.slane %v761, 4
      %v775 = vrot.slane %v763, 4
      %v776 = vrot.slane %v765, 4
      %v777 = vrot.slane %v767, 4
      %v778 = vrot.slane %v769, 4
      %v779 = vrot.slane %v771, 4
      %v780 = vsel %vm282, %v772, %v773
      %vm781 = vcmask 916480
      %v782 = vsel %vm781, %v757, %v780
      %v783 = vsel %vm282, %v773, %v774
      %v784 = vsel %vm781, %v759, %v783
      %v785 = vsel %vm282, %v774, %v775
      %v786 = vsel %vm781, %v761, %v785
      %v787 = vsel %vm781, %v763, %v775
      %v788 = vsel %vm282, %v776, %v777
      %v789 = vsel %vm781, %v765, %v788
      %v790 = vsel %vm282, %v777, %v778
      %v791 = vsel %vm781, %v767, %v790
      %v792 = vsel %vm282, %v778, %v779
      %v793 = vsel %vm781, %v769, %v792
      %v794 = vsel %vm781, %v771, %v779
      %803 = vst [vmem:[#allocation2 + $0x1c0] sm:$0xff] %v782
      %804 = vst [vmem:[#allocation2 + $0x1c8] sm:$0xff] %v784
      %805 = vst [vmem:[#allocation2 + $0x1d0] sm:$0xff] %v786
      %806 = vst [vmem:[#allocation2 + $0x1d8] sm:$0xf] %v787
      %807 = vst [vmem:[#allocation2 + $0x1dc] sm:$0xff] %v789
      %808 = vst [vmem:[#allocation2 + $0x1e4] sm:$0xff] %v791
      %809 = vst [vmem:[#allocation2 + $0x1ec] sm:$0xff] %v793
      %810 = vst [vmem:[#allocation2 + $0x1f4] sm:$0xf] %v794
      %v811 = vld [vmem:[%s1] sm:$0xff]
      %v812 = vld [vmem:[#allocation2] sm:$0xff]
      %v813 = vld [vmem:[#allocation2 + $0x8] sm:$0xff]
      %v814 = vld [vmem:[#allocation2 + $0x10] sm:$0xff]
      %v815 = vld [vmem:[#allocation2 + $0x18] sm:$0xf]
      %v816 = vld [vmem:[#allocation2 + $0x1c] sm:$0xff]
      %v817 = vld [vmem:[#allocation2 + $0x24] sm:$0xff]
      %v818 = vld [vmem:[#allocation2 + $0x2c] sm:$0xff]
      %v819 = vld [vmem:[#allocation2 + $0x34] sm:$0xf]
      %v820 = vld [vmem:[#allocation2 + $0x38] sm:$0xff]
      %v821 = vld [vmem:[#allocation2 + $0x40] sm:$0xff]
      %v822 = vld [vmem:[#allocation2 + $0x48] sm:$0xff]
      %v823 = vld [vmem:[#allocation2 + $0x50] sm:$0xf]
      %v824 = vld [vmem:[#allocation2 + $0x54] sm:$0xff]
      %v825 = vld [vmem:[#allocation2 + $0x5c] sm:$0xff]
      %v826 = vld [vmem:[#allocation2 + $0x64] sm:$0xff]
      %v827 = vld [vmem:[#allocation2 + $0x6c] sm:$0xf]
      %v828 = vld [vmem:[#allocation2 + $0x70] sm:$0xff]
      %v829 = vld [vmem:[#allocation2 + $0x78] sm:$0xff]
      %v830 = vld [vmem:[#allocation2 + $0x80] sm:$0xff]
      %v831 = vld [vmem:[#allocation2 + $0x88] sm:$0xf]
      %v832 = vld [vmem:[#allocation2 + $0x8c] sm:$0xff]
      %v833 = vld [vmem:[#allocation2 + $0x94] sm:$0xff]
      %v834 = vld [vmem:[#allocation2 + $0x9c] sm:$0xff]
      %v835 = vld [vmem:[#allocation2 + $0xa4] sm:$0xf]
      %v836 = vld [vmem:[#allocation2 + $0xa8] sm:$0xff]
      %v837 = vld [vmem:[#allocation2 + $0xb0] sm:$0xff]
      %v838 = vld [vmem:[#allocation2 + $0xb8] sm:$0xff]
      %v839 = vld [vmem:[#allocation2 + $0xc0] sm:$0xf]
      %v840 = vld [vmem:[#allocation2 + $0xc4] sm:$0xff]
      %v841 = vld [vmem:[#allocation2 + $0xcc] sm:$0xff]
      %v842 = vld [vmem:[#allocation2 + $0xd4] sm:$0xff]
      %v843 = vld [vmem:[#allocation2 + $0xdc] sm:$0xf]
      %v844 = vld [vmem:[#allocation2 + $0xe0] sm:$0xff]
      %v845 = vld [vmem:[#allocation2 + $0xe8] sm:$0xff]
      %v846 = vld [vmem:[#allocation2 + $0xf0] sm:$0xff]
      %v847 = vld [vmem:[#allocation2 + $0xf8] sm:$0xf]
      %v848 = vld [vmem:[#allocation2 + $0xfc] sm:$0xff]
      %v849 = vld [vmem:[#allocation2 + $0x104] sm:$0xff]
      %v850 = vld [vmem:[#allocation2 + $0x10c] sm:$0xff]
      %v851 = vld [vmem:[#allocation2 + $0x114] sm:$0xf]
      %v852 = vld [vmem:[#allocation2 + $0x118] sm:$0xff]
      %v853 = vld [vmem:[#allocation2 + $0x120] sm:$0xff]
      %v854 = vld [vmem:[#allocation2 + $0x128] sm:$0xff]
      %v855 = vld [vmem:[#allocation2 + $0x130] sm:$0xf]
      %v856 = vld [vmem:[#allocation2 + $0x134] sm:$0xff]
      %v857 = vld [vmem:[#allocation2 + $0x13c] sm:$0xff]
      %v858 = vld [vmem:[#allocation2 + $0x144] sm:$0xff]
      %v859 = vld [vmem:[#allocation2 + $0x14c] sm:$0xf]
      %v860 = vld [vmem:[#allocation2 + $0x150] sm:$0xff]
      %v861 = vld [vmem:[#allocation2 + $0x158] sm:$0xff]
      %v862 = vld [vmem:[#allocation2 + $0x160] sm:$0xff]
      %v863 = vld [vmem:[#allocation2 + $0x168] sm:$0xf]
      %v864 = vld [vmem:[#allocation2 + $0x16c] sm:$0xff]
      %v865 = vld [vmem:[#allocation2 + $0x174] sm:$0xff]
      %v866 = vld [vmem:[#allocation2 + $0x17c] sm:$0xff]
      %v867 = vld [vmem:[#allocation2 + $0x184] sm:$0xf]
      %v868 = vld [vmem:[#allocation2 + $0x188] sm:$0xff]
      %v869 = vld [vmem:[#allocation2 + $0x190] sm:$0xff]
      %v870 = vld [vmem:[#allocation2 + $0x198] sm:$0xff]
      %v871 = vld [vmem:[#allocation2 + $0x1a0] sm:$0xf]
      %v872 = vld [vmem:[#allocation2 + $0x1a4] sm:$0xff]
      %v873 = vld [vmem:[#allocation2 + $0x1ac] sm:$0xff]
      %v874 = vld [vmem:[#allocation2 + $0x1b4] sm:$0xff]
      %v875 = vld [vmem:[#allocation2 + $0x1bc] sm:$0xf]
      %v876 = vld [vmem:[#allocation2 + $0x1c0] sm:$0xff]
      %v877 = vld [vmem:[#allocation2 + $0x1c8] sm:$0xff]
      %v878 = vld [vmem:[#allocation2 + $0x1d0] sm:$0xff]
      %v879 = vld [vmem:[#allocation2 + $0x1d8] sm:$0xf]
      %v880 = vld [vmem:[#allocation2 + $0x1dc] sm:$0xff]
      %v881 = vld [vmem:[#allocation2 + $0x1e4] sm:$0xff]
      %v882 = vld [vmem:[#allocation2 + $0x1ec] sm:$0xff]
      %v883 = vld [vmem:[#allocation2 + $0x1f4] sm:$0xf]
      %v884 = vld [vmem:[%s2] sm:$0xff]
      %886 = vset.pattern.permute.xlu0 0
      %887 = vperm.xlu0 %886, %v884
      %v888 = vpop.permute.xlu0 %887
      %v891 = vunpack.c.l.b16 %v811
      %v892 = vunpack.c.h.b16 %v811
      %v893 = vpack.c.b16 %v891, %v891
      %v894 = vpack.c.b16 %v892, %v892
      %v968 = vunpack.c.l.b16 %v812
      %v969 = vunpack.c.h.b16 %v812
      %v970 = vunpack.c.l.b16 %v813
      %v971 = vunpack.c.h.b16 %v813
      %v972 = vunpack.c.l.b16 %v814
      %v973 = vunpack.c.h.b16 %v814
      %v974 = vunpack.c.l.b16 %v815
      %v975 = vunpack.c.l.b16 %v816
      %v976 = vunpack.c.h.b16 %v816
      %v977 = vunpack.c.l.b16 %v817
      %v978 = vunpack.c.h.b16 %v817
      %v979 = vunpack.c.l.b16 %v818
      %v980 = vunpack.c.h.b16 %v818
      %v981 = vunpack.c.l.b16 %v819
      %v982 = vunpack.c.l.b16 %v820
      %v983 = vunpack.c.h.b16 %v820
      %v984 = vunpack.c.l.b16 %v821
      %v985 = vunpack.c.h.b16 %v821
      %v986 = vunpack.c.l.b16 %v822
      %v987 = vunpack.c.h.b16 %v822
      %v988 = vunpack.c.l.b16 %v823
      %v989 = vunpack.c.l.b16 %v824
      %v990 = vunpack.c.h.b16 %v824
      %v991 = vunpack.c.l.b16 %v825
      %v992 = vunpack.c.h.b16 %v825
      %v993 = vunpack.c.l.b16 %v826
      %v994 = vunpack.c.h.b16 %v826
      %v995 = vunpack.c.l.b16 %v827
      %v996 = vunpack.c.l.b16 %v828
      %v997 = vunpack.c.h.b16 %v828
      %v998 = vunpack.c.l.b16 %v829
      %v999 = vunpack.c.h.b16 %v829
      %v1000 = vunpack.c.l.b16 %v830
      %v1001 = vunpack.c.h.b16 %v830
      %v1002 = vunpack.c.l.b16 %v831
      %v1003 = vunpack.c.l.b16 %v832
      %v1004 = vunpack.c.h.b16 %v832
      %v1005 = vunpack.c.l.b16 %v833
      %v1006 = vunpack.c.h.b16 %v833
      %v1007 = vunpack.c.l.b16 %v834
      %v1008 = vunpack.c.h.b16 %v834
      %v1009 = vunpack.c.l.b16 %v835
      %v1010 = vunpack.c.l.b16 %v836
      %v1011 = vunpack.c.h.b16 %v836
      %v1012 = vunpack.c.l.b16 %v837
      %v1013 = vunpack.c.h.b16 %v837
      %v1014 = vunpack.c.l.b16 %v838
      %v1015 = vunpack.c.h.b16 %v838
      %v1016 = vunpack.c.l.b16 %v839
      %v1017 = vunpack.c.l.b16 %v840
      %v1018 = vunpack.c.h.b16 %v840
      %v1019 = vunpack.c.l.b16 %v841
      %v1020 = vunpack.c.h.b16 %v841
      %v1021 = vunpack.c.l.b16 %v842
      %v1022 = vunpack.c.h.b16 %v842
      %v1023 = vunpack.c.l.b16 %v843
      %v1024 = vunpack.c.l.b16 %v844
      %v1025 = vunpack.c.h.b16 %v844
      %v1026 = vunpack.c.l.b16 %v845
      %v1027 = vunpack.c.h.b16 %v845
      %v1028 = vunpack.c.l.b16 %v846
      %v1029 = vunpack.c.h.b16 %v846
      %v1030 = vunpack.c.l.b16 %v847
      %v1031 = vunpack.c.l.b16 %v848
      %v1032 = vunpack.c.h.b16 %v848
      %v1033 = vunpack.c.l.b16 %v849
      %v1034 = vunpack.c.h.b16 %v849
      %v1035 = vunpack.c.l.b16 %v850
      %v1036 = vunpack.c.h.b16 %v850
      %v1037 = vunpack.c.l.b16 %v851
      %v1038 = vunpack.c.l.b16 %v852
      %v1039 = vunpack.c.h.b16 %v852
      %v1040 = vunpack.c.l.b16 %v853
      %v1041 = vunpack.c.h.b16 %v853
      %v1042 = vunpack.c.l.b16 %v854
      %v1043 = vunpack.c.h.b16 %v854
      %v1044 = vunpack.c.l.b16 %v855
      %v1045 = vunpack.c.l.b16 %v856
      %v1046 = vunpack.c.h.b16 %v856
      %v1047 = vunpack.c.l.b16 %v857
      %v1048 = vunpack.c.h.b16 %v857
      %v1049 = vunpack.c.l.b16 %v858
      %v1050 = vunpack.c.h.b16 %v858
      %v1051 = vunpack.c.l.b16 %v859
      %v1052 = vunpack.c.l.b16 %v860
      %v1053 = vunpack.c.h.b16 %v860
      %v1054 = vunpack.c.l.b16 %v861
      %v1055 = vunpack.c.h.b16 %v861
      %v1056 = vunpack.c.l.b16 %v862
      %v1057 = vunpack.c.h.b16 %v862
      %v1058 = vunpack.c.l.b16 %v863
      %v1059 = vunpack.c.l.b16 %v864
      %v1060 = vunpack.c.h.b16 %v864
      %v1061 = vunpack.c.l.b16 %v865
      %v1062 = vunpack.c.h.b16 %v865
      %v1063 = vunpack.c.l.b16 %v866
      %v1064 = vunpack.c.h.b16 %v866
      %v1065 = vunpack.c.l.b16 %v867
      %v1066 = vunpack.c.l.b16 %v868
      %v1067 = vunpack.c.h.b16 %v868
      %v1068 = vunpack.c.l.b16 %v869
      %v1069 = vunpack.c.h.b16 %v869
      %v1070 = vunpack.c.l.b16 %v870
      %v1071 = vunpack.c.h.b16 %v870
      %v1072 = vunpack.c.l.b16 %v871
      %v1073 = vunpack.c.l.b16 %v872
      %v1074 = vunpack.c.h.b16 %v872
      %v1075 = vunpack.c.l.b16 %v873
      %v1076 = vunpack.c.h.b16 %v873
      %v1077 = vunpack.c.l.b16 %v874
      %v1078 = vunpack.c.h.b16 %v874
      %v1079 = vunpack.c.l.b16 %v875
      %v1080 = vunpack.c.l.b16 %v876
      %v1081 = vunpack.c.h.b16 %v876
      %v1082 = vunpack.c.l.b16 %v877
      %v1083 = vunpack.c.h.b16 %v877
      %v1084 = vunpack.c.l.b16 %v878
      %v1085 = vunpack.c.h.b16 %v878
      %v1086 = vunpack.c.l.b16 %v879
      %v1087 = vunpack.c.l.b16 %v880
      %v1088 = vunpack.c.h.b16 %v880
      %v1089 = vunpack.c.l.b16 %v881
      %v1090 = vunpack.c.h.b16 %v881
      %v1091 = vunpack.c.l.b16 %v882
      %v1092 = vunpack.c.h.b16 %v882
      %v1093 = vunpack.c.l.b16 %v883
      %v1094 = vpack.c.b16 %v975, %v968
      %v1095 = vpack.c.b16 %v976, %v969
      %v1096 = vpack.c.b16 %v977, %v970
      %v1097 = vpack.c.b16 %v978, %v971
      %v1098 = vpack.c.b16 %v979, %v972
      %v1099 = vpack.c.b16 %v980, %v973
      %v1100 = vpack.c.b16 %v981, %v974
      %v1101 = vpack.c.b16 %v989, %v982
      %v1102 = vpack.c.b16 %v990, %v983
      %v1103 = vpack.c.b16 %v991, %v984
      %v1104 = vpack.c.b16 %v992, %v985
      %v1105 = vpack.c.b16 %v993, %v986
      %v1106 = vpack.c.b16 %v994, %v987
      %v1107 = vpack.c.b16 %v995, %v988
      %v1108 = vpack.c.b16 %v1003, %v996
      %v1109 = vpack.c.b16 %v1004, %v997
      %v1110 = vpack.c.b16 %v1005, %v998
      %v1111 = vpack.c.b16 %v1006, %v999
      %v1112 = vpack.c.b16 %v1007, %v1000
      %v1113 = vpack.c.b16 %v1008, %v1001
      %v1114 = vpack.c.b16 %v1009, %v1002
      %v1115 = vpack.c.b16 %v1017, %v1010
      %v1116 = vpack.c.b16 %v1018, %v1011
      %v1117 = vpack.c.b16 %v1019, %v1012
      %v1118 = vpack.c.b16 %v1020, %v1013
      %v1119 = vpack.c.b16 %v1021, %v1014
      %v1120 = vpack.c.b16 %v1022, %v1015
      %v1121 = vpack.c.b16 %v1023, %v1016
      %v1122 = vpack.c.b16 %v1031, %v1024
      %v1123 = vpack.c.b16 %v1032, %v1025
      %v1124 = vpack.c.b16 %v1033, %v1026
      %v1125 = vpack.c.b16 %v1034, %v1027
      %v1126 = vpack.c.b16 %v1035, %v1028
      %v1127 = vpack.c.b16 %v1036, %v1029
      %v1128 = vpack.c.b16 %v1037, %v1030
      %v1129 = vpack.c.b16 %v1045, %v1038
      %v1130 = vpack.c.b16 %v1046, %v1039
      %v1131 = vpack.c.b16 %v1047, %v1040
      %v1132 = vpack.c.b16 %v1048, %v1041
      %v1133 = vpack.c.b16 %v1049, %v1042
      %v1134 = vpack.c.b16 %v1050, %v1043
      %v1135 = vpack.c.b16 %v1051, %v1044
      %v1136 = vpack.c.b16 %v1059, %v1052
      %v1137 = vpack.c.b16 %v1060, %v1053
      %v1138 = vpack.c.b16 %v1061, %v1054
      %v1139 = vpack.c.b16 %v1062, %v1055
      %v1140 = vpack.c.b16 %v1063, %v1056
      %v1141 = vpack.c.b16 %v1064, %v1057
      %v1142 = vpack.c.b16 %v1065, %v1058
      %v1143 = vpack.c.b16 %v1073, %v1066
      %v1144 = vpack.c.b16 %v1074, %v1067
      %v1145 = vpack.c.b16 %v1075, %v1068
      %v1146 = vpack.c.b16 %v1076, %v1069
      %v1147 = vpack.c.b16 %v1077, %v1070
      %v1148 = vpack.c.b16 %v1078, %v1071
      %v1149 = vpack.c.b16 %v1079, %v1072
      %v1150 = vpack.c.b16 %v1087, %v1080
      %v1151 = vpack.c.b16 %v1088, %v1081
      %v1152 = vpack.c.b16 %v1089, %v1082
      %v1153 = vpack.c.b16 %v1090, %v1083
      %v1154 = vpack.c.b16 %v1091, %v1084
      %v1155 = vpack.c.b16 %v1092, %v1085
      %v1156 = vpack.c.b16 %v1093, %v1086
      %vm1220 = vcmask 130048
      %v1222 = vsel %vm1220, %v894, 0
      %1224 = vmatprep.subr.bf16.mxu0 %v1144
      %1225 = vmatpush1.bf16.msra.mxu0 %v1143
      %1226 = vmatprep.subr.bf16.mxu0 %v1137
      %1227 = vmatpush1.bf16.msra.mxu0 %v1136
      %1228 = vmatprep.subr.bf16.mxu0 %v1130
      %1229 = vmatpush1.bf16.msra.mxu0 %v1129
      %1230 = vmatprep.subr.bf16.mxu0 %v1123
      %1231 = vmatpush1.bf16.msra.mxu0 %v1122
      %1232 = vmatprep.subr.bf16.mxu0 %v1116
      %1233 = vmatpush1.bf16.msra.mxu0 %v1115
      %1234 = vmatprep.subr.bf16.mxu0 %v1109
      %1235 = vmatpush1.bf16.msra.mxu0 %v1108
      %1236 = vmatprep.subr.bf16.mxu0 %v1102
      %1237 = vmatpush1.bf16.msra.mxu0 %v1101
      %1238 = vmatprep.subr.bf16.mxu0 %v1095
      %1239 = vmatpush1.bf16.msra.mxu0 %v1094
      %1240 = vmatprep.subr.bf16.mxu0 0
      %1241 = vmatpush2.bf16.msra.mxu0 0
      %1242 = vmatprep.subr.bf16.mxu0 0
      %1243 = vmatpush2.bf16.msra.mxu0 0
      %1244 = vmatprep.subr.bf16.mxu0 0
      %1245 = vmatpush2.bf16.msra.mxu0 0
      %1246 = vmatprep.subr.bf16.mxu0 0
      %1247 = vmatpush2.bf16.msra.mxu0 0
      %1248 = vmatprep.subr.bf16.mxu0 0
      %1249 = vmatpush2.bf16.msra.mxu0 0
      %1250 = vmatprep.subr.bf16.mxu0 0
      %1251 = vmatpush2.bf16.msra.mxu0 0
      %1252 = vmatprep.subr.bf16.mxu0 0
      %1253 = vmatpush2.bf16.msra.mxu0 0
      %1254 = vmatprep.subr.bf16.mxu0 %v1151
      %1255 = vmatpush2.bf16.msra.mxu0 %v1150
      %1256 = vmatprep.mubr.bf16.mxu0 %v1222
      %1257 = vmatmul.mubr.bf16.gmra.mxu0 %v893
      %v1258 = vpop.f32.mrf.mxu0
      %v1259 = vadd.f32 %v888, %v1258
      %v1260 = vpop.f32.mrf.mxu0
      %v1261 = vadd.f32 %v888, %v1260
      %v1262 = vpop.f32.mrf.mxu0
      %v1263 = vpop.f32.mrf.mxu0
      %1264 = vdwg.mxu0
      %1265 = vmatprep.subr.bf16.mxu0 %v1146
      %1266 = vmatpush1.bf16.msra.mxu0 %v1145
      %1267 = vmatprep.subr.bf16.mxu0 %v1139
      %1268 = vmatpush1.bf16.msra.mxu0 %v1138
      %1269 = vmatprep.subr.bf16.mxu0 %v1132
      %1270 = vmatpush1.bf16.msra.mxu0 %v1131
      %1271 = vmatprep.subr.bf16.mxu0 %v1125
      %1272 = vmatpush1.bf16.msra.mxu0 %v1124
      %1273 = vmatprep.subr.bf16.mxu0 %v1118
      %1274 = vmatpush1.bf16.msra.mxu0 %v1117
      %1275 = vmatprep.subr.bf16.mxu0 %v1111
      %1276 = vmatpush1.bf16.msra.mxu0 %v1110
      %1277 = vmatprep.subr.bf16.mxu0 %v1104
      %1278 = vmatpush1.bf16.msra.mxu0 %v1103
      %1279 = vmatprep.subr.bf16.mxu0 %v1097
      %1280 = vmatpush1.bf16.msra.mxu0 %v1096
      %1281 = vmatprep.subr.bf16.mxu0 0
      %1282 = vmatpush2.bf16.msra.mxu0 0
      %1283 = vmatprep.subr.bf16.mxu0 0
      %1284 = vmatpush2.bf16.msra.mxu0 0
      %1285 = vmatprep.subr.bf16.mxu0 0
      %1286 = vmatpush2.bf16.msra.mxu0 0
      %1287 = vmatprep.subr.bf16.mxu0 0
      %1288 = vmatpush2.bf16.msra.mxu0 0
      %1289 = vmatprep.subr.bf16.mxu0 0
      %1290 = vmatpush2.bf16.msra.mxu0 0
      %1291 = vmatprep.subr.bf16.mxu0 0
      %1292 = vmatpush2.bf16.msra.mxu0 0
      %1293 = vmatprep.subr.bf16.mxu0 0
      %1294 = vmatpush2.bf16.msra.mxu0 0
      %1295 = vmatprep.subr.bf16.mxu0 %v1153
      %1296 = vmatpush2.bf16.msra.mxu0 %v1152
      %1297 = vmatprep.mubr.bf16.mxu0 %v1222
      %1298 = vmatmul.mubr.bf16.gmra.mxu0 %v893
      %v1299 = vpop.f32.mrf.mxu0
      %v1300 = vadd.f32 %v888, %v1299
      %v1301 = vpop.f32.mrf.mxu0
      %v1302 = vadd.f32 %v888, %v1301
      %v1303 = vpop.f32.mrf.mxu0
      %v1304 = vpop.f32.mrf.mxu0
      %1305 = vdwg.mxu0
      %1306 = vmatprep.subr.bf16.mxu0 %v1148
      %1307 = vmatpush1.bf16.msra.mxu0 %v1147
      %1308 = vmatprep.subr.bf16.mxu0 %v1141
      %1309 = vmatpush1.bf16.msra.mxu0 %v1140
      %1310 = vmatprep.subr.bf16.mxu0 %v1134
      %1311 = vmatpush1.bf16.msra.mxu0 %v1133
      %1312 = vmatprep.subr.bf16.mxu0 %v1127
      %1313 = vmatpush1.bf16.msra.mxu0 %v1126
      %1314 = vmatprep.subr.bf16.mxu0 %v1120
      %1315 = vmatpush1.bf16.msra.mxu0 %v1119
      %1316 = vmatprep.subr.bf16.mxu0 %v1113
      %1317 = vmatpush1.bf16.msra.mxu0 %v1112
      %1318 = vmatprep.subr.bf16.mxu0 %v1106
      %1319 = vmatpush1.bf16.msra.mxu0 %v1105
      %1320 = vmatprep.subr.bf16.mxu0 %v1099
      %1321 = vmatpush1.bf16.msra.mxu0 %v1098
      %1322 = vmatprep.subr.bf16.mxu0 0
      %1323 = vmatpush2.bf16.msra.mxu0 0
      %1324 = vmatprep.subr.bf16.mxu0 0
      %1325 = vmatpush2.bf16.msra.mxu0 0
      %1326 = vmatprep.subr.bf16.mxu0 0
      %1327 = vmatpush2.bf16.msra.mxu0 0
      %1328 = vmatprep.subr.bf16.mxu0 0
      %1329 = vmatpush2.bf16.msra.mxu0 0
      %1330 = vmatprep.subr.bf16.mxu0 0
      %1331 = vmatpush2.bf16.msra.mxu0 0
      %1332 = vmatprep.subr.bf16.mxu0 0
      %1333 = vmatpush2.bf16.msra.mxu0 0
      %1334 = vmatprep.subr.bf16.mxu0 0
      %1335 = vmatpush2.bf16.msra.mxu0 0
      %1336 = vmatprep.subr.bf16.mxu0 %v1155
      %1337 = vmatpush2.bf16.msra.mxu0 %v1154
      %1338 = vmatprep.mubr.bf16.mxu0 %v1222
      %1339 = vmatmul.mubr.bf16.gmra.mxu0 %v893
      %v1340 = vpop.f32.mrf.mxu0
      %v1341 = vadd.f32 %v888, %v1340
      %v1342 = vpop.f32.mrf.mxu0
      %v1343 = vadd.f32 %v888, %v1342
      %v1344 = vpop.f32.mrf.mxu0
      %v1345 = vpop.f32.mrf.mxu0
      %1346 = vdwg.mxu0
      %1347 = vmatprep.subr.bf16.mxu0 0
      %1348 = vmatpush1.bf16.msra.mxu0 %v1149
      %1349 = vmatprep.subr.bf16.mxu0 0
      %1350 = vmatpush1.bf16.msra.mxu0 %v1142
      %1351 = vmatprep.subr.bf16.mxu0 0
      %1352 = vmatpush1.bf16.msra.mxu0 %v1135
      %1353 = vmatprep.subr.bf16.mxu0 0
      %1354 = vmatpush1.bf16.msra.mxu0 %v1128
      %1355 = vmatprep.subr.bf16.mxu0 0
      %1356 = vmatpush1.bf16.msra.mxu0 %v1121
      %1357 = vmatprep.subr.bf16.mxu0 0
      %1358 = vmatpush1.bf16.msra.mxu0 %v1114
      %1359 = vmatprep.subr.bf16.mxu0 0
      %1360 = vmatpush1.bf16.msra.mxu0 %v1107
      %1361 = vmatprep.subr.bf16.mxu0 0
      %1362 = vmatpush1.bf16.msra.mxu0 %v1100
      %1363 = vmatprep.subr.bf16.mxu0 0
      %1364 = vmatpush2.bf16.msra.mxu0 0
      %1365 = vmatprep.subr.bf16.mxu0 0
      %1366 = vmatpush2.bf16.msra.mxu0 0
      %1367 = vmatprep.subr.bf16.mxu0 0
      %1368 = vmatpush2.bf16.msra.mxu0 0
      %1369 = vmatprep.subr.bf16.mxu0 0
      %1370 = vmatpush2.bf16.msra.mxu0 0
      %1371 = vmatprep.subr.bf16.mxu0 0
      %1372 = vmatpush2.bf16.msra.mxu0 0
      %1373 = vmatprep.subr.bf16.mxu0 0
      %1374 = vmatpush2.bf16.msra.mxu0 0
      %1375 = vmatprep.subr.bf16.mxu0 0
      %1376 = vmatpush2.bf16.msra.mxu0 0
      %1377 = vmatprep.subr.bf16.mxu0 0
      %1378 = vmatpush2.bf16.msra.mxu0 %v1156
      %1379 = vmatprep.mubr.bf16.mxu0 %v1222
      %1380 = vmatmul.mubr.bf16.gmra.mxu0 %v893
      %v1381 = vpop.f32.mrf.mxu0
      %v1382 = vadd.f32 %v888, %v1381
      %v1383 = vpop.f32.mrf.mxu0
      %v1384 = vpop.f32.mrf.mxu0
      %v1385 = vpop.f32.mrf.mxu0
      %1386 = vdwg.mxu0
      %v1387 = vmax.f32 %v1259, 0.0
      %v1388 = vmax.f32 %v1261, 0.0
      %v1389 = vmax.f32 %v1300, 0.0
      %v1390 = vmax.f32 %v1302, 0.0
      %v1391 = vmax.f32 %v1341, 0.0
      %v1392 = vmax.f32 %v1343, 0.0
      %v1393 = vmax.f32 %v1382, 0.0
      %v1394 = vld [vmem:[%s3] sm:$0xf]
      %v1395 = vpack.c.bf16 %v1387, %v1387
      %v1396 = vpack.c.bf16 %v1388, %v1388
      %v1397 = vpack.c.bf16 %v1389, %v1389
      %v1398 = vpack.c.bf16 %v1390, %v1390
      %v1399 = vpack.c.bf16 %v1391, %v1391
      %v1400 = vpack.c.bf16 %v1392, %v1392
      %v1401 = vpack.c.bf16 %v1393, %v1393
      %v1402 = vld [vmem:[%s4] sm:$0xff]
      %1404 = vset.pattern.permute.xlu0 0
      %1405 = vperm.xlu0 %1404, %v1402
      %v1406 = vpop.permute.xlu0 %1405
      %vm1408 = vcmask 64512
      %v1410 = vsel %vm1408, %v1394, 0
      %vm1412 = vcmask 1043456
      %v1414 = vsel %vm1412, %v1395, 0
      %v1417 = vsel %vm1412, %v1396, 0
      %v1420 = vsel %vm1412, %v1397, 0
      %v1423 = vsel %vm1412, %v1398, 0
      %v1426 = vsel %vm1412, %v1399, 0
      %v1429 = vsel %vm1412, %v1400, 0
      %v1432 = vsel %vm1412, %v1401, 0
      %1434 = vmatprep.subr.bf16.mxu0 0
      %1435 = vmatpush1.bf16.msra.mxu0 0
      %1436 = vmatprep.subr.bf16.mxu0 0
      %1437 = vmatpush1.bf16.msra.mxu0 0
      %1438 = vmatprep.subr.bf16.mxu0 0
      %1439 = vmatpush1.bf16.msra.mxu0 0
      %1440 = vmatprep.subr.bf16.mxu0 0
      %1441 = vmatpush1.bf16.msra.mxu0 0
      %1442 = vmatprep.subr.bf16.mxu0 0
      %1443 = vmatpush1.bf16.msra.mxu0 0
      %1444 = vmatprep.subr.bf16.mxu0 0
      %1445 = vmatpush1.bf16.msra.mxu0 0
      %1446 = vmatprep.subr.bf16.mxu0 0
      %1447 = vmatpush1.bf16.msra.mxu0 0
      %1448 = vmatprep.subr.bf16.mxu0 %v1417
      %1449 = vmatpush1.bf16.msra.mxu0 %v1414
      %1450 = vmatprep.subr.bf16.mxu0 0
      %1451 = vmatpush2.bf16.msra.mxu0 0
      %1452 = vmatprep.subr.bf16.mxu0 0
      %1453 = vmatpush2.bf16.msra.mxu0 0
      %1454 = vmatprep.subr.bf16.mxu0 0
      %1455 = vmatpush2.bf16.msra.mxu0 0
      %1456 = vmatprep.subr.bf16.mxu0 0
      %1457 = vmatpush2.bf16.msra.mxu0 0
      %1458 = vmatprep.subr.bf16.mxu0 0
      %1459 = vmatpush2.bf16.msra.mxu0 0
      %1460 = vmatprep.subr.bf16.mxu0 0
      %1461 = vmatpush2.bf16.msra.mxu0 0
      %1462 = vmatprep.subr.bf16.mxu0 0
      %1463 = vmatpush2.bf16.msra.mxu0 0
      %1464 = vmatprep.subr.bf16.mxu0 0
      %1465 = vmatpush2.bf16.msra.mxu0 0
      %1466 = vmatprep.mubr.bf16.mxu0 0
      %1467 = vmatmul.mubr.bf16.gmra.mxu0 %v1410
      %v1468 = vpop.f32.mrf.mxu0
      %v1469 = vadd.f32 %v1406, %v1468
      %v1470 = vpop.f32.mrf.mxu0
      %v1471 = vadd.f32 %v1406, %v1470
      %v1472 = vpop.f32.mrf.mxu0
      %v1473 = vpop.f32.mrf.mxu0
      %1474 = vdwg.mxu0
      %1475 = vmatprep.subr.bf16.mxu0 0
      %1476 = vmatpush1.bf16.msra.mxu0 0
      %1477 = vmatprep.subr.bf16.mxu0 0
      %1478 = vmatpush1.bf16.msra.mxu0 0
      %1479 = vmatprep.subr.bf16.mxu0 0
      %1480 = vmatpush1.bf16.msra.mxu0 0
      %1481 = vmatprep.subr.bf16.mxu0 0
      %1482 = vmatpush1.bf16.msra.mxu0 0
      %1483 = vmatprep.subr.bf16.mxu0 0
      %1484 = vmatpush1.bf16.msra.mxu0 0
      %1485 = vmatprep.subr.bf16.mxu0 0
      %1486 = vmatpush1.bf16.msra.mxu0 0
      %1487 = vmatprep.subr.bf16.mxu0 0
      %1488 = vmatpush1.bf16.msra.mxu0 0
      %1489 = vmatprep.subr.bf16.mxu0 %v1423
      %1490 = vmatpush1.bf16.msra.mxu0 %v1420
      %1491 = vmatprep.subr.bf16.mxu0 0
      %1492 = vmatpush2.bf16.msra.mxu0 0
      %1493 = vmatprep.subr.bf16.mxu0 0
      %1494 = vmatpush2.bf16.msra.mxu0 0
      %1495 = vmatprep.subr.bf16.mxu0 0
      %1496 = vmatpush2.bf16.msra.mxu0 0
      %1497 = vmatprep.subr.bf16.mxu0 0
      %1498 = vmatpush2.bf16.msra.mxu0 0
      %1499 = vmatprep.subr.bf16.mxu0 0
      %1500 = vmatpush2.bf16.msra.mxu0 0
      %1501 = vmatprep.subr.bf16.mxu0 0
      %1502 = vmatpush2.bf16.msra.mxu0 0
      %1503 = vmatprep.subr.bf16.mxu0 0
      %1504 = vmatpush2.bf16.msra.mxu0 0
      %1505 = vmatprep.subr.bf16.mxu0 0
      %1506 = vmatpush2.bf16.msra.mxu0 0
      %1507 = vmatprep.mubr.bf16.mxu0 0
      %1508 = vmatmul.mubr.bf16.gmra.mxu0 %v1410
      %v1509 = vpop.f32.mrf.mxu0
      %v1510 = vadd.f32 %v1406, %v1509
      %v1511 = vpop.f32.mrf.mxu0
      %v1512 = vadd.f32 %v1406, %v1511
      %v1513 = vpop.f32.mrf.mxu0
      %v1514 = vpop.f32.mrf.mxu0
      %1515 = vdwg.mxu0
      %1516 = vmatprep.subr.bf16.mxu0 0
      %1517 = vmatpush1.bf16.msra.mxu0 0
      %1518 = vmatprep.subr.bf16.mxu0 0
      %1519 = vmatpush1.bf16.msra.mxu0 0
      %1520 = vmatprep.subr.bf16.mxu0 0
      %1521 = vmatpush1.bf16.msra.mxu0 0
      %1522 = vmatprep.subr.bf16.mxu0 0
      %1523 = vmatpush1.bf16.msra.mxu0 0
      %1524 = vmatprep.subr.bf16.mxu0 0
      %1525 = vmatpush1.bf16.msra.mxu0 0
      %1526 = vmatprep.subr.bf16.mxu0 0
      %1527 = vmatpush1.bf16.msra.mxu0 0
      %1528 = vmatprep.subr.bf16.mxu0 0
      %1529 = vmatpush1.bf16.msra.mxu0 0
      %1530 = vmatprep.subr.bf16.mxu0 %v1429
      %1531 = vmatpush1.bf16.msra.mxu0 %v1426
      %1532 = vmatprep.subr.bf16.mxu0 0
      %1533 = vmatpush2.bf16.msra.mxu0 0
      %1534 = vmatprep.subr.bf16.mxu0 0
      %1535 = vmatpush2.bf16.msra.mxu0 0
      %1536 = vmatprep.subr.bf16.mxu0 0
      %1537 = vmatpush2.bf16.msra.mxu0 0
      %1538 = vmatprep.subr.bf16.mxu0 0
      %1539 = vmatpush2.bf16.msra.mxu0 0
      %1540 = vmatprep.subr.bf16.mxu0 0
      %1541 = vmatpush2.bf16.msra.mxu0 0
      %1542 = vmatprep.subr.bf16.mxu0 0
      %1543 = vmatpush2.bf16.msra.mxu0 0
      %1544 = vmatprep.subr.bf16.mxu0 0
      %1545 = vmatpush2.bf16.msra.mxu0 0
      %1546 = vmatprep.subr.bf16.mxu0 0
      %1547 = vmatpush2.bf16.msra.mxu0 0
      %1548 = vmatprep.mubr.bf16.mxu0 0
      %1549 = vmatmul.mubr.bf16.gmra.mxu0 %v1410
      %v1550 = vpop.f32.mrf.mxu0
      %v1551 = vadd.f32 %v1406, %v1550
      %v1552 = vpop.f32.mrf.mxu0
      %v1553 = vadd.f32 %v1406, %v1552
      %v1554 = vpop.f32.mrf.mxu0
      %v1555 = vpop.f32.mrf.mxu0
      %1556 = vdwg.mxu0
      %1557 = vmatprep.subr.bf16.mxu0 0
      %1558 = vmatpush1.bf16.msra.mxu0 0
      %1559 = vmatprep.subr.bf16.mxu0 0
      %1560 = vmatpush1.bf16.msra.mxu0 0
      %1561 = vmatprep.subr.bf16.mxu0 0
      %1562 = vmatpush1.bf16.msra.mxu0 0
      %1563 = vmatprep.subr.bf16.mxu0 0
      %1564 = vmatpush1.bf16.msra.mxu0 0
      %1565 = vmatprep.subr.bf16.mxu0 0
      %1566 = vmatpush1.bf16.msra.mxu0 0
      %1567 = vmatprep.subr.bf16.mxu0 0
      %1568 = vmatpush1.bf16.msra.mxu0 0
      %1569 = vmatprep.subr.bf16.mxu0 0
      %1570 = vmatpush1.bf16.msra.mxu0 0
      %1571 = vmatprep.subr.bf16.mxu0 0
      %1572 = vmatpush1.bf16.msra.mxu0 %v1432
      %1573 = vmatprep.subr.bf16.mxu0 0
      %1574 = vmatpush2.bf16.msra.mxu0 0
      %1575 = vmatprep.subr.bf16.mxu0 0
      %1576 = vmatpush2.bf16.msra.mxu0 0
      %1577 = vmatprep.subr.bf16.mxu0 0
      %1578 = vmatpush2.bf16.msra.mxu0 0
      %1579 = vmatprep.subr.bf16.mxu0 0
      %1580 = vmatpush2.bf16.msra.mxu0 0
      %1581 = vmatprep.subr.bf16.mxu0 0
      %1582 = vmatpush2.bf16.msra.mxu0 0
      %1583 = vmatprep.subr.bf16.mxu0 0
      %1584 = vmatpush2.bf16.msra.mxu0 0
      %1585 = vmatprep.subr.bf16.mxu0 0
      %1586 = vmatpush2.bf16.msra.mxu0 0
      %1587 = vmatprep.subr.bf16.mxu0 0
      %1588 = vmatpush2.bf16.msra.mxu0 0
      %1589 = vmatprep.mubr.bf16.mxu0 0
      %1590 = vmatmul.mubr.bf16.gmra.mxu0 %v1410
      %v1591 = vpop.f32.mrf.mxu0
      %v1592 = vadd.f32 %v1406, %v1591
      %v1593 = vpop.f32.mrf.mxu0
      %v1594 = vpop.f32.mrf.mxu0
      %v1595 = vpop.f32.mrf.mxu0
      %1596 = vdwg.mxu0
      %v1597 = vpack.c.bf16 %v1469, %v1469
      %v1598 = vpack.c.bf16 %v1471, %v1471
      %v1599 = vpack.c.bf16 %v1510, %v1510
      %v1600 = vpack.c.bf16 %v1512, %v1512
      %v1601 = vpack.c.bf16 %v1551, %v1551
      %v1602 = vpack.c.bf16 %v1553, %v1553
      %v1603 = vpack.c.bf16 %v1592, %v1592
      %v1611 = vunpack.c.l.b16 %v1597
      %v1612 = vunpack.c.l.b16 %v1598
      %v1613 = vunpack.c.l.b16 %v1599
      %v1614 = vunpack.c.l.b16 %v1600
      %v1615 = vunpack.c.l.b16 %v1601
      %v1616 = vunpack.c.l.b16 %v1602
      %v1617 = vunpack.c.l.b16 %v1603
      %v1618 = vpack.c.b16 %v1612, %v1611
      %v1619 = vpack.c.b16 %v1614, %v1613
      %v1620 = vpack.c.b16 %v1616, %v1615
      %v1621 = vpack.c.b16 %v1617, %v1617
      %1626 = vst [vmem:[%s224] sm:$0xff] %v1618
      %1627 = vst [vmem:[%s224 + $0x8] sm:$0xff] %v1619
      %1628 = vst [vmem:[%s224 + $0x10] sm:$0xff] %v1620
      %1629 = vst [vmem:[%s224 + $0x18] sm:$0xf] %v1621
      %p1630 = scmp.lt.s32.totalorder %s16, 1
      %s1631 = scalar_select %p1630, %s16, 1
      %s1632 = smul.addr %s1631, 7
      %s1633 = smul.addr %s1632, 4
      %s1634 = scalar_lea.vmem %s5, %s1633
      // Predicated region
      $region41: #{slimnet_forward.5} parent=39 // pred_check
        %p1635 = pneg %p144
      $region42: #{slimnet_forward.5} parent=39 // pred_check_branch
        %1637 = sbr.rel (%p1635) target = $region44
      $region43: #{slimnet_forward.5} parent=39 // pred_region
        _
      $region44: #{slimnet_forward.5} parent=39 // pred_fallthru
        _
    $region40: #{slimnet_forward.5} parent=5 // pred_fallthru
      _
    %p1638 = scmp.le.s32.totalorder 2, %s11
    // Predicated region
    $region45: #{slimnet_forward.5} parent=5 // pred_check
      %p1639 = pneg %p1638
    $region46: #{slimnet_forward.5} parent=5 // pred_check_branch
      %1641 = sbr.rel (%p1639) target = $region48
    $region47: #{slimnet_forward.5} parent=5 // pred_region
      %s1642 = ssub.s32 %s11, 2
      // Predicated region
      $region49: #{slimnet_forward.5} parent=47 // pred_check
        %p1643 = pneg %p150
      $region50: #{slimnet_forward.5} parent=47 // pred_check_branch
        %1645 = sbr.rel (%p1643) target = $region52
      $region51: #{slimnet_forward.5} parent=47 // pred_region
        %p1646 = scmp.lt.s32.totalorder %s17, 1
        %s1647 = scalar_select %p1646, %s17, 1
        %s1648 = smul.addr %s1647, 7
        %s1649 = smul.addr %s1648, 4
        %s1650 = scalar_lea.vmem %s5, %s1649
      $region52: #{slimnet_forward.5} parent=47 // pred_fallthru
        _
    $region48: #{slimnet_forward.5} parent=5 // pred_fallthru
      _
  $region6: #{slimnet_forward.5} parent=0 // loop_footer
    %s15 = sadd.s32 1, %s11
  $region7: #{slimnet_forward.5} parent=0 // loop_footer_branch
    %10 = sbr.rel target = $region3
  $region8: #{slimnet_forward.5} parent=0 // loop_exit
    _

</llo_original>
